<compile_context>
chip_gen: v7x
topology: tpu7x:2x2x1
jax: 0.10.0
libtpu: 0.0.40
codegen_flags: <defaults>
</compile_context>

<pallas_src>
import math

import jax
import jax.numpy as jnp
from jax.experimental import pallas as pl
from jax.experimental.pallas import tpu as pltpu

GN_EPS = 1e-6   # GroupNorm eps in reference Normalize()
LN_EPS = 1e-5   # torch.nn.LayerNorm default eps


# ----------------------------- in-kernel math helpers -----------------------------

def _erf(x):
    # Abramowitz & Stegun 7.1.26 polynomial (max abs err ~1.5e-7); keeps torch-like exact-GELU
    # semantics without relying on lax.erf lowering in Mosaic. The divide is replaced by an
    # approx reciprocal (EUP slot) -- its ~2^-12 rel. error is far below the polynomial's own.
    a1, a2, a3, a4, a5 = 0.254829592, -0.284496736, 1.421413741, -1.453152027, 1.061405429
    p = 0.3275911
    s = jnp.where(x >= 0.0, 1.0, -1.0)
    ax = jnp.abs(x)
    t = pl.reciprocal(1.0 + p * ax, approx=True)
    poly = ((((a5 * t + a4) * t + a3) * t + a2) * t + a1) * t
    return s * (1.0 - poly * jnp.exp(-ax * ax))


def _gelu(x):
    # exact-erf GELU (matches torch.nn.functional.gelu default); computed in f32.
    # TODO(synk): on v6e/v7x a bf16 polynomial or tanh-approx GELU would halve VALU pressure
    # on this (N, 4D) tensor; kept f32/exact for v5e compatibility and torch parity.
    return 0.5 * x * (1.0 + _erf(x * (1.0 / math.sqrt(2.0))))


def _group_norm(x, gamma, beta, gmap, gmap_t, eps):
    # x: (N, C) f32 tokens of ONE batch element; normalize over (N, channels-in-group).
    # Token-sum first, then tiny (1,C)@(C,G) / (1,G)@(G,C) matmuls with PRECOMPUTED maps.
    n, c = x.shape
    groups = gmap.shape[1]
    inv_cnt = 1.0 / float(n * (c // groups))

    sum_c = jnp.sum(x, axis=0, keepdims=True)                                    # (1, C)
    mean_g = jnp.dot(sum_c, gmap, preferred_element_type=jnp.float32) * inv_cnt  # (1, G)
    mean_c = jnp.dot(mean_g, gmap_t, preferred_element_type=jnp.float32)         # (1, C)
    d = x - mean_c
    sq_c = jnp.sum(d * d, axis=0, keepdims=True)                                 # (1, C)
    var_g = jnp.dot(sq_c, gmap, preferred_element_type=jnp.float32) * inv_cnt    # biased var
    var_c = jnp.dot(var_g, gmap_t, preferred_element_type=jnp.float32)
    return d * jax.lax.rsqrt(var_c + eps) * gamma + beta


def _layer_norm(x, gamma, beta, eps=LN_EPS):
    mean = jnp.mean(x, axis=-1, keepdims=True)
    d = x - mean
    var = jnp.mean(d * d, axis=-1, keepdims=True)
    return d * jax.lax.rsqrt(var + eps) * gamma + beta


def _attention(x_norm, wq_ref, wk_ref, wv_ref, wo_ref, bo):
    # Self-attention (reference CrossAttention with context=None).
    # Weights come pre-split per head: wq/wk/wv/wo refs have shape (heads, d_head, D) so that
    #   q_h = x @ wq_full[:, h*dh:(h+1)*dh]  ==  einsum('nd,kd->nk', x, wq_ref[h])
    # and the head loop is a fori_loop (live set bounded to one (N, N) sim/p at a time).
    n, d = x_norm.shape
    heads = wq_ref.shape[0]
    xb = x_norm.astype(jnp.bfloat16)

    def head_body(hh, acc):
        wq_h = wq_ref[hh]                                   # (dh, D) bf16, dynamic leading index
        wk_h = wk_ref[hh]
        wv_h = wv_ref[hh]
        # per-head projections: full K=D contraction; 1/sqrt(dh) already folded into wq.
        q = jnp.einsum('nd,kd->nk', xb, wq_h,
                       preferred_element_type=jnp.float32).astype(jnp.bfloat16)  # (N, dh)
        k = jnp.einsum('nd,kd->nk', xb, wk_h,
                       preferred_element_type=jnp.float32).astype(jnp.bfloat16)
        v = jnp.einsum('nd,kd->nk', xb, wv_h,
                       preferred_element_type=jnp.float32).astype(jnp.bfloat16)
        sim = jnp.einsum('qd,kd->qk', q, k, preferred_element_type=jnp.float32)  # (N, N) f32
        m = jnp.max(sim, axis=-1, keepdims=True)
        p = jnp.exp(sim - m)                                 # unnormalized probabilities
        l = jnp.sum(p, axis=-1, keepdims=True)               # f32 row sums
        oh = jnp.dot(p.astype(jnp.bfloat16), v, preferred_element_type=jnp.float32)  # (N, dh)
        # deferred softmax normalization: one EUP reciprocal on (N,1) instead of N*N divides.
        oh = (oh * pl.reciprocal(l, approx=True)).astype(jnp.bfloat16)
        # fold the output projection into the head loop: lane-dense (N, D) accumulation,
        # no masked per-head scratch stores.
        return acc + jnp.dot(oh, wo_ref[hh], preferred_element_type=jnp.float32)

    acc = jax.lax.fori_loop(0, heads, head_body, jnp.zeros((n, d), jnp.float32))
    return acc + bo


# ----------------------------- the Pallas kernel -----------------------------

def spatial_transformer_kernel(
        x_ref,
        gn_map, gn_map_t, gn_g, gn_b, pin_w, pin_b,
        ln1_g, ln1_b, a1_wq, a1_wk, a1_wv, a1_wo, a1_bo,
        ln2_g, ln2_b, a2_wq, a2_wk, a2_wv, a2_wo, a2_bo,
        ln3_g, ln3_b, ff_w1a, ff_b1a, ff_w1g, ff_b1g, ff_w2, ff_b2,
        pout_w, pout_b,
        o_ref):
    # TODO(synk): for SD-scale N (>= ~4k tokens) even a single (N, N) f32 sim no longer fits
    # VMEM (esp. v7x's 64 MiB/TC); that regime needs a query-tiled flash-attention grid axis,
    # which would also expose a second "parallel" grid dimension for v7x's two TensorCores.
    x_in = x_ref[0].astype(jnp.float32)                       # (N, C) f32 for the norm path

    # GroupNorm(32, C, eps=1e-6, affine); channel<->group maps are precomputed inputs.
    h = _group_norm(x_in, gn_g[...], gn_b[...], gn_map[...], gn_map_t[...], GN_EPS)

    # proj_in: 1x1 conv == per-token linear
    h = jnp.dot(h.astype(jnp.bfloat16), pin_w[...],
                preferred_element_type=jnp.float32) + pin_b[...]

    # --- BasicTransformerBlock (depth = 1) ---
    # attn1 (self-attention) + residual
    h = _attention(_layer_norm(h, ln1_g[...], ln1_b[...]),
                   a1_wq, a1_wk, a1_wv, a1_wo, a1_bo[...]) + h
    # TODO(synk): reference forward asserts `not self_attention` although the default config
    # builds attn1 (self_attention=True); we implement the intended attn1 + attn2 + ff path.
    # attn2 (context=None -> self-attention) + residual
    h = _attention(_layer_norm(h, ln2_g[...], ln2_b[...]),
                   a2_wq, a2_wk, a2_wv, a2_wo, a2_bo[...]) + h

    # FeedForward with GEGLU (projection pre-split into value-half / gate-half) + residual
    hn = _layer_norm(h, ln3_g[...], ln3_b[...])
    hb = hn.astype(jnp.bfloat16)
    a_part = jnp.dot(hb, ff_w1a[...], preferred_element_type=jnp.float32) + ff_b1a[...]
    gate = jnp.dot(hb, ff_w1g[...], preferred_element_type=jnp.float32) + ff_b1g[...]
    h = jnp.dot((a_part * _gelu(gate)).astype(jnp.bfloat16), ff_w2[...],
                preferred_element_type=jnp.float32) + ff_b2[...] + h

    # proj_out (zero-initialized 1x1 conv) + residual with the original input
    out = jnp.dot(h.astype(jnp.bfloat16), pout_w[...],
                  preferred_element_type=jnp.float32) + pout_b[...] + x_in
    o_ref[0] = out.astype(o_ref.dtype)


# ----------------------------- parameters & one-time prep -----------------------------

PARAM_ORDER = (
    "gn_map", "gn_map_t", "gn_g", "gn_b", "pin_w", "pin_b",
    "ln1_g", "ln1_b", "a1_wq", "a1_wk", "a1_wv", "a1_wo", "a1_bo",
    "ln2_g", "ln2_b", "a2_wq", "a2_wk", "a2_wv", "a2_wo", "a2_bo",
    "ln3_g", "ln3_b", "ff_w1a", "ff_b1a", "ff_w1g", "ff_b1g", "ff_w2", "ff_b2",
    "pout_w", "pout_b",
)


def init_params(key, in_channels, n_heads, d_head):
    """Raw f32 parameters in right-multiplication orientation (y = x @ W)."""
    d = n_heads * d_head
    ff_inner = 4 * d
    keys = jax.random.split(key, 18)

    def nrm(k, shape, fan_in):
        return jax.random.normal(k, shape, jnp.float32) * (1.0 / math.sqrt(fan_in))

    return {
        "gn_g": jnp.ones((1, in_channels), jnp.float32),
        "gn_b": jnp.zeros((1, in_channels), jnp.float32),
        "pin_w": nrm(keys[0], (in_channels, d), in_channels),
        "pin_b": 0.02 * jax.random.normal(keys[1], (1, d), jnp.float32),
        "ln1_g": jnp.ones((1, d), jnp.float32), "ln1_b": jnp.zeros((1, d), jnp.float32),
        "a1_wq": nrm(keys[2], (d, d), d), "a1_wk": nrm(keys[3], (d, d), d),
        "a1_wv": nrm(keys[4], (d, d), d), "a1_wo": nrm(keys[5], (d, d), d),
        "a1_bo": 0.02 * jax.random.normal(keys[6], (1, d), jnp.float32),
        "ln2_g": jnp.ones((1, d), jnp.float32), "ln2_b": jnp.zeros((1, d), jnp.float32),
        "a2_wq": nrm(keys[7], (d, d), d), "a2_wk": nrm(keys[8], (d, d), d),
        "a2_wv": nrm(keys[9], (d, d), d), "a2_wo": nrm(keys[10], (d, d), d),
        "a2_bo": 0.02 * jax.random.normal(keys[11], (1, d), jnp.float32),
        "ln3_g": jnp.ones((1, d), jnp.float32), "ln3_b": jnp.zeros((1, d), jnp.float32),
        # GEGLU projection split into value-half / gate-half (== ff_w1[:, :4D] / ff_w1[:, 4D:])
        "ff_w1a": nrm(keys[12], (d, ff_inner), d),
        "ff_b1a": 0.02 * jax.random.normal(keys[13], (1, ff_inner), jnp.float32),
        "ff_w1g": nrm(keys[14], (d, ff_inner), d),
        "ff_b1g": 0.02 * jax.random.normal(keys[15], (1, ff_inner), jnp.float32),
        "ff_w2": nrm(keys[16], (ff_inner, d), ff_inner),
        "ff_b2": 0.02 * jax.random.normal(keys[17], (1, d), jnp.float32),
        # zero_module(proj_out): weights and bias are zeroed
        "pout_w": jnp.zeros((d, in_channels), jnp.float32),
        "pout_b": jnp.zeros((1, in_channels), jnp.float32),
    }


def prepare_params(params, *, in_channels, n_heads, d_head, groups=32):
    """One-time (per weight update) prep: fold 1/sqrt(d_head) into wq, split attention
    weights into per-head (heads, d_head, D) slabs for the in-kernel fori_loop, cast all MXU
    weights to bf16 once, and precompute the GroupNorm channel<->group maps."""
    d = n_heads * d_head
    scale = d_head ** (-0.5)
    bf = lambda a: a.astype(jnp.bfloat16)

    def split_in(w):    # (D, D) right-mult -> (heads, dh, D): q_h = einsum('nd,kd->nk', x, out[h])
        return jnp.transpose(w.reshape(d, n_heads, d_head), (1, 2, 0))

    def split_out(w):   # (D, D) right-mult -> (heads, dh, D): out += o_h @ out[h]
        return w.reshape(n_heads, d_head, d)

    cs = in_channels // groups
    gmap = (jnp.arange(in_channels)[:, None] // cs
            == jnp.arange(groups)[None, :]).astype(jnp.float32)      # (C, G) channel -> group

    return {
        "gn_map": gmap, "gn_map_t": gmap.T,
        "gn_g": params["gn_g"], "gn_b": params["gn_b"],
        "pin_w": bf(params["pin_w"]), "pin_b": params["pin_b"],
        "ln1_g": params["ln1_g"], "ln1_b": params["ln1_b"],
        "a1_wq": bf(split_in(params["a1_wq"] * scale)),
        "a1_wk": bf(split_in(params["a1_wk"])),
        "a1_wv": bf(split_in(params["a1_wv"])),
        "a1_wo": bf(split_out(params["a1_wo"])),
        "a1_bo": params["a1_bo"],
        "ln2_g": params["ln2_g"], "ln2_b": params["ln2_b"],
        "a2_wq": bf(split_in(params["a2_wq"] * scale)),
        "a2_wk": bf(split_in(params["a2_wk"])),
        "a2_wv": bf(split_in(params["a2_wv"])),
        "a2_wo": bf(split_out(params["a2_wo"])),
        "a2_bo": params["a2_bo"],
        "ln3_g": params["ln3_g"], "ln3_b": params["ln3_b"],
        "ff_w1a": bf(params["ff_w1a"]), "ff_b1a": params["ff_b1a"],
        "ff_w1g": bf(params["ff_w1g"]), "ff_b1g": params["ff_b1g"],
        "ff_w2": bf(params["ff_w2"]), "ff_b2": params["ff_b2"],
        "pout_w": bf(params["pout_w"]), "pout_b": params["pout_b"],
    }


# ----------------------------- wrapper -----------------------------

def spatial_transformer_forward(x_nchw, prepared):
    b, c, hh, ww = x_nchw.shape
    n = hh * ww
    d = prepared["pin_w"].shape[1]

    # NCHW -> [B, N, C] tokens ('b c h w -> b (h w) c').
    # TODO(synk): on v5e these two wrapper transposes are an extra HBM round-trip of the
    # activations; callers that keep activations channels-last should skip them.
    x_tok = jnp.transpose(x_nchw, (0, 2, 3, 1)).reshape(b, n, c)

    weights = [prepared[k] for k in PARAM_ORDER]

    # Constant weights: whole-array VMEM residency (single copy for the kernel's lifetime,
    # no per-grid-step double-buffering of constant-index blocks).
    weight_spec = pl.BlockSpec(memory_space=pltpu.MemorySpace.VMEM)
    in_specs = [pl.BlockSpec((1, n, c), lambda i: (i, 0, 0))] + [weight_spec] * len(weights)

    # Explicit scoped-VMEM budget: estimated resident footprint (+2x headroom), capped at 85%
    # of the queried per-core physical capacity (never the full 64 MiB on v7x).
    wbytes = sum(int(a.size) * a.dtype.itemsize for a in weights)
    act_bytes = 4 * (2 * n * c + 5 * n * d + 2 * n * n + 3 * n * 4 * d)
    est = 4 * (n * c * 4) + wbytes + act_bytes    # double-buffered x/out blocks + weights + acts
    try:
        cap = int(pltpu.get_tpu_info().vmem_capacity_bytes)
    except Exception:
        cap = 64 * 2 ** 20                        # conservative fallback: v7x per-TC VMEM
    vmem_limit = int(min(int(0.85 * cap), max(32 * 2 ** 20, 2 * est)))

    out_tok = pl.pallas_call(
        spatial_transformer_kernel,
        out_shape=jax.ShapeDtypeStruct((b, n, c), x_nchw.dtype),
        grid=(b,),                                # B >= 2 exposes both v7x TensorCores
        in_specs=in_specs,
        out_specs=pl.BlockSpec((1, n, c), lambda i: (i, 0, 0)),
        compiler_params=pltpu.CompilerParams(
            dimension_semantics=("parallel",),
            vmem_limit_bytes=vmem_limit),
    )(x_tok, *weights)

    # [B, N, C] -> NCHW ('b (h w) c -> b c h w')
    return jnp.transpose(out_tok.reshape(b, hh, ww, c), (0, 3, 1, 2))


if __name__ == "__main__":
    # Small shapes consistent with the module: GroupNorm(num_groups=32) requires C % 32 == 0.
    in_channels, n_heads, d_head = 32, 2, 16     # inner_dim = 32
    B, H, W = 2, 8, 8                            # seq = 64 tokens

    key = jax.random.PRNGKey(0)
    kx, kp = jax.random.split(key)
    x = jax.random.normal(kx, (B, in_channels, H, W), jnp.float32)
    params = init_params(kp, in_channels, n_heads, d_head)
    prepared = prepare_params(params, in_channels=in_channels, n_heads=n_heads, d_head=d_head)

    fwd = jax.jit(spatial_transformer_forward)
    out = jax.block_until_ready(fwd(x, prepared))

    assert out.shape == x.shape and out.dtype == x.dtype
    # zero_module(proj_out) => output must equal the input exactly (also catches NaN/Inf
    # propagation through the fused pipeline, since NaN * 0 would not cancel).
    assert jnp.allclose(out, x, atol=1e-4)
    print("KERNEL_OK")
</pallas_src>

<mosaic_0001>
module attributes {stable_mosaic.version = 11 : i64} {
  func.func @spatial_transformer_kernel(%arg0: i32, %arg1: memref<1x64x32xf32, #tpu.memory_space<vmem>>, %arg2: memref<32x32xf32, #tpu.memory_space<vmem>>, %arg3: memref<32x32xf32, #tpu.memory_space<vmem>>, %arg4: memref<1x32xf32, #tpu.memory_space<vmem>>, %arg5: memref<1x32xf32, #tpu.memory_space<vmem>>, %arg6: memref<32x32xbf16, #tpu.memory_space<vmem>>, %arg7: memref<1x32xf32, #tpu.memory_space<vmem>>, %arg8: memref<1x32xf32, #tpu.memory_space<vmem>>, %arg9: memref<1x32xf32, #tpu.memory_space<vmem>>, %arg10: memref<2x16x32xbf16, #tpu.memory_space<vmem>>, %arg11: memref<2x16x32xbf16, #tpu.memory_space<vmem>>, %arg12: memref<2x16x32xbf16, #tpu.memory_space<vmem>>, %arg13: memref<2x16x32xbf16, #tpu.memory_space<vmem>>, %arg14: memref<1x32xf32, #tpu.memory_space<vmem>>, %arg15: memref<1x32xf32, #tpu.memory_space<vmem>>, %arg16: memref<1x32xf32, #tpu.memory_space<vmem>>, %arg17: memref<2x16x32xbf16, #tpu.memory_space<vmem>>, %arg18: memref<2x16x32xbf16, #tpu.memory_space<vmem>>, %arg19: memref<2x16x32xbf16, #tpu.memory_space<vmem>>, %arg20: memref<2x16x32xbf16, #tpu.memory_space<vmem>>, %arg21: memref<1x32xf32, #tpu.memory_space<vmem>>, %arg22: memref<1x32xf32, #tpu.memory_space<vmem>>, %arg23: memref<1x32xf32, #tpu.memory_space<vmem>>, %arg24: memref<32x128xbf16, #tpu.memory_space<vmem>>, %arg25: memref<1x128xf32, #tpu.memory_space<vmem>>, %arg26: memref<32x128xbf16, #tpu.memory_space<vmem>>, %arg27: memref<1x128xf32, #tpu.memory_space<vmem>>, %arg28: memref<128x32xbf16, #tpu.memory_space<vmem>>, %arg29: memref<1x32xf32, #tpu.memory_space<vmem>>, %arg30: memref<32x32xbf16, #tpu.memory_space<vmem>>, %arg31: memref<1x32xf32, #tpu.memory_space<vmem>>, %arg32: memref<1x64x32xf32, #tpu.memory_space<vmem>>) attributes {dimension_semantics = [#tpu.dimension_semantics<parallel>], iteration_bounds = array<i64: 2>, scalar_prefetch = 0 : i64, scratch_operands = 0 : i64, tpu.core_type = #tpu.core_type<tc>, window_params = [{transform_indices = @transform_0, window_bounds = array<i64: 1, 64, 32>}, {pipeline_mode = #tpu.pipeline_mode<synchronous>, transform_indices = @transform_1, window_bounds = array<i64: 32, 32>}, {pipeline_mode = #tpu.pipeline_mode<synchronous>, transform_indices = @transform_2, window_bounds = array<i64: 32, 32>}, {pipeline_mode = #tpu.pipeline_mode<synchronous>, transform_indices = @transform_3, window_bounds = array<i64: 1, 32>}, {pipeline_mode = #tpu.pipeline_mode<synchronous>, transform_indices = @transform_4, window_bounds = array<i64: 1, 32>}, {pipeline_mode = #tpu.pipeline_mode<synchronous>, transform_indices = @transform_5, window_bounds = array<i64: 32, 32>}, {pipeline_mode = #tpu.pipeline_mode<synchronous>, transform_indices = @transform_6, window_bounds = array<i64: 1, 32>}, {pipeline_mode = #tpu.pipeline_mode<synchronous>, transform_indices = @transform_7, window_bounds = array<i64: 1, 32>}, {pipeline_mode = #tpu.pipeline_mode<synchronous>, transform_indices = @transform_8, window_bounds = array<i64: 1, 32>}, {pipeline_mode = #tpu.pipeline_mode<synchronous>, transform_indices = @transform_9, window_bounds = array<i64: 2, 16, 32>}, {pipeline_mode = #tpu.pipeline_mode<synchronous>, transform_indices = @transform_10, window_bounds = array<i64: 2, 16, 32>}, {pipeline_mode = #tpu.pipeline_mode<synchronous>, transform_indices = @transform_11, window_bounds = array<i64: 2, 16, 32>}, {pipeline_mode = #tpu.pipeline_mode<synchronous>, transform_indices = @transform_12, window_bounds = array<i64: 2, 16, 32>}, {pipeline_mode = #tpu.pipeline_mode<synchronous>, transform_indices = @transform_13, window_bounds = array<i64: 1, 32>}, {pipeline_mode = #tpu.pipeline_mode<synchronous>, transform_indices = @transform_14, window_bounds = array<i64: 1, 32>}, {pipeline_mode = #tpu.pipeline_mode<synchronous>, transform_indices = @transform_15, window_bounds = array<i64: 1, 32>}, {pipeline_mode = #tpu.pipeline_mode<synchronous>, transform_indices = @transform_16, window_bounds = array<i64: 2, 16, 32>}, {pipeline_mode = #tpu.pipeline_mode<synchronous>, transform_indices = @transform_17, window_bounds = array<i64: 2, 16, 32>}, {pipeline_mode = #tpu.pipeline_mode<synchronous>, transform_indices = @transform_18, window_bounds = array<i64: 2, 16, 32>}, {pipeline_mode = #tpu.pipeline_mode<synchronous>, transform_indices = @transform_19, window_bounds = array<i64: 2, 16, 32>}, {pipeline_mode = #tpu.pipeline_mode<synchronous>, transform_indices = @transform_20, window_bounds = array<i64: 1, 32>}, {pipeline_mode = #tpu.pipeline_mode<synchronous>, transform_indices = @transform_21, window_bounds = array<i64: 1, 32>}, {pipeline_mode = #tpu.pipeline_mode<synchronous>, transform_indices = @transform_22, window_bounds = array<i64: 1, 32>}, {pipeline_mode = #tpu.pipeline_mode<synchronous>, transform_indices = @transform_23, window_bounds = array<i64: 32, 128>}, {pipeline_mode = #tpu.pipeline_mode<synchronous>, transform_indices = @transform_24, window_bounds = array<i64: 1, 128>}, {pipeline_mode = #tpu.pipeline_mode<synchronous>, transform_indices = @transform_25, window_bounds = array<i64: 32, 128>}, {pipeline_mode = #tpu.pipeline_mode<synchronous>, transform_indices = @transform_26, window_bounds = array<i64: 1, 128>}, {pipeline_mode = #tpu.pipeline_mode<synchronous>, transform_indices = @transform_27, window_bounds = array<i64: 128, 32>}, {pipeline_mode = #tpu.pipeline_mode<synchronous>, transform_indices = @transform_28, window_bounds = array<i64: 1, 32>}, {pipeline_mode = #tpu.pipeline_mode<synchronous>, transform_indices = @transform_29, window_bounds = array<i64: 32, 32>}, {pipeline_mode = #tpu.pipeline_mode<synchronous>, transform_indices = @transform_30, window_bounds = array<i64: 1, 32>}, {transform_indices = @transform_31, window_bounds = array<i64: 1, 64, 32>}]} {
    %c0 = arith.constant 0 : index
    %c0_0 = arith.constant 0 : index
    %c0_1 = arith.constant 0 : index
    %0 = vector.load %arg1[%c0, %c0_0, %c0_1] : memref<1x64x32xf32, #tpu.memory_space<vmem>>, vector<1x64x32xf32>
    %1 = vector.shape_cast %0 : vector<1x64x32xf32> to vector<64x32xf32>
    %c0_2 = arith.constant 0 : index
    %c0_3 = arith.constant 0 : index
    %2 = vector.load %arg4[%c0_2, %c0_3] : memref<1x32xf32, #tpu.memory_space<vmem>>, vector<1x32xf32>
    %c0_4 = arith.constant 0 : index
    %c0_5 = arith.constant 0 : index
    %3 = vector.load %arg5[%c0_4, %c0_5] : memref<1x32xf32, #tpu.memory_space<vmem>>, vector<1x32xf32>
    %c0_6 = arith.constant 0 : index
    %c0_7 = arith.constant 0 : index
    %4 = vector.load %arg2[%c0_6, %c0_7] : memref<32x32xf32, #tpu.memory_space<vmem>>, vector<32x32xf32>
    %c0_8 = arith.constant 0 : index
    %c0_9 = arith.constant 0 : index
    %5 = vector.load %arg3[%c0_8, %c0_9] : memref<32x32xf32, #tpu.memory_space<vmem>>, vector<32x32xf32>
    %cst = arith.constant dense<0.000000e+00> : vector<32xf32>
    %6 = vector.multi_reduction <add>, %1, %cst [0] : vector<64x32xf32> to vector<32xf32>
    %7 = vector.shape_cast %6 : vector<32xf32> to vector<1x32xf32>
    %cst_10 = arith.constant dense<0.000000e+00> : vector<1x32xf32>
    %8 = tpu.matmul %7, %4, %cst_10 {dimension_numbers = #tpu.dot_dimension_numbers<[1], [0], [0], [1], [0, 0, 1, 1], [], []>} : vector<1x32xf32>, vector<32x32xf32>, vector<1x32xf32> -> vector<1x32xf32>
    %cst_11 = arith.constant 1.562500e-02 : f32
    %9 = vector.broadcast %cst_11 : f32 to vector<1x32xf32>
    %10 = arith.mulf %8, %9 : vector<1x32xf32>
    %cst_12 = arith.constant dense<0.000000e+00> : vector<1x32xf32>
    %11 = tpu.matmul %10, %5, %cst_12 {dimension_numbers = #tpu.dot_dimension_numbers<[1], [0], [0], [1], [0, 0, 1, 1], [], []>} : vector<1x32xf32>, vector<32x32xf32>, vector<1x32xf32> -> vector<1x32xf32>
    %12 = vector.broadcast %11 : vector<1x32xf32> to vector<64x32xf32>
    %13 = arith.subf %1, %12 : vector<64x32xf32>
    %14 = arith.mulf %13, %13 : vector<64x32xf32>
    %cst_13 = arith.constant dense<0.000000e+00> : vector<32xf32>
    %15 = vector.multi_reduction <add>, %14, %cst_13 [0] : vector<64x32xf32> to vector<32xf32>
    %16 = vector.shape_cast %15 : vector<32xf32> to vector<1x32xf32>
    %cst_14 = arith.constant dense<0.000000e+00> : vector<1x32xf32>
    %17 = tpu.matmul %16, %4, %cst_14 {dimension_numbers = #tpu.dot_dimension_numbers<[1], [0], [0], [1], [0, 0, 1, 1], [], []>} : vector<1x32xf32>, vector<32x32xf32>, vector<1x32xf32> -> vector<1x32xf32>
    %cst_15 = arith.constant 1.562500e-02 : f32
    %18 = vector.broadcast %cst_15 : f32 to vector<1x32xf32>
    %19 = arith.mulf %17, %18 : vector<1x32xf32>
    %cst_16 = arith.constant dense<0.000000e+00> : vector<1x32xf32>
    %20 = tpu.matmul %19, %5, %cst_16 {dimension_numbers = #tpu.dot_dimension_numbers<[1], [0], [0], [1], [0, 0, 1, 1], [], []>} : vector<1x32xf32>, vector<32x32xf32>, vector<1x32xf32> -> vector<1x32xf32>
    %cst_17 = arith.constant 9.99999997E-7 : f32
    %21 = vector.broadcast %cst_17 : f32 to vector<1x32xf32>
    %22 = arith.addf %20, %21 : vector<1x32xf32>
    %23 = math.rsqrt %22 : vector<1x32xf32>
    %24 = vector.broadcast %23 : vector<1x32xf32> to vector<64x32xf32>
    %25 = arith.mulf %13, %24 : vector<64x32xf32>
    %26 = vector.broadcast %2 : vector<1x32xf32> to vector<64x32xf32>
    %27 = arith.mulf %25, %26 : vector<64x32xf32>
    %28 = vector.broadcast %3 : vector<1x32xf32> to vector<64x32xf32>
    %29 = arith.addf %27, %28 : vector<64x32xf32>
    %30 = arith.truncf %29 : vector<64x32xf32> to vector<64x32xbf16>
    %c0_18 = arith.constant 0 : index
    %c0_19 = arith.constant 0 : index
    %31 = vector.load %arg6[%c0_18, %c0_19] : memref<32x32xbf16, #tpu.memory_space<vmem>>, vector<32x32xbf16>
    %cst_20 = arith.constant dense<0.000000e+00> : vector<64x32xf32>
    %32 = tpu.matmul %30, %31, %cst_20 {dimension_numbers = #tpu.dot_dimension_numbers<[1], [0], [0], [1], [0, 0, 1, 1], [], []>} : vector<64x32xbf16>, vector<32x32xbf16>, vector<64x32xf32> -> vector<64x32xf32>
    %c0_21 = arith.constant 0 : index
    %c0_22 = arith.constant 0 : index
    %33 = vector.load %arg7[%c0_21, %c0_22] : memref<1x32xf32, #tpu.memory_space<vmem>>, vector<1x32xf32>
    %34 = vector.broadcast %33 : vector<1x32xf32> to vector<64x32xf32>
    %35 = arith.addf %32, %34 : vector<64x32xf32>
    %c0_23 = arith.constant 0 : index
    %c0_24 = arith.constant 0 : index
    %36 = vector.load %arg8[%c0_23, %c0_24] : memref<1x32xf32, #tpu.memory_space<vmem>>, vector<1x32xf32>
    %c0_25 = arith.constant 0 : index
    %c0_26 = arith.constant 0 : index
    %37 = vector.load %arg9[%c0_25, %c0_26] : memref<1x32xf32, #tpu.memory_space<vmem>>, vector<1x32xf32>
    %cst_27 = arith.constant dense<0.000000e+00> : vector<64xf32>
    %38 = vector.multi_reduction <add>, %35, %cst_27 [1] : vector<64x32xf32> to vector<64xf32>
    %39 = vector.shape_cast %38 : vector<64xf32> to vector<64x1xf32>
    %cst_28 = arith.constant 3.200000e+01 : f32
    %40 = vector.broadcast %cst_28 : f32 to vector<64x1xf32>
    %41 = arith.divf %39, %40 : vector<64x1xf32>
    %42 = vector.broadcast %41 : vector<64x1xf32> to vector<64x32xf32>
    %43 = arith.subf %35, %42 : vector<64x32xf32>
    %44 = arith.mulf %43, %43 : vector<64x32xf32>
    %cst_29 = arith.constant dense<0.000000e+00> : vector<64xf32>
    %45 = vector.multi_reduction <add>, %44, %cst_29 [1] : vector<64x32xf32> to vector<64xf32>
    %46 = vector.shape_cast %45 : vector<64xf32> to vector<64x1xf32>
    %cst_30 = arith.constant 3.200000e+01 : f32
    %47 = vector.broadcast %cst_30 : f32 to vector<64x1xf32>
    %48 = arith.divf %46, %47 : vector<64x1xf32>
    %cst_31 = arith.constant 9.99999974E-6 : f32
    %49 = vector.broadcast %cst_31 : f32 to vector<64x1xf32>
    %50 = arith.addf %48, %49 : vector<64x1xf32>
    %51 = math.rsqrt %50 : vector<64x1xf32>
    %52 = vector.broadcast %51 : vector<64x1xf32> to vector<64x32xf32>
    %53 = arith.mulf %43, %52 : vector<64x32xf32>
    %54 = vector.broadcast %36 : vector<1x32xf32> to vector<64x32xf32>
    %55 = arith.mulf %53, %54 : vector<64x32xf32>
    %56 = vector.broadcast %37 : vector<1x32xf32> to vector<64x32xf32>
    %57 = arith.addf %55, %56 : vector<64x32xf32>
    %c0_32 = arith.constant 0 : index
    %c0_33 = arith.constant 0 : index
    %58 = vector.load %arg14[%c0_32, %c0_33] : memref<1x32xf32, #tpu.memory_space<vmem>>, vector<1x32xf32>
    %59 = arith.truncf %57 : vector<64x32xf32> to vector<64x32xbf16>
    %cst_34 = arith.constant 0.000000e+00 : f32
    %60 = vector.broadcast %cst_34 : f32 to vector<64x32xf32>
    %c0_i32 = arith.constant 0 : i32
    %c2_i32 = arith.constant 2 : i32
    %61 = arith.addi %c0_i32, %c2_i32 : i32
    %c1_i32 = arith.constant 1 : i32
    %62 = scf.for %arg33 = %c0_i32 to %61 step %c1_i32 iter_args(%arg34 = %60) -> (vector<64x32xf32>)  : i32 {
      %187 = arith.index_cast %arg33 : i32 to index
      %c0_99 = arith.constant 0 : index
      %c0_100 = arith.constant 0 : index
      %188 = vector.load %arg10[%187, %c0_99, %c0_100] : memref<2x16x32xbf16, #tpu.memory_space<vmem>>, vector<1x16x32xbf16>
      %189 = vector.shape_cast %188 : vector<1x16x32xbf16> to vector<16x32xbf16>
      %190 = arith.index_cast %arg33 : i32 to index
      %c0_101 = arith.constant 0 : index
      %c0_102 = arith.constant 0 : index
      %191 = vector.load %arg11[%190, %c0_101, %c0_102] : memref<2x16x32xbf16, #tpu.memory_space<vmem>>, vector<1x16x32xbf16>
      %192 = vector.shape_cast %191 : vector<1x16x32xbf16> to vector<16x32xbf16>
      %193 = arith.index_cast %arg33 : i32 to index
      %c0_103 = arith.constant 0 : index
      %c0_104 = arith.constant 0 : index
      %194 = vector.load %arg12[%193, %c0_103, %c0_104] : memref<2x16x32xbf16, #tpu.memory_space<vmem>>, vector<1x16x32xbf16>
      %195 = vector.shape_cast %194 : vector<1x16x32xbf16> to vector<16x32xbf16>
      "tpu.trace_start"() <{level = 10 : i32, message = "nd,kd->nk"}> : () -> ()
      %cst_105 = arith.constant dense<0.000000e+00> : vector<64x16xf32>
      %196 = tpu.matmul %59, %189, %cst_105 {dimension_numbers = #tpu.dot_dimension_numbers<[1], [1], [0], [0], [0, 0, 1, 0], [], []>} : vector<64x32xbf16>, vector<16x32xbf16>, vector<64x16xf32> -> vector<64x16xf32>
      "tpu.trace_stop"() : () -> ()
      %197 = arith.truncf %196 : vector<64x16xf32> to vector<64x16xbf16>
      "tpu.trace_start"() <{level = 10 : i32, message = "nd,kd->nk"}> : () -> ()
      %cst_106 = arith.constant dense<0.000000e+00> : vector<64x16xf32>
      %198 = tpu.matmul %59, %192, %cst_106 {dimension_numbers = #tpu.dot_dimension_numbers<[1], [1], [0], [0], [0, 0, 1, 0], [], []>} : vector<64x32xbf16>, vector<16x32xbf16>, vector<64x16xf32> -> vector<64x16xf32>
      "tpu.trace_stop"() : () -> ()
      %199 = arith.truncf %198 : vector<64x16xf32> to vector<64x16xbf16>
      "tpu.trace_start"() <{level = 10 : i32, message = "nd,kd->nk"}> : () -> ()
      %cst_107 = arith.constant dense<0.000000e+00> : vector<64x16xf32>
      %200 = tpu.matmul %59, %195, %cst_107 {dimension_numbers = #tpu.dot_dimension_numbers<[1], [1], [0], [0], [0, 0, 1, 0], [], []>} : vector<64x32xbf16>, vector<16x32xbf16>, vector<64x16xf32> -> vector<64x16xf32>
      "tpu.trace_stop"() : () -> ()
      %201 = arith.truncf %200 : vector<64x16xf32> to vector<64x16xbf16>
      "tpu.trace_start"() <{level = 10 : i32, message = "qd,kd->qk"}> : () -> ()
      %cst_108 = arith.constant dense<0.000000e+00> : vector<64x64xf32>
      %202 = tpu.matmul %197, %199, %cst_108 {dimension_numbers = #tpu.dot_dimension_numbers<[1], [1], [0], [0], [0, 0, 1, 0], [], []>} : vector<64x16xbf16>, vector<64x16xbf16>, vector<64x64xf32> -> vector<64x64xf32>
      "tpu.trace_stop"() : () -> ()
      %cst_109 = arith.constant dense<0xFF800000> : vector<64xf32>
      %203 = vector.multi_reduction <maximumf>, %202, %cst_109 [1] : vector<64x64xf32> to vector<64xf32>
      %204 = vector.shape_cast %203 : vector<64xf32> to vector<64x1xf32>
      %205 = vector.broadcast %204 : vector<64x1xf32> to vector<64x64xf32>
      %206 = arith.subf %202, %205 : vector<64x64xf32>
      %207 = math.exp %206 : vector<64x64xf32>
      %cst_110 = arith.constant dense<0.000000e+00> : vector<64xf32>
      %208 = vector.multi_reduction <add>, %207, %cst_110 [1] : vector<64x64xf32> to vector<64xf32>
      %209 = vector.shape_cast %208 : vector<64xf32> to vector<64x1xf32>
      %210 = arith.truncf %207 : vector<64x64xf32> to vector<64x64xbf16>
      %cst_111 = arith.constant dense<0.000000e+00> : vector<64x16xf32>
      %211 = tpu.matmul %210, %201, %cst_111 {dimension_numbers = #tpu.dot_dimension_numbers<[1], [0], [0], [1], [0, 0, 1, 1], [], []>} : vector<64x64xbf16>, vector<64x16xbf16>, vector<64x16xf32> -> vector<64x16xf32>
      %212 = tpu.reciprocal %209 {approx = true} : vector<64x1xf32> -> vector<64x1xf32>
      %213 = vector.broadcast %212 : vector<64x1xf32> to vector<64x16xf32>
      %214 = arith.mulf %211, %213 : vector<64x16xf32>
      %215 = arith.truncf %214 : vector<64x16xf32> to vector<64x16xbf16>
      %216 = arith.index_cast %arg33 : i32 to index
      %c0_112 = arith.constant 0 : index
      %c0_113 = arith.constant 0 : index
      %217 = vector.load %arg13[%216, %c0_112, %c0_113] : memref<2x16x32xbf16, #tpu.memory_space<vmem>>, vector<1x16x32xbf16>
      %218 = vector.shape_cast %217 : vector<1x16x32xbf16> to vector<16x32xbf16>
      %cst_114 = arith.constant dense<0.000000e+00> : vector<64x32xf32>
      %219 = tpu.matmul %215, %218, %cst_114 {dimension_numbers = #tpu.dot_dimension_numbers<[1], [0], [0], [1], [0, 0, 1, 1], [], []>} : vector<64x16xbf16>, vector<16x32xbf16>, vector<64x32xf32> -> vector<64x32xf32>
      %220 = arith.addf %arg34, %219 : vector<64x32xf32>
      scf.yield %220 : vector<64x32xf32>
    }
    %c2_i32_35 = arith.constant 2 : i32
    %63 = vector.broadcast %58 : vector<1x32xf32> to vector<64x32xf32>
    %64 = arith.addf %62, %63 : vector<64x32xf32>
    %65 = arith.addf %64, %35 : vector<64x32xf32>
    %c0_36 = arith.constant 0 : index
    %c0_37 = arith.constant 0 : index
    %66 = vector.load %arg15[%c0_36, %c0_37] : memref<1x32xf32, #tpu.memory_space<vmem>>, vector<1x32xf32>
    %c0_38 = arith.constant 0 : index
    %c0_39 = arith.constant 0 : index
    %67 = vector.load %arg16[%c0_38, %c0_39] : memref<1x32xf32, #tpu.memory_space<vmem>>, vector<1x32xf32>
    %cst_40 = arith.constant dense<0.000000e+00> : vector<64xf32>
    %68 = vector.multi_reduction <add>, %65, %cst_40 [1] : vector<64x32xf32> to vector<64xf32>
    %69 = vector.shape_cast %68 : vector<64xf32> to vector<64x1xf32>
    %cst_41 = arith.constant 3.200000e+01 : f32
    %70 = vector.broadcast %cst_41 : f32 to vector<64x1xf32>
    %71 = arith.divf %69, %70 : vector<64x1xf32>
    %72 = vector.broadcast %71 : vector<64x1xf32> to vector<64x32xf32>
    %73 = arith.subf %65, %72 : vector<64x32xf32>
    %74 = arith.mulf %73, %73 : vector<64x32xf32>
    %cst_42 = arith.constant dense<0.000000e+00> : vector<64xf32>
    %75 = vector.multi_reduction <add>, %74, %cst_42 [1] : vector<64x32xf32> to vector<64xf32>
    %76 = vector.shape_cast %75 : vector<64xf32> to vector<64x1xf32>
    %cst_43 = arith.constant 3.200000e+01 : f32
    %77 = vector.broadcast %cst_43 : f32 to vector<64x1xf32>
    %78 = arith.divf %76, %77 : vector<64x1xf32>
    %cst_44 = arith.constant 9.99999974E-6 : f32
    %79 = vector.broadcast %cst_44 : f32 to vector<64x1xf32>
    %80 = arith.addf %78, %79 : vector<64x1xf32>
    %81 = math.rsqrt %80 : vector<64x1xf32>
    %82 = vector.broadcast %81 : vector<64x1xf32> to vector<64x32xf32>
    %83 = arith.mulf %73, %82 : vector<64x32xf32>
    %84 = vector.broadcast %66 : vector<1x32xf32> to vector<64x32xf32>
    %85 = arith.mulf %83, %84 : vector<64x32xf32>
    %86 = vector.broadcast %67 : vector<1x32xf32> to vector<64x32xf32>
    %87 = arith.addf %85, %86 : vector<64x32xf32>
    %c0_45 = arith.constant 0 : index
    %c0_46 = arith.constant 0 : index
    %88 = vector.load %arg21[%c0_45, %c0_46] : memref<1x32xf32, #tpu.memory_space<vmem>>, vector<1x32xf32>
    %89 = arith.truncf %87 : vector<64x32xf32> to vector<64x32xbf16>
    %cst_47 = arith.constant 0.000000e+00 : f32
    %90 = vector.broadcast %cst_47 : f32 to vector<64x32xf32>
    %c0_i32_48 = arith.constant 0 : i32
    %c2_i32_49 = arith.constant 2 : i32
    %91 = arith.addi %c0_i32_48, %c2_i32_49 : i32
    %c1_i32_50 = arith.constant 1 : i32
    %92 = scf.for %arg33 = %c0_i32_48 to %91 step %c1_i32_50 iter_args(%arg34 = %90) -> (vector<64x32xf32>)  : i32 {
      %187 = arith.index_cast %arg33 : i32 to index
      %c0_99 = arith.constant 0 : index
      %c0_100 = arith.constant 0 : index
      %188 = vector.load %arg17[%187, %c0_99, %c0_100] : memref<2x16x32xbf16, #tpu.memory_space<vmem>>, vector<1x16x32xbf16>
      %189 = vector.shape_cast %188 : vector<1x16x32xbf16> to vector<16x32xbf16>
      %190 = arith.index_cast %arg33 : i32 to index
      %c0_101 = arith.constant 0 : index
      %c0_102 = arith.constant 0 : index
      %191 = vector.load %arg18[%190, %c0_101, %c0_102] : memref<2x16x32xbf16, #tpu.memory_space<vmem>>, vector<1x16x32xbf16>
      %192 = vector.shape_cast %191 : vector<1x16x32xbf16> to vector<16x32xbf16>
      %193 = arith.index_cast %arg33 : i32 to index
      %c0_103 = arith.constant 0 : index
      %c0_104 = arith.constant 0 : index
      %194 = vector.load %arg19[%193, %c0_103, %c0_104] : memref<2x16x32xbf16, #tpu.memory_space<vmem>>, vector<1x16x32xbf16>
      %195 = vector.shape_cast %194 : vector<1x16x32xbf16> to vector<16x32xbf16>
      "tpu.trace_start"() <{level = 10 : i32, message = "nd,kd->nk"}> : () -> ()
      %cst_105 = arith.constant dense<0.000000e+00> : vector<64x16xf32>
      %196 = tpu.matmul %89, %189, %cst_105 {dimension_numbers = #tpu.dot_dimension_numbers<[1], [1], [0], [0], [0, 0, 1, 0], [], []>} : vector<64x32xbf16>, vector<16x32xbf16>, vector<64x16xf32> -> vector<64x16xf32>
      "tpu.trace_stop"() : () -> ()
      %197 = arith.truncf %196 : vector<64x16xf32> to vector<64x16xbf16>
      "tpu.trace_start"() <{level = 10 : i32, message = "nd,kd->nk"}> : () -> ()
      %cst_106 = arith.constant dense<0.000000e+00> : vector<64x16xf32>
      %198 = tpu.matmul %89, %192, %cst_106 {dimension_numbers = #tpu.dot_dimension_numbers<[1], [1], [0], [0], [0, 0, 1, 0], [], []>} : vector<64x32xbf16>, vector<16x32xbf16>, vector<64x16xf32> -> vector<64x16xf32>
      "tpu.trace_stop"() : () -> ()
      %199 = arith.truncf %198 : vector<64x16xf32> to vector<64x16xbf16>
      "tpu.trace_start"() <{level = 10 : i32, message = "nd,kd->nk"}> : () -> ()
      %cst_107 = arith.constant dense<0.000000e+00> : vector<64x16xf32>
      %200 = tpu.matmul %89, %195, %cst_107 {dimension_numbers = #tpu.dot_dimension_numbers<[1], [1], [0], [0], [0, 0, 1, 0], [], []>} : vector<64x32xbf16>, vector<16x32xbf16>, vector<64x16xf32> -> vector<64x16xf32>
      "tpu.trace_stop"() : () -> ()
      %201 = arith.truncf %200 : vector<64x16xf32> to vector<64x16xbf16>
      "tpu.trace_start"() <{level = 10 : i32, message = "qd,kd->qk"}> : () -> ()
      %cst_108 = arith.constant dense<0.000000e+00> : vector<64x64xf32>
      %202 = tpu.matmul %197, %199, %cst_108 {dimension_numbers = #tpu.dot_dimension_numbers<[1], [1], [0], [0], [0, 0, 1, 0], [], []>} : vector<64x16xbf16>, vector<64x16xbf16>, vector<64x64xf32> -> vector<64x64xf32>
      "tpu.trace_stop"() : () -> ()
      %cst_109 = arith.constant dense<0xFF800000> : vector<64xf32>
      %203 = vector.multi_reduction <maximumf>, %202, %cst_109 [1] : vector<64x64xf32> to vector<64xf32>
      %204 = vector.shape_cast %203 : vector<64xf32> to vector<64x1xf32>
      %205 = vector.broadcast %204 : vector<64x1xf32> to vector<64x64xf32>
      %206 = arith.subf %202, %205 : vector<64x64xf32>
      %207 = math.exp %206 : vector<64x64xf32>
      %cst_110 = arith.constant dense<0.000000e+00> : vector<64xf32>
      %208 = vector.multi_reduction <add>, %207, %cst_110 [1] : vector<64x64xf32> to vector<64xf32>
      %209 = vector.shape_cast %208 : vector<64xf32> to vector<64x1xf32>
      %210 = arith.truncf %207 : vector<64x64xf32> to vector<64x64xbf16>
      %cst_111 = arith.constant dense<0.000000e+00> : vector<64x16xf32>
      %211 = tpu.matmul %210, %201, %cst_111 {dimension_numbers = #tpu.dot_dimension_numbers<[1], [0], [0], [1], [0, 0, 1, 1], [], []>} : vector<64x64xbf16>, vector<64x16xbf16>, vector<64x16xf32> -> vector<64x16xf32>
      %212 = tpu.reciprocal %209 {approx = true} : vector<64x1xf32> -> vector<64x1xf32>
      %213 = vector.broadcast %212 : vector<64x1xf32> to vector<64x16xf32>
      %214 = arith.mulf %211, %213 : vector<64x16xf32>
      %215 = arith.truncf %214 : vector<64x16xf32> to vector<64x16xbf16>
      %216 = arith.index_cast %arg33 : i32 to index
      %c0_112 = arith.constant 0 : index
      %c0_113 = arith.constant 0 : index
      %217 = vector.load %arg20[%216, %c0_112, %c0_113] : memref<2x16x32xbf16, #tpu.memory_space<vmem>>, vector<1x16x32xbf16>
      %218 = vector.shape_cast %217 : vector<1x16x32xbf16> to vector<16x32xbf16>
      %cst_114 = arith.constant dense<0.000000e+00> : vector<64x32xf32>
      %219 = tpu.matmul %215, %218, %cst_114 {dimension_numbers = #tpu.dot_dimension_numbers<[1], [0], [0], [1], [0, 0, 1, 1], [], []>} : vector<64x16xbf16>, vector<16x32xbf16>, vector<64x32xf32> -> vector<64x32xf32>
      %220 = arith.addf %arg34, %219 : vector<64x32xf32>
      scf.yield %220 : vector<64x32xf32>
    }
    %c2_i32_51 = arith.constant 2 : i32
    %93 = vector.broadcast %88 : vector<1x32xf32> to vector<64x32xf32>
    %94 = arith.addf %92, %93 : vector<64x32xf32>
    %95 = arith.addf %94, %65 : vector<64x32xf32>
    %c0_52 = arith.constant 0 : index
    %c0_53 = arith.constant 0 : index
    %96 = vector.load %arg22[%c0_52, %c0_53] : memref<1x32xf32, #tpu.memory_space<vmem>>, vector<1x32xf32>
    %c0_54 = arith.constant 0 : index
    %c0_55 = arith.constant 0 : index
    %97 = vector.load %arg23[%c0_54, %c0_55] : memref<1x32xf32, #tpu.memory_space<vmem>>, vector<1x32xf32>
    %cst_56 = arith.constant dense<0.000000e+00> : vector<64xf32>
    %98 = vector.multi_reduction <add>, %95, %cst_56 [1] : vector<64x32xf32> to vector<64xf32>
    %99 = vector.shape_cast %98 : vector<64xf32> to vector<64x1xf32>
    %cst_57 = arith.constant 3.200000e+01 : f32
    %100 = vector.broadcast %cst_57 : f32 to vector<64x1xf32>
    %101 = arith.divf %99, %100 : vector<64x1xf32>
    %102 = vector.broadcast %101 : vector<64x1xf32> to vector<64x32xf32>
    %103 = arith.subf %95, %102 : vector<64x32xf32>
    %104 = arith.mulf %103, %103 : vector<64x32xf32>
    %cst_58 = arith.constant dense<0.000000e+00> : vector<64xf32>
    %105 = vector.multi_reduction <add>, %104, %cst_58 [1] : vector<64x32xf32> to vector<64xf32>
    %106 = vector.shape_cast %105 : vector<64xf32> to vector<64x1xf32>
    %cst_59 = arith.constant 3.200000e+01 : f32
    %107 = vector.broadcast %cst_59 : f32 to vector<64x1xf32>
    %108 = arith.divf %106, %107 : vector<64x1xf32>
    %cst_60 = arith.constant 9.99999974E-6 : f32
    %109 = vector.broadcast %cst_60 : f32 to vector<64x1xf32>
    %110 = arith.addf %108, %109 : vector<64x1xf32>
    %111 = math.rsqrt %110 : vector<64x1xf32>
    %112 = vector.broadcast %111 : vector<64x1xf32> to vector<64x32xf32>
    %113 = arith.mulf %103, %112 : vector<64x32xf32>
    %114 = vector.broadcast %96 : vector<1x32xf32> to vector<64x32xf32>
    %115 = arith.mulf %113, %114 : vector<64x32xf32>
    %116 = vector.broadcast %97 : vector<1x32xf32> to vector<64x32xf32>
    %117 = arith.addf %115, %116 : vector<64x32xf32>
    %118 = arith.truncf %117 : vector<64x32xf32> to vector<64x32xbf16>
    %c0_61 = arith.constant 0 : index
    %c0_62 = arith.constant 0 : index
    %119 = vector.load %arg24[%c0_61, %c0_62] : memref<32x128xbf16, #tpu.memory_space<vmem>>, vector<32x128xbf16>
    %cst_63 = arith.constant dense<0.000000e+00> : vector<64x128xf32>
    %120 = tpu.matmul %118, %119, %cst_63 {dimension_numbers = #tpu.dot_dimension_numbers<[1], [0], [0], [1], [0, 0, 1, 1], [], []>} : vector<64x32xbf16>, vector<32x128xbf16>, vector<64x128xf32> -> vector<64x128xf32>
    %c0_64 = arith.constant 0 : index
    %c0_65 = arith.constant 0 : index
    %121 = vector.load %arg25[%c0_64, %c0_65] : memref<1x128xf32, #tpu.memory_space<vmem>>, vector<1x128xf32>
    %122 = vector.broadcast %121 : vector<1x128xf32> to vector<64x128xf32>
    %123 = arith.addf %120, %122 : vector<64x128xf32>
    %c0_66 = arith.constant 0 : index
    %c0_67 = arith.constant 0 : index
    %124 = vector.load %arg26[%c0_66, %c0_67] : memref<32x128xbf16, #tpu.memory_space<vmem>>, vector<32x128xbf16>
    %cst_68 = arith.constant dense<0.000000e+00> : vector<64x128xf32>
    %125 = tpu.matmul %118, %124, %cst_68 {dimension_numbers = #tpu.dot_dimension_numbers<[1], [0], [0], [1], [0, 0, 1, 1], [], []>} : vector<64x32xbf16>, vector<32x128xbf16>, vector<64x128xf32> -> vector<64x128xf32>
    %c0_69 = arith.constant 0 : index
    %c0_70 = arith.constant 0 : index
    %126 = vector.load %arg27[%c0_69, %c0_70] : memref<1x128xf32, #tpu.memory_space<vmem>>, vector<1x128xf32>
    %127 = vector.broadcast %126 : vector<1x128xf32> to vector<64x128xf32>
    %128 = arith.addf %125, %127 : vector<64x128xf32>
    %cst_71 = arith.constant 5.000000e-01 : f32
    %129 = vector.broadcast %cst_71 : f32 to vector<64x128xf32>
    %130 = arith.mulf %129, %128 : vector<64x128xf32>
    %cst_72 = arith.constant 0.707106769 : f32
    %131 = vector.broadcast %cst_72 : f32 to vector<64x128xf32>
    %132 = arith.mulf %128, %131 : vector<64x128xf32>
    %cst_73 = arith.constant 0.000000e+00 : f32
    %133 = vector.broadcast %cst_73 : f32 to vector<64x128xf32>
    %134 = arith.cmpf oge, %132, %133 : vector<64x128xf32>
    %cst_74 = arith.constant 1.000000e+00 : f32
    %cst_75 = arith.constant -1.000000e+00 : f32
    %135 = vector.broadcast %cst_74 : f32 to vector<64x128xf32>
    %136 = vector.broadcast %cst_75 : f32 to vector<64x128xf32>
    %137 = arith.select %134, %135, %136 : vector<64x128xi1>, vector<64x128xf32>
    %138 = math.absf %132 : vector<64x128xf32>
    %cst_76 = arith.constant 0.327591091 : f32
    %139 = vector.broadcast %cst_76 : f32 to vector<64x128xf32>
    %140 = arith.mulf %139, %138 : vector<64x128xf32>
    %cst_77 = arith.constant 1.000000e+00 : f32
    %141 = vector.broadcast %cst_77 : f32 to vector<64x128xf32>
    %142 = arith.addf %141, %140 : vector<64x128xf32>
    %143 = tpu.reciprocal %142 {approx = true} : vector<64x128xf32> -> vector<64x128xf32>
    %cst_78 = arith.constant 1.06140542 : f32
    %144 = vector.broadcast %cst_78 : f32 to vector<64x128xf32>
    %145 = arith.mulf %144, %143 : vector<64x128xf32>
    %cst_79 = arith.constant -1.45315206 : f32
    %146 = vector.broadcast %cst_79 : f32 to vector<64x128xf32>
    %147 = arith.addf %145, %146 : vector<64x128xf32>
    %148 = arith.mulf %147, %143 : vector<64x128xf32>
    %cst_80 = arith.constant 1.42141378 : f32
    %149 = vector.broadcast %cst_80 : f32 to vector<64x128xf32>
    %150 = arith.addf %148, %149 : vector<64x128xf32>
    %151 = arith.mulf %150, %143 : vector<64x128xf32>
    %cst_81 = arith.constant -0.284496725 : f32
    %152 = vector.broadcast %cst_81 : f32 to vector<64x128xf32>
    %153 = arith.addf %151, %152 : vector<64x128xf32>
    %154 = arith.mulf %153, %143 : vector<64x128xf32>
    %cst_82 = arith.constant 0.254829586 : f32
    %155 = vector.broadcast %cst_82 : f32 to vector<64x128xf32>
    %156 = arith.addf %154, %155 : vector<64x128xf32>
    %157 = arith.mulf %156, %143 : vector<64x128xf32>
    %cst_83 = arith.constant 0.000000e+00 : f32
    %158 = vector.broadcast %cst_83 : f32 to vector<64x128xf32>
    %159 = arith.subf %158, %138 : vector<64x128xf32>
    %160 = arith.mulf %159, %138 : vector<64x128xf32>
    %161 = math.exp %160 : vector<64x128xf32>
    %162 = arith.mulf %157, %161 : vector<64x128xf32>
    %cst_84 = arith.constant 1.000000e+00 : f32
    %163 = vector.broadcast %cst_84 : f32 to vector<64x128xf32>
    %164 = arith.subf %163, %162 : vector<64x128xf32>
    %165 = arith.mulf %137, %164 : vector<64x128xf32>
    %cst_85 = arith.constant 1.000000e+00 : f32
    %166 = vector.broadcast %cst_85 : f32 to vector<64x128xf32>
    %167 = arith.addf %166, %165 : vector<64x128xf32>
    %168 = arith.mulf %130, %167 : vector<64x128xf32>
    %169 = arith.mulf %123, %168 : vector<64x128xf32>
    %170 = arith.truncf %169 : vector<64x128xf32> to vector<64x128xbf16>
    %c0_86 = arith.constant 0 : index
    %c0_87 = arith.constant 0 : index
    %171 = vector.load %arg28[%c0_86, %c0_87] : memref<128x32xbf16, #tpu.memory_space<vmem>>, vector<128x32xbf16>
    %cst_88 = arith.constant dense<0.000000e+00> : vector<64x32xf32>
    %172 = tpu.matmul %170, %171, %cst_88 {dimension_numbers = #tpu.dot_dimension_numbers<[1], [0], [0], [1], [0, 0, 1, 1], [], []>} : vector<64x128xbf16>, vector<128x32xbf16>, vector<64x32xf32> -> vector<64x32xf32>
    %c0_89 = arith.constant 0 : index
    %c0_90 = arith.constant 0 : index
    %173 = vector.load %arg29[%c0_89, %c0_90] : memref<1x32xf32, #tpu.memory_space<vmem>>, vector<1x32xf32>
    %174 = vector.broadcast %173 : vector<1x32xf32> to vector<64x32xf32>
    %175 = arith.addf %172, %174 : vector<64x32xf32>
    %176 = arith.addf %175, %95 : vector<64x32xf32>
    %177 = arith.truncf %176 : vector<64x32xf32> to vector<64x32xbf16>
    %c0_91 = arith.constant 0 : index
    %c0_92 = arith.constant 0 : index
    %178 = vector.load %arg30[%c0_91, %c0_92] : memref<32x32xbf16, #tpu.memory_space<vmem>>, vector<32x32xbf16>
    %cst_93 = arith.constant dense<0.000000e+00> : vector<64x32xf32>
    %179 = tpu.matmul %177, %178, %cst_93 {dimension_numbers = #tpu.dot_dimension_numbers<[1], [0], [0], [1], [0, 0, 1, 1], [], []>} : vector<64x32xbf16>, vector<32x32xbf16>, vector<64x32xf32> -> vector<64x32xf32>
    %c0_94 = arith.constant 0 : index
    %c0_95 = arith.constant 0 : index
    %180 = vector.load %arg31[%c0_94, %c0_95] : memref<1x32xf32, #tpu.memory_space<vmem>>, vector<1x32xf32>
    %181 = vector.broadcast %180 : vector<1x32xf32> to vector<64x32xf32>
    %182 = arith.addf %179, %181 : vector<64x32xf32>
    %183 = arith.addf %182, %1 : vector<64x32xf32>
    %c0_96 = arith.constant 0 : index
    %c0_97 = arith.constant 0 : index
    %c0_98 = arith.constant 0 : index
    %184 = vector.load %arg32[%c0_96, %c0_97, %c0_98] : memref<1x64x32xf32, #tpu.memory_space<vmem>>, vector<1x64x32xf32>
    %185 = vector.shape_cast %184 : vector<1x64x32xf32> to vector<64x32xf32>
    %186 = vector.shape_cast %183 : vector<64x32xf32> to vector<1x64x32xf32>
    tpu.vector_store %arg32[%c0_96, %c0_97, %c0_98], %186 {strides = array<i32>} : memref<1x64x32xf32, #tpu.memory_space<vmem>>, vector<1x64x32xf32>,
    return
  }
  func.func @transform_0(%arg0: i32) -> (i32, i32, i32) {
    %c0_i32 = arith.constant 0 : i32
    %c0_i32_0 = arith.constant 0 : i32
    %c0_i32_1 = arith.constant 0 : i32
    return %arg0, %c0_i32, %c0_i32_0 : i32, i32, i32
  }
  func.func @transform_1(%arg0: i32) -> (i32, i32) {
    %c0_i32 = arith.constant 0 : i32
    %c0_i32_0 = arith.constant 0 : i32
    %c0_i32_1 = arith.constant 0 : i32
    return %c0_i32, %c0_i32_0 : i32, i32
  }
  func.func @transform_2(%arg0: i32) -> (i32, i32) {
    %c0_i32 = arith.constant 0 : i32
    %c0_i32_0 = arith.constant 0 : i32
    %c0_i32_1 = arith.constant 0 : i32
    return %c0_i32, %c0_i32_0 : i32, i32
  }
  func.func @transform_3(%arg0: i32) -> (i32, i32) {
    %c0_i32 = arith.constant 0 : i32
    %c0_i32_0 = arith.constant 0 : i32
    %c0_i32_1 = arith.constant 0 : i32
    return %c0_i32, %c0_i32_0 : i32, i32
  }
  func.func @transform_4(%arg0: i32) -> (i32, i32) {
    %c0_i32 = arith.constant 0 : i32
    %c0_i32_0 = arith.constant 0 : i32
    %c0_i32_1 = arith.constant 0 : i32
    return %c0_i32, %c0_i32_0 : i32, i32
  }
  func.func @transform_5(%arg0: i32) -> (i32, i32) {
    %c0_i32 = arith.constant 0 : i32
    %c0_i32_0 = arith.constant 0 : i32
    %c0_i32_1 = arith.constant 0 : i32
    return %c0_i32, %c0_i32_0 : i32, i32
  }
  func.func @transform_6(%arg0: i32) -> (i32, i32) {
    %c0_i32 = arith.constant 0 : i32
    %c0_i32_0 = arith.constant 0 : i32
    %c0_i32_1 = arith.constant 0 : i32
    return %c0_i32, %c0_i32_0 : i32, i32
  }
  func.func @transform_7(%arg0: i32) -> (i32, i32) {
    %c0_i32 = arith.constant 0 : i32
    %c0_i32_0 = arith.constant 0 : i32
    %c0_i32_1 = arith.constant 0 : i32
    return %c0_i32, %c0_i32_0 : i32, i32
  }
  func.func @transform_8(%arg0: i32) -> (i32, i32) {
    %c0_i32 = arith.constant 0 : i32
    %c0_i32_0 = arith.constant 0 : i32
    %c0_i32_1 = arith.constant 0 : i32
    return %c0_i32, %c0_i32_0 : i32, i32
  }
  func.func @transform_9(%arg0: i32) -> (i32, i32, i32) {
    %c0_i32 = arith.constant 0 : i32
    %c0_i32_0 = arith.constant 0 : i32
    %c0_i32_1 = arith.constant 0 : i32
    %c0_i32_2 = arith.constant 0 : i32
    return %c0_i32, %c0_i32_0, %c0_i32_1 : i32, i32, i32
  }
  func.func @transform_10(%arg0: i32) -> (i32, i32, i32) {
    %c0_i32 = arith.constant 0 : i32
    %c0_i32_0 = arith.constant 0 : i32
    %c0_i32_1 = arith.constant 0 : i32
    %c0_i32_2 = arith.constant 0 : i32
    return %c0_i32, %c0_i32_0, %c0_i32_1 : i32, i32, i32
  }
  func.func @transform_11(%arg0: i32) -> (i32, i32, i32) {
    %c0_i32 = arith.constant 0 : i32
    %c0_i32_0 = arith.constant 0 : i32
    %c0_i32_1 = arith.constant 0 : i32
    %c0_i32_2 = arith.constant 0 : i32
    return %c0_i32, %c0_i32_0, %c0_i32_1 : i32, i32, i32
  }
  func.func @transform_12(%arg0: i32) -> (i32, i32, i32) {
    %c0_i32 = arith.constant 0 : i32
    %c0_i32_0 = arith.constant 0 : i32
    %c0_i32_1 = arith.constant 0 : i32
    %c0_i32_2 = arith.constant 0 : i32
    return %c0_i32, %c0_i32_0, %c0_i32_1 : i32, i32, i32
  }
  func.func @transform_13(%arg0: i32) -> (i32, i32) {
    %c0_i32 = arith.constant 0 : i32
    %c0_i32_0 = arith.constant 0 : i32
    %c0_i32_1 = arith.constant 0 : i32
    return %c0_i32, %c0_i32_0 : i32, i32
  }
  func.func @transform_14(%arg0: i32) -> (i32, i32) {
    %c0_i32 = arith.constant 0 : i32
    %c0_i32_0 = arith.constant 0 : i32
    %c0_i32_1 = arith.constant 0 : i32
    return %c0_i32, %c0_i32_0 : i32, i32
  }
  func.func @transform_15(%arg0: i32) -> (i32, i32) {
    %c0_i32 = arith.constant 0 : i32
    %c0_i32_0 = arith.constant 0 : i32
    %c0_i32_1 = arith.constant 0 : i32
    return %c0_i32, %c0_i32_0 : i32, i32
  }
  func.func @transform_16(%arg0: i32) -> (i32, i32, i32) {
    %c0_i32 = arith.constant 0 : i32
    %c0_i32_0 = arith.constant 0 : i32
    %c0_i32_1 = arith.constant 0 : i32
    %c0_i32_2 = arith.constant 0 : i32
    return %c0_i32, %c0_i32_0, %c0_i32_1 : i32, i32, i32
  }
  func.func @transform_17(%arg0: i32) -> (i32, i32, i32) {
    %c0_i32 = arith.constant 0 : i32
    %c0_i32_0 = arith.constant 0 : i32
    %c0_i32_1 = arith.constant 0 : i32
    %c0_i32_2 = arith.constant 0 : i32
    return %c0_i32, %c0_i32_0, %c0_i32_1 : i32, i32, i32
  }
  func.func @transform_18(%arg0: i32) -> (i32, i32, i32) {
    %c0_i32 = arith.constant 0 : i32
    %c0_i32_0 = arith.constant 0 : i32
    %c0_i32_1 = arith.constant 0 : i32
    %c0_i32_2 = arith.constant 0 : i32
    return %c0_i32, %c0_i32_0, %c0_i32_1 : i32, i32, i32
  }
  func.func @transform_19(%arg0: i32) -> (i32, i32, i32) {
    %c0_i32 = arith.constant 0 : i32
    %c0_i32_0 = arith.constant 0 : i32
    %c0_i32_1 = arith.constant 0 : i32
    %c0_i32_2 = arith.constant 0 : i32
    return %c0_i32, %c0_i32_0, %c0_i32_1 : i32, i32, i32
  }
  func.func @transform_20(%arg0: i32) -> (i32, i32) {
    %c0_i32 = arith.constant 0 : i32
    %c0_i32_0 = arith.constant 0 : i32
    %c0_i32_1 = arith.constant 0 : i32
    return %c0_i32, %c0_i32_0 : i32, i32
  }
  func.func @transform_21(%arg0: i32) -> (i32, i32) {
    %c0_i32 = arith.constant 0 : i32
    %c0_i32_0 = arith.constant 0 : i32
    %c0_i32_1 = arith.constant 0 : i32
    return %c0_i32, %c0_i32_0 : i32, i32
  }
  func.func @transform_22(%arg0: i32) -> (i32, i32) {
    %c0_i32 = arith.constant 0 : i32
    %c0_i32_0 = arith.constant 0 : i32
    %c0_i32_1 = arith.constant 0 : i32
    return %c0_i32, %c0_i32_0 : i32, i32
  }
  func.func @transform_23(%arg0: i32) -> (i32, i32) {
    %c0_i32 = arith.constant 0 : i32
    %c0_i32_0 = arith.constant 0 : i32
    %c0_i32_1 = arith.constant 0 : i32
    return %c0_i32, %c0_i32_0 : i32, i32
  }
  func.func @transform_24(%arg0: i32) -> (i32, i32) {
    %c0_i32 = arith.constant 0 : i32
    %c0_i32_0 = arith.constant 0 : i32
    %c0_i32_1 = arith.constant 0 : i32
    return %c0_i32, %c0_i32_0 : i32, i32
  }
  func.func @transform_25(%arg0: i32) -> (i32, i32) {
    %c0_i32 = arith.constant 0 : i32
    %c0_i32_0 = arith.constant 0 : i32
    %c0_i32_1 = arith.constant 0 : i32
    return %c0_i32, %c0_i32_0 : i32, i32
  }
  func.func @transform_26(%arg0: i32) -> (i32, i32) {
    %c0_i32 = arith.constant 0 : i32
    %c0_i32_0 = arith.constant 0 : i32
    %c0_i32_1 = arith.constant 0 : i32
    return %c0_i32, %c0_i32_0 : i32, i32
  }
  func.func @transform_27(%arg0: i32) -> (i32, i32) {
    %c0_i32 = arith.constant 0 : i32
    %c0_i32_0 = arith.constant 0 : i32
    %c0_i32_1 = arith.constant 0 : i32
    return %c0_i32, %c0_i32_0 : i32, i32
  }
  func.func @transform_28(%arg0: i32) -> (i32, i32) {
    %c0_i32 = arith.constant 0 : i32
    %c0_i32_0 = arith.constant 0 : i32
    %c0_i32_1 = arith.constant 0 : i32
    return %c0_i32, %c0_i32_0 : i32, i32
  }
  func.func @transform_29(%arg0: i32) -> (i32, i32) {
    %c0_i32 = arith.constant 0 : i32
    %c0_i32_0 = arith.constant 0 : i32
    %c0_i32_1 = arith.constant 0 : i32
    return %c0_i32, %c0_i32_0 : i32, i32
  }
  func.func @transform_30(%arg0: i32) -> (i32, i32) {
    %c0_i32 = arith.constant 0 : i32
    %c0_i32_0 = arith.constant 0 : i32
    %c0_i32_1 = arith.constant 0 : i32
    return %c0_i32, %c0_i32_0 : i32, i32
  }
  func.func @transform_31(%arg0: i32) -> (i32, i32, i32) {
    %c0_i32 = arith.constant 0 : i32
    %c0_i32_0 = arith.constant 0 : i32
    %c0_i32_1 = arith.constant 0 : i32
    return %arg0, %c0_i32, %c0_i32_0 : i32, i32, i32
  }
}

</mosaic_0001>

<llo_original>
// kernel: spatial_transformer_forward.1
$region0: #{spatial_transformer_forward.1}
  #allocation0 [shape = 'u32[]', space=smem, size = 0x4, offset = 0x4, fixed_abs, tag = 'smem constant byte address 0x4 - core index']
  #allocation1 [shape = 'u32[144,128]{1,0:T(1,128)}', space=vmem, size = 0x12000, scoped, tag = 'internal scratch']
  %s0 = inlined_call_operand.smem [shape: u32[32], index: -1, kind: input, shape index: {}]
  %s1 = sld [smem:[%s0]]
  %s2 = scalar_lea.smem %s0, 1
  %s3 = sld [smem:[%s2]]
  %s4 = scalar_lea.smem %s0, 2
  %s5 = sld [smem:[%s4]]
  %s6 = scalar_lea.smem %s0, 3
  %s7 = sld [smem:[%s6]]
  %s8 = scalar_lea.smem %s0, 4
  %s9 = sld [smem:[%s8]]
  %s10 = scalar_lea.smem %s0, 5
  %s11 = sld [smem:[%s10]]
  %s12 = scalar_lea.smem %s0, 6
  %s13 = sld [smem:[%s12]]
  %s14 = scalar_lea.smem %s0, 7
  %s15 = sld [smem:[%s14]]
  %s16 = scalar_lea.smem %s0, 8
  %s17 = sld [smem:[%s16]]
  %s18 = scalar_lea.smem %s0, 9
  %s19 = sld [smem:[%s18]]
  %s20 = scalar_lea.smem %s0, 10
  %s21 = sld [smem:[%s20]]
  %s22 = scalar_lea.smem %s0, 11
  %s23 = sld [smem:[%s22]]
  %s24 = scalar_lea.smem %s0, 12
  %s25 = sld [smem:[%s24]]
  %s26 = scalar_lea.smem %s0, 13
  %s27 = sld [smem:[%s26]]
  %s28 = scalar_lea.smem %s0, 14
  %s29 = sld [smem:[%s28]]
  %s30 = scalar_lea.smem %s0, 15
  %s31 = sld [smem:[%s30]]
  %s32 = scalar_lea.smem %s0, 16
  %s33 = sld [smem:[%s32]]
  %s34 = scalar_lea.smem %s0, 17
  %s35 = sld [smem:[%s34]]
  %s36 = scalar_lea.smem %s0, 18
  %s37 = sld [smem:[%s36]]
  %s38 = scalar_lea.smem %s0, 19
  %s39 = sld [smem:[%s38]]
  %s40 = scalar_lea.smem %s0, 20
  %s41 = sld [smem:[%s40]]
  %s42 = scalar_lea.smem %s0, 21
  %s43 = sld [smem:[%s42]]
  %s44 = scalar_lea.smem %s0, 22
  %s45 = sld [smem:[%s44]]
  %s46 = scalar_lea.smem %s0, 23
  %s47 = sld [smem:[%s46]]
  %s48 = scalar_lea.smem %s0, 24
  %s49 = sld [smem:[%s48]]
  %s50 = scalar_lea.smem %s0, 25
  %s51 = sld [smem:[%s50]]
  %s52 = scalar_lea.smem %s0, 26
  %s53 = sld [smem:[%s52]]
  %s54 = scalar_lea.smem %s0, 27
  %s55 = sld [smem:[%s54]]
  %s56 = scalar_lea.smem %s0, 28
  %s57 = sld [smem:[%s56]]
  %s58 = scalar_lea.smem %s0, 29
  %s59 = sld [smem:[%s58]]
  %s60 = scalar_lea.smem %s0, 30
  %s61 = sld [smem:[%s60]]
  %s62 = scalar_lea.smem %s0, 31
  %s63 = sld [smem:[%s62]]
  %s64 = sld [smem:[#allocation0]]
  $region227: #{spatial_transformer_forward.1} parent=0
    _
  %s66 = ssub.s32 1, %s64
  %s67 = scalar_select 0, %s66, %s64
  $region1: #{spatial_transformer_forward.1} parent=0
    #allocation2 [shape = 'u8[65536]{0}', space=vmem, size = 0x10000, scoped, tag = 'input window, operand 0']
    #allocation3 [shape = 's32[2]{0}', space=sflag, size = 0x8, scoped, tag = 'scoped memory for spatial_transformer_forward.1']
    #allocation4 [shape = 's32[2]{0}', space=sflag, size = 0x8, scoped, tag = 'scoped memory for spatial_transformer_forward.1']
    #allocation5 [shape = 'u8[8192]{0}', space=vmem, size = 0x2000, scoped, tag = 'input window, operand 9, single buffered']
    #allocation6 [shape = 's32[1]{0}', space=sflag, size = 0x4, scoped, tag = 'scoped memory for spatial_transformer_forward.1']
    #allocation7 [shape = 'u8[8192]{0}', space=vmem, size = 0x2000, scoped, tag = 'input window, operand 10, single buffered']
    #allocation8 [shape = 'u8[8192]{0}', space=vmem, size = 0x2000, scoped, tag = 'input window, operand 11, single buffered']
    #allocation9 [shape = 's32[1]{0}', space=sflag, size = 0x4, scoped, tag = 'scoped memory for spatial_transformer_forward.1']
    #allocation10 [shape = 'u8[8192]{0}', space=vmem, size = 0x2000, scoped, tag = 'input window, operand 12, single buffered']
    #allocation11 [shape = 'u8[512]{0}', space=vmem, size = 0x400, scoped, tag = 'input window, operand 13, single buffered']
    #allocation12 [shape = 's32[1]{0}', space=sflag, size = 0x4, scoped, tag = 'scoped memory for spatial_transformer_forward.1']
    #allocation13 [shape = 'u8[8192]{0}', space=vmem, size = 0x2000, scoped, tag = 'input window, operand 17, single buffered']
    #allocation14 [shape = 'u8[8192]{0}', space=vmem, size = 0x2000, scoped, tag = 'input window, operand 18, single buffered']
    #allocation15 [shape = 's32[1]{0}', space=sflag, size = 0x4, scoped, tag = 'scoped memory for spatial_transformer_forward.1']
    #allocation16 [shape = 'u8[8192]{0}', space=vmem, size = 0x2000, scoped, tag = 'input window, operand 19, single buffered']
    #allocation17 [shape = 'u8[512]{0}', space=vmem, size = 0x400, scoped, tag = 'input window, operand 20, single buffered']
    #allocation18 [shape = 's32[1]{0}', space=sflag, size = 0x4, scoped, tag = 'scoped memory for spatial_transformer_forward.1']
    #allocation19 [shape = 'u8[512]{0}', space=vmem, size = 0x400, scoped, tag = 'input window, operand 24, single buffered']
    #allocation20 [shape = 'u8[8192]{0}', space=vmem, size = 0x2000, scoped, tag = 'input window, operand 25, single buffered']
    #allocation21 [shape = 's32[1]{0}', space=sflag, size = 0x4, scoped, tag = 'scoped memory for spatial_transformer_forward.1']
    #allocation22 [shape = 'u8[512]{0}', space=vmem, size = 0x400, scoped, tag = 'input window, operand 26, single buffered']
    #allocation23 [shape = 'u8[512]{0}', space=vmem, size = 0x400, scoped, tag = 'input window, operand 28, single buffered']
    #allocation24 [shape = 's32[1]{0}', space=sflag, size = 0x4, scoped, tag = 'scoped memory for spatial_transformer_forward.1']
    #allocation25 [shape = 'u8[65536]{0}', space=vmem, size = 0x10000, scoped, tag = 'output window, operand 0']
    %68 = vsyncpa [#allocation3], 0
    %s69 = scalar_lea.sflag [#allocation3], 1
    %70 = vsyncpa %s69, 0
    %71 = vsyncpa [#allocation6], 0
    %72 = vsyncpa [#allocation9], 0
    %73 = vsyncpa [#allocation12], 0
    %74 = vsyncpa [#allocation15], 0
    %75 = vsyncpa [#allocation18], 0
    %76 = vsyncpa [#allocation21], 0
    %77 = vsyncpa [#allocation24], 0
    %78 = vsyncpa [#allocation4], 0
    %s79 = scalar_lea.sflag [#allocation4], 1
    %80 = vsyncpa %s79, 0
    loop: start=0, step=1, limit=4
    $region2: #{spatial_transformer_forward.1} parent=1 // loop_pre_header
      _
    $region3: #{spatial_transformer_forward.1} parent=1 // loop_header
      %s82 = sphi 0, %s86
      %p83 = scmp.ge.s32.totalorder %s82, 4
      %s92 = sphi 0, %s94
      %s95 = sphi 0, %s92
      %s96 = sphi 0, %s95
      %s112 = sphi 0, %s96
      %s116 = sphi 0, %s116
      %s118 = sphi 0, %s116
      %s119 = sphi 0, %s118
      %s133 = sphi 0, %s119
      %s137 = sphi 0, %s137
      %s139 = sphi 0, %s137
      %s140 = sphi 0, %s139
      %s154 = sphi 0, %s140
      %s158 = sphi 0, %s158
      %s160 = sphi 0, %s158
      %s161 = sphi 0, %s160
      %s175 = sphi 0, %s161
      %s179 = sphi 0, %s179
      %s181 = sphi 0, %s179
      %s182 = sphi 0, %s181
      %s196 = sphi 0, %s182
      %s200 = sphi 0, %s200
      %s202 = sphi 0, %s200
      %s203 = sphi 0, %s202
      %s217 = sphi 0, %s203
      %s221 = sphi 0, %s221
      %s223 = sphi 0, %s221
      %s224 = sphi 0, %s223
      %s238 = sphi 0, %s224
      %s242 = sphi 0, %s242
      %s244 = sphi 0, %s242
      %s245 = sphi 0, %s244
      %s259 = sphi 0, %s245
      %s263 = sphi 0, %s263
      %s265 = sphi 0, %s263
      %s266 = sphi 0, %s265
      %s280 = sphi 0, %s266
      %s284 = sphi 0, %s284
      %s286 = sphi 0, %s284
      %s287 = sphi 0, %s286
      %s301 = sphi 0, %s287
      %s305 = sphi 0, %s305
      %s307 = sphi 0, %s305
      %s308 = sphi 0, %s307
      %s322 = sphi 0, %s308
      %s326 = sphi 0, %s326
      %s328 = sphi 0, %s326
      %s329 = sphi 0, %s328
      %s343 = sphi 0, %s329
      %s347 = sphi 0, %s347
      %s349 = sphi 0, %s347
      %s350 = sphi 0, %s349
      %s364 = sphi 0, %s350
      %s368 = sphi 0, %s368
      %s370 = sphi 0, %s368
      %s371 = sphi 0, %s370
      %s385 = sphi 0, %s371
      %s389 = sphi 0, %s389
      %s391 = sphi 0, %s389
      %s392 = sphi 0, %s391
      %s406 = sphi 0, %s392
      %s410 = sphi 0, %s410
      %s412 = sphi 0, %s410
      %s413 = sphi 0, %s412
      %s427 = sphi 0, %s413
      %s431 = sphi 0, %s431
      %s433 = sphi 0, %s431
      %s434 = sphi 0, %s433
      %s448 = sphi 0, %s434
      %s452 = sphi 0, %s452
      %s454 = sphi 0, %s452
      %s455 = sphi 0, %s454
      %s469 = sphi 0, %s455
      %s473 = sphi 0, %s473
      %s475 = sphi 0, %s473
      %s476 = sphi 0, %s475
      %s490 = sphi 0, %s476
      %s494 = sphi 0, %s494
      %s496 = sphi 0, %s494
      %s497 = sphi 0, %s496
      %s511 = sphi 0, %s497
      %s515 = sphi 0, %s515
      %s517 = sphi 0, %s515
      %s518 = sphi 0, %s517
      %s532 = sphi 0, %s518
      %s536 = sphi 0, %s536
      %s538 = sphi 0, %s536
      %s539 = sphi 0, %s538
      %s553 = sphi 0, %s539
      %s557 = sphi 0, %s557
      %s559 = sphi 0, %s557
      %s560 = sphi 0, %s559
      %s574 = sphi 0, %s560
      %s578 = sphi 0, %s578
      %s580 = sphi 0, %s578
      %s581 = sphi 0, %s580
      %s595 = sphi 0, %s581
      %s599 = sphi 0, %s599
      %s601 = sphi 0, %s599
      %s602 = sphi 0, %s601
      %s616 = sphi 0, %s602
      %s620 = sphi 0, %s620
      %s622 = sphi 0, %s620
      %s623 = sphi 0, %s622
      %s637 = sphi 0, %s623
      %s641 = sphi 0, %s641
      %s643 = sphi 0, %s641
      %s644 = sphi 0, %s643
      %s658 = sphi 0, %s644
      %s662 = sphi 0, %s662
      %s664 = sphi 0, %s662
      %s665 = sphi 0, %s664
      %s679 = sphi 0, %s665
      %s683 = sphi 0, %s683
      %s685 = sphi 0, %s683
      %s686 = sphi 0, %s685
      %s700 = sphi 0, %s686
      %s704 = sphi 0, %s704
      %s706 = sphi 0, %s704
      %s707 = sphi 0, %s706
      %s721 = sphi 0, %s707
      %s725 = sphi 0, %s725
      %s727 = sphi 0, %s725
      %s728 = sphi 0, %s727
      %s742 = sphi 0, %s728
      %s748 = sphi 0, %s750
      %s751 = sphi 0, %s748
      %s752 = sphi 0, %s751
      %s768 = sphi 0, %s752
    $region4: #{spatial_transformer_forward.1} parent=1 // loop_header_branch
      %85 = sbr.rel (%p83) target = $region8
    $region5: #{spatial_transformer_forward.1} parent=1 // loop_body
      %s87 = ssub.s32 %s82, 1
      %s88 = ssub.s32 %s82, 2
      %s89 = sadd.s32 %s82, 1
      %s90 = ssub.s32 %s82, %s89
      %p91 = scmp.eq.s32.totalorder %s90, 0
      %s93 = sadd.s32 %s92, 1
      %s94 = scalar_select %p91, %s92, %s93
      %p97 = pneg %p91
      %p98 = scmp.eq.s32.totalorder %s82, 1
      %p99 = por %p97, %p98
      %p100 = scmp.ne.s32.totalorder %s92, %s95
      %p101 = scmp.eq.s32.totalorder %s82, 0
      %p102 = por %p100, %p101
      %p103 = scmp.ne.s32.totalorder %s92, %s95
      %p104 = scmp.eq.s32.totalorder %s87, 1
      %p105 = por %p103, %p104
      %p106 = scmp.ne.s32.totalorder %s95, %s96
      %p107 = scmp.eq.s32.totalorder %s87, 0
      %p108 = por %p106, %p107
      %p109 = scmp.ne.s32.totalorder %s95, %s96
      %p110 = scmp.eq.s32.totalorder %s88, 1
      %p111 = por %p109, %p110
      %p113 = scmp.ne.s32.totalorder %s96, %s112
      %p114 = scmp.eq.s32.totalorder %s88, 0
      %p115 = por %p113, %p114
      %s117 = sadd.s32 %s116, 1
      %p120 = scmp.eq.s32.totalorder %s82, 1
      %p121 = scmp.ne.s32.totalorder %s116, %s118
      %p122 = scmp.eq.s32.totalorder %s82, 0
      %p123 = por %p121, %p122
      %p124 = scmp.ne.s32.totalorder %s116, %s118
      %p125 = scmp.eq.s32.totalorder %s87, 1
      %p126 = por %p124, %p125
      %p127 = scmp.ne.s32.totalorder %s118, %s119
      %p128 = scmp.eq.s32.totalorder %s87, 0
      %p129 = por %p127, %p128
      %p130 = scmp.ne.s32.totalorder %s118, %s119
      %p131 = scmp.eq.s32.totalorder %s88, 1
      %p132 = por %p130, %p131
      %p134 = scmp.ne.s32.totalorder %s119, %s133
      %p135 = scmp.eq.s32.totalorder %s88, 0
      %p136 = por %p134, %p135
      %s138 = sadd.s32 %s137, 1
      %p141 = scmp.eq.s32.totalorder %s82, 1
      %p142 = scmp.ne.s32.totalorder %s137, %s139
      %p143 = scmp.eq.s32.totalorder %s82, 0
      %p144 = por %p142, %p143
      %p145 = scmp.ne.s32.totalorder %s137, %s139
      %p146 = scmp.eq.s32.totalorder %s87, 1
      %p147 = por %p145, %p146
      %p148 = scmp.ne.s32.totalorder %s139, %s140
      %p149 = scmp.eq.s32.totalorder %s87, 0
      %p150 = por %p148, %p149
      %p151 = scmp.ne.s32.totalorder %s139, %s140
      %p152 = scmp.eq.s32.totalorder %s88, 1
      %p153 = por %p151, %p152
      %p155 = scmp.ne.s32.totalorder %s140, %s154
      %p156 = scmp.eq.s32.totalorder %s88, 0
      %p157 = por %p155, %p156
      %s159 = sadd.s32 %s158, 1
      %p162 = scmp.eq.s32.totalorder %s82, 1
      %p163 = scmp.ne.s32.totalorder %s158, %s160
      %p164 = scmp.eq.s32.totalorder %s82, 0
      %p165 = por %p163, %p164
      %p166 = scmp.ne.s32.totalorder %s158, %s160
      %p167 = scmp.eq.s32.totalorder %s87, 1
      %p168 = por %p166, %p167
      %p169 = scmp.ne.s32.totalorder %s160, %s161
      %p170 = scmp.eq.s32.totalorder %s87, 0
      %p171 = por %p169, %p170
      %p172 = scmp.ne.s32.totalorder %s160, %s161
      %p173 = scmp.eq.s32.totalorder %s88, 1
      %p174 = por %p172, %p173
      %p176 = scmp.ne.s32.totalorder %s161, %s175
      %p177 = scmp.eq.s32.totalorder %s88, 0
      %p178 = por %p176, %p177
      %s180 = sadd.s32 %s179, 1
      %p183 = scmp.eq.s32.totalorder %s82, 1
      %p184 = scmp.ne.s32.totalorder %s179, %s181
      %p185 = scmp.eq.s32.totalorder %s82, 0
      %p186 = por %p184, %p185
      %p187 = scmp.ne.s32.totalorder %s179, %s181
      %p188 = scmp.eq.s32.totalorder %s87, 1
      %p189 = por %p187, %p188
      %p190 = scmp.ne.s32.totalorder %s181, %s182
      %p191 = scmp.eq.s32.totalorder %s87, 0
      %p192 = por %p190, %p191
      %p193 = scmp.ne.s32.totalorder %s181, %s182
      %p194 = scmp.eq.s32.totalorder %s88, 1
      %p195 = por %p193, %p194
      %p197 = scmp.ne.s32.totalorder %s182, %s196
      %p198 = scmp.eq.s32.totalorder %s88, 0
      %p199 = por %p197, %p198
      %s201 = sadd.s32 %s200, 1
      %p204 = scmp.eq.s32.totalorder %s82, 1
      %p205 = scmp.ne.s32.totalorder %s200, %s202
      %p206 = scmp.eq.s32.totalorder %s82, 0
      %p207 = por %p205, %p206
      %p208 = scmp.ne.s32.totalorder %s200, %s202
      %p209 = scmp.eq.s32.totalorder %s87, 1
      %p210 = por %p208, %p209
      %p211 = scmp.ne.s32.totalorder %s202, %s203
      %p212 = scmp.eq.s32.totalorder %s87, 0
      %p213 = por %p211, %p212
      %p214 = scmp.ne.s32.totalorder %s202, %s203
      %p215 = scmp.eq.s32.totalorder %s88, 1
      %p216 = por %p214, %p215
      %p218 = scmp.ne.s32.totalorder %s203, %s217
      %p219 = scmp.eq.s32.totalorder %s88, 0
      %p220 = por %p218, %p219
      %s222 = sadd.s32 %s221, 1
      %p225 = scmp.eq.s32.totalorder %s82, 1
      %p226 = scmp.ne.s32.totalorder %s221, %s223
      %p227 = scmp.eq.s32.totalorder %s82, 0
      %p228 = por %p226, %p227
      %p229 = scmp.ne.s32.totalorder %s221, %s223
      %p230 = scmp.eq.s32.totalorder %s87, 1
      %p231 = por %p229, %p230
      %p232 = scmp.ne.s32.totalorder %s223, %s224
      %p233 = scmp.eq.s32.totalorder %s87, 0
      %p234 = por %p232, %p233
      %p235 = scmp.ne.s32.totalorder %s223, %s224
      %p236 = scmp.eq.s32.totalorder %s88, 1
      %p237 = por %p235, %p236
      %p239 = scmp.ne.s32.totalorder %s224, %s238
      %p240 = scmp.eq.s32.totalorder %s88, 0
      %p241 = por %p239, %p240
      %s243 = sadd.s32 %s242, 1
      %p246 = scmp.eq.s32.totalorder %s82, 1
      %p247 = scmp.ne.s32.totalorder %s242, %s244
      %p248 = scmp.eq.s32.totalorder %s82, 0
      %p249 = por %p247, %p248
      %p250 = scmp.ne.s32.totalorder %s242, %s244
      %p251 = scmp.eq.s32.totalorder %s87, 1
      %p252 = por %p250, %p251
      %p253 = scmp.ne.s32.totalorder %s244, %s245
      %p254 = scmp.eq.s32.totalorder %s87, 0
      %p255 = por %p253, %p254
      %p256 = scmp.ne.s32.totalorder %s244, %s245
      %p257 = scmp.eq.s32.totalorder %s88, 1
      %p258 = por %p256, %p257
      %p260 = scmp.ne.s32.totalorder %s245, %s259
      %p261 = scmp.eq.s32.totalorder %s88, 0
      %p262 = por %p260, %p261
      %s264 = sadd.s32 %s263, 1
      %p267 = scmp.eq.s32.totalorder %s82, 1
      %p268 = scmp.ne.s32.totalorder %s263, %s265
      %p269 = scmp.eq.s32.totalorder %s82, 0
      %p270 = por %p268, %p269
      %p271 = scmp.ne.s32.totalorder %s263, %s265
      %p272 = scmp.eq.s32.totalorder %s87, 1
      %p273 = por %p271, %p272
      %p274 = scmp.ne.s32.totalorder %s265, %s266
      %p275 = scmp.eq.s32.totalorder %s87, 0
      %p276 = por %p274, %p275
      %p277 = scmp.ne.s32.totalorder %s265, %s266
      %p278 = scmp.eq.s32.totalorder %s88, 1
      %p279 = por %p277, %p278
      %p281 = scmp.ne.s32.totalorder %s266, %s280
      %p282 = scmp.eq.s32.totalorder %s88, 0
      %p283 = por %p281, %p282
      %s285 = sadd.s32 %s284, 1
      %p288 = scmp.eq.s32.totalorder %s82, 1
      %p289 = scmp.ne.s32.totalorder %s284, %s286
      %p290 = scmp.eq.s32.totalorder %s82, 0
      %p291 = por %p289, %p290
      %p292 = scmp.ne.s32.totalorder %s284, %s286
      %p293 = scmp.eq.s32.totalorder %s87, 1
      %p294 = por %p292, %p293
      %p295 = scmp.ne.s32.totalorder %s286, %s287
      %p296 = scmp.eq.s32.totalorder %s87, 0
      %p297 = por %p295, %p296
      %p298 = scmp.ne.s32.totalorder %s286, %s287
      %p299 = scmp.eq.s32.totalorder %s88, 1
      %p300 = por %p298, %p299
      %p302 = scmp.ne.s32.totalorder %s287, %s301
      %p303 = scmp.eq.s32.totalorder %s88, 0
      %p304 = por %p302, %p303
      %s306 = sadd.s32 %s305, 1
      %p309 = scmp.eq.s32.totalorder %s82, 1
      %p310 = scmp.ne.s32.totalorder %s305, %s307
      %p311 = scmp.eq.s32.totalorder %s82, 0
      %p312 = por %p310, %p311
      %p313 = scmp.ne.s32.totalorder %s305, %s307
      %p314 = scmp.eq.s32.totalorder %s87, 1
      %p315 = por %p313, %p314
      %p316 = scmp.ne.s32.totalorder %s307, %s308
      %p317 = scmp.eq.s32.totalorder %s87, 0
      %p318 = por %p316, %p317
      %p319 = scmp.ne.s32.totalorder %s307, %s308
      %p320 = scmp.eq.s32.totalorder %s88, 1
      %p321 = por %p319, %p320
      %p323 = scmp.ne.s32.totalorder %s308, %s322
      %p324 = scmp.eq.s32.totalorder %s88, 0
      %p325 = por %p323, %p324
      %s327 = sadd.s32 %s326, 1
      %p330 = scmp.eq.s32.totalorder %s82, 1
      %p331 = scmp.ne.s32.totalorder %s326, %s328
      %p332 = scmp.eq.s32.totalorder %s82, 0
      %p333 = por %p331, %p332
      %p334 = scmp.ne.s32.totalorder %s326, %s328
      %p335 = scmp.eq.s32.totalorder %s87, 1
      %p336 = por %p334, %p335
      %p337 = scmp.ne.s32.totalorder %s328, %s329
      %p338 = scmp.eq.s32.totalorder %s87, 0
      %p339 = por %p337, %p338
      %p340 = scmp.ne.s32.totalorder %s328, %s329
      %p341 = scmp.eq.s32.totalorder %s88, 1
      %p342 = por %p340, %p341
      %p344 = scmp.ne.s32.totalorder %s329, %s343
      %p345 = scmp.eq.s32.totalorder %s88, 0
      %p346 = por %p344, %p345
      %s348 = sadd.s32 %s347, 1
      %p351 = scmp.eq.s32.totalorder %s82, 1
      %p352 = scmp.ne.s32.totalorder %s347, %s349
      %p353 = scmp.eq.s32.totalorder %s82, 0
      %p354 = por %p352, %p353
      %p355 = scmp.ne.s32.totalorder %s347, %s349
      %p356 = scmp.eq.s32.totalorder %s87, 1
      %p357 = por %p355, %p356
      %p358 = scmp.ne.s32.totalorder %s349, %s350
      %p359 = scmp.eq.s32.totalorder %s87, 0
      %p360 = por %p358, %p359
      %p361 = scmp.ne.s32.totalorder %s349, %s350
      %p362 = scmp.eq.s32.totalorder %s88, 1
      %p363 = por %p361, %p362
      %p365 = scmp.ne.s32.totalorder %s350, %s364
      %p366 = scmp.eq.s32.totalorder %s88, 0
      %p367 = por %p365, %p366
      %s369 = sadd.s32 %s368, 1
      %p372 = scmp.eq.s32.totalorder %s82, 1
      %p373 = scmp.ne.s32.totalorder %s368, %s370
      %p374 = scmp.eq.s32.totalorder %s82, 0
      %p375 = por %p373, %p374
      %p376 = scmp.ne.s32.totalorder %s368, %s370
      %p377 = scmp.eq.s32.totalorder %s87, 1
      %p378 = por %p376, %p377
      %p379 = scmp.ne.s32.totalorder %s370, %s371
      %p380 = scmp.eq.s32.totalorder %s87, 0
      %p381 = por %p379, %p380
      %p382 = scmp.ne.s32.totalorder %s370, %s371
      %p383 = scmp.eq.s32.totalorder %s88, 1
      %p384 = por %p382, %p383
      %p386 = scmp.ne.s32.totalorder %s371, %s385
      %p387 = scmp.eq.s32.totalorder %s88, 0
      %p388 = por %p386, %p387
      %s390 = sadd.s32 %s389, 1
      %p393 = scmp.eq.s32.totalorder %s82, 1
      %p394 = scmp.ne.s32.totalorder %s389, %s391
      %p395 = scmp.eq.s32.totalorder %s82, 0
      %p396 = por %p394, %p395
      %p397 = scmp.ne.s32.totalorder %s389, %s391
      %p398 = scmp.eq.s32.totalorder %s87, 1
      %p399 = por %p397, %p398
      %p400 = scmp.ne.s32.totalorder %s391, %s392
      %p401 = scmp.eq.s32.totalorder %s87, 0
      %p402 = por %p400, %p401
      %p403 = scmp.ne.s32.totalorder %s391, %s392
      %p404 = scmp.eq.s32.totalorder %s88, 1
      %p405 = por %p403, %p404
      %p407 = scmp.ne.s32.totalorder %s392, %s406
      %p408 = scmp.eq.s32.totalorder %s88, 0
      %p409 = por %p407, %p408
      %s411 = sadd.s32 %s410, 1
      %p414 = scmp.eq.s32.totalorder %s82, 1
      %p415 = scmp.ne.s32.totalorder %s410, %s412
      %p416 = scmp.eq.s32.totalorder %s82, 0
      %p417 = por %p415, %p416
      %p418 = scmp.ne.s32.totalorder %s410, %s412
      %p419 = scmp.eq.s32.totalorder %s87, 1
      %p420 = por %p418, %p419
      %p421 = scmp.ne.s32.totalorder %s412, %s413
      %p422 = scmp.eq.s32.totalorder %s87, 0
      %p423 = por %p421, %p422
      %p424 = scmp.ne.s32.totalorder %s412, %s413
      %p425 = scmp.eq.s32.totalorder %s88, 1
      %p426 = por %p424, %p425
      %p428 = scmp.ne.s32.totalorder %s413, %s427
      %p429 = scmp.eq.s32.totalorder %s88, 0
      %p430 = por %p428, %p429
      %s432 = sadd.s32 %s431, 1
      %p435 = scmp.eq.s32.totalorder %s82, 1
      %p436 = scmp.ne.s32.totalorder %s431, %s433
      %p437 = scmp.eq.s32.totalorder %s82, 0
      %p438 = por %p436, %p437
      %p439 = scmp.ne.s32.totalorder %s431, %s433
      %p440 = scmp.eq.s32.totalorder %s87, 1
      %p441 = por %p439, %p440
      %p442 = scmp.ne.s32.totalorder %s433, %s434
      %p443 = scmp.eq.s32.totalorder %s87, 0
      %p444 = por %p442, %p443
      %p445 = scmp.ne.s32.totalorder %s433, %s434
      %p446 = scmp.eq.s32.totalorder %s88, 1
      %p447 = por %p445, %p446
      %p449 = scmp.ne.s32.totalorder %s434, %s448
      %p450 = scmp.eq.s32.totalorder %s88, 0
      %p451 = por %p449, %p450
      %s453 = sadd.s32 %s452, 1
      %p456 = scmp.eq.s32.totalorder %s82, 1
      %p457 = scmp.ne.s32.totalorder %s452, %s454
      %p458 = scmp.eq.s32.totalorder %s82, 0
      %p459 = por %p457, %p458
      %p460 = scmp.ne.s32.totalorder %s452, %s454
      %p461 = scmp.eq.s32.totalorder %s87, 1
      %p462 = por %p460, %p461
      %p463 = scmp.ne.s32.totalorder %s454, %s455
      %p464 = scmp.eq.s32.totalorder %s87, 0
      %p465 = por %p463, %p464
      %p466 = scmp.ne.s32.totalorder %s454, %s455
      %p467 = scmp.eq.s32.totalorder %s88, 1
      %p468 = por %p466, %p467
      %p470 = scmp.ne.s32.totalorder %s455, %s469
      %p471 = scmp.eq.s32.totalorder %s88, 0
      %p472 = por %p470, %p471
      %s474 = sadd.s32 %s473, 1
      %p477 = scmp.eq.s32.totalorder %s82, 1
      %p478 = scmp.ne.s32.totalorder %s473, %s475
      %p479 = scmp.eq.s32.totalorder %s82, 0
      %p480 = por %p478, %p479
      %p481 = scmp.ne.s32.totalorder %s473, %s475
      %p482 = scmp.eq.s32.totalorder %s87, 1
      %p483 = por %p481, %p482
      %p484 = scmp.ne.s32.totalorder %s475, %s476
      %p485 = scmp.eq.s32.totalorder %s87, 0
      %p486 = por %p484, %p485
      %p487 = scmp.ne.s32.totalorder %s475, %s476
      %p488 = scmp.eq.s32.totalorder %s88, 1
      %p489 = por %p487, %p488
      %p491 = scmp.ne.s32.totalorder %s476, %s490
      %p492 = scmp.eq.s32.totalorder %s88, 0
      %p493 = por %p491, %p492
      %s495 = sadd.s32 %s494, 1
      %p498 = scmp.eq.s32.totalorder %s82, 1
      %p499 = scmp.ne.s32.totalorder %s494, %s496
      %p500 = scmp.eq.s32.totalorder %s82, 0
      %p501 = por %p499, %p500
      %p502 = scmp.ne.s32.totalorder %s494, %s496
      %p503 = scmp.eq.s32.totalorder %s87, 1
      %p504 = por %p502, %p503
      %p505 = scmp.ne.s32.totalorder %s496, %s497
      %p506 = scmp.eq.s32.totalorder %s87, 0
      %p507 = por %p505, %p506
      %p508 = scmp.ne.s32.totalorder %s496, %s497
      %p509 = scmp.eq.s32.totalorder %s88, 1
      %p510 = por %p508, %p509
      %p512 = scmp.ne.s32.totalorder %s497, %s511
      %p513 = scmp.eq.s32.totalorder %s88, 0
      %p514 = por %p512, %p513
      %s516 = sadd.s32 %s515, 1
      %p519 = scmp.eq.s32.totalorder %s82, 1
      %p520 = scmp.ne.s32.totalorder %s515, %s517
      %p521 = scmp.eq.s32.totalorder %s82, 0
      %p522 = por %p520, %p521
      %p523 = scmp.ne.s32.totalorder %s515, %s517
      %p524 = scmp.eq.s32.totalorder %s87, 1
      %p525 = por %p523, %p524
      %p526 = scmp.ne.s32.totalorder %s517, %s518
      %p527 = scmp.eq.s32.totalorder %s87, 0
      %p528 = por %p526, %p527
      %p529 = scmp.ne.s32.totalorder %s517, %s518
      %p530 = scmp.eq.s32.totalorder %s88, 1
      %p531 = por %p529, %p530
      %p533 = scmp.ne.s32.totalorder %s518, %s532
      %p534 = scmp.eq.s32.totalorder %s88, 0
      %p535 = por %p533, %p534
      %s537 = sadd.s32 %s536, 1
      %p540 = scmp.eq.s32.totalorder %s82, 1
      %p541 = scmp.ne.s32.totalorder %s536, %s538
      %p542 = scmp.eq.s32.totalorder %s82, 0
      %p543 = por %p541, %p542
      %p544 = scmp.ne.s32.totalorder %s536, %s538
      %p545 = scmp.eq.s32.totalorder %s87, 1
      %p546 = por %p544, %p545
      %p547 = scmp.ne.s32.totalorder %s538, %s539
      %p548 = scmp.eq.s32.totalorder %s87, 0
      %p549 = por %p547, %p548
      %p550 = scmp.ne.s32.totalorder %s538, %s539
      %p551 = scmp.eq.s32.totalorder %s88, 1
      %p552 = por %p550, %p551
      %p554 = scmp.ne.s32.totalorder %s539, %s553
      %p555 = scmp.eq.s32.totalorder %s88, 0
      %p556 = por %p554, %p555
      %s558 = sadd.s32 %s557, 1
      %p561 = scmp.eq.s32.totalorder %s82, 1
      %p562 = scmp.ne.s32.totalorder %s557, %s559
      %p563 = scmp.eq.s32.totalorder %s82, 0
      %p564 = por %p562, %p563
      %p565 = scmp.ne.s32.totalorder %s557, %s559
      %p566 = scmp.eq.s32.totalorder %s87, 1
      %p567 = por %p565, %p566
      %p568 = scmp.ne.s32.totalorder %s559, %s560
      %p569 = scmp.eq.s32.totalorder %s87, 0
      %p570 = por %p568, %p569
      %p571 = scmp.ne.s32.totalorder %s559, %s560
      %p572 = scmp.eq.s32.totalorder %s88, 1
      %p573 = por %p571, %p572
      %p575 = scmp.ne.s32.totalorder %s560, %s574
      %p576 = scmp.eq.s32.totalorder %s88, 0
      %p577 = por %p575, %p576
      %s579 = sadd.s32 %s578, 1
      %p582 = scmp.eq.s32.totalorder %s82, 1
      %p583 = scmp.ne.s32.totalorder %s578, %s580
      %p584 = scmp.eq.s32.totalorder %s82, 0
      %p585 = por %p583, %p584
      %p586 = scmp.ne.s32.totalorder %s578, %s580
      %p587 = scmp.eq.s32.totalorder %s87, 1
      %p588 = por %p586, %p587
      %p589 = scmp.ne.s32.totalorder %s580, %s581
      %p590 = scmp.eq.s32.totalorder %s87, 0
      %p591 = por %p589, %p590
      %p592 = scmp.ne.s32.totalorder %s580, %s581
      %p593 = scmp.eq.s32.totalorder %s88, 1
      %p594 = por %p592, %p593
      %p596 = scmp.ne.s32.totalorder %s581, %s595
      %p597 = scmp.eq.s32.totalorder %s88, 0
      %p598 = por %p596, %p597
      %s600 = sadd.s32 %s599, 1
      %p603 = scmp.eq.s32.totalorder %s82, 1
      %p604 = scmp.ne.s32.totalorder %s599, %s601
      %p605 = scmp.eq.s32.totalorder %s82, 0
      %p606 = por %p604, %p605
      %p607 = scmp.ne.s32.totalorder %s599, %s601
      %p608 = scmp.eq.s32.totalorder %s87, 1
      %p609 = por %p607, %p608
      %p610 = scmp.ne.s32.totalorder %s601, %s602
      %p611 = scmp.eq.s32.totalorder %s87, 0
      %p612 = por %p610, %p611
      %p613 = scmp.ne.s32.totalorder %s601, %s602
      %p614 = scmp.eq.s32.totalorder %s88, 1
      %p615 = por %p613, %p614
      %p617 = scmp.ne.s32.totalorder %s602, %s616
      %p618 = scmp.eq.s32.totalorder %s88, 0
      %p619 = por %p617, %p618
      %s621 = sadd.s32 %s620, 1
      %p624 = scmp.eq.s32.totalorder %s82, 1
      %p625 = scmp.ne.s32.totalorder %s620, %s622
      %p626 = scmp.eq.s32.totalorder %s82, 0
      %p627 = por %p625, %p626
      %p628 = scmp.ne.s32.totalorder %s620, %s622
      %p629 = scmp.eq.s32.totalorder %s87, 1
      %p630 = por %p628, %p629
      %p631 = scmp.ne.s32.totalorder %s622, %s623
      %p632 = scmp.eq.s32.totalorder %s87, 0
      %p633 = por %p631, %p632
      %p634 = scmp.ne.s32.totalorder %s622, %s623
      %p635 = scmp.eq.s32.totalorder %s88, 1
      %p636 = por %p634, %p635
      %p638 = scmp.ne.s32.totalorder %s623, %s637
      %p639 = scmp.eq.s32.totalorder %s88, 0
      %p640 = por %p638, %p639
      %s642 = sadd.s32 %s641, 1
      %p645 = scmp.eq.s32.totalorder %s82, 1
      %p646 = scmp.ne.s32.totalorder %s641, %s643
      %p647 = scmp.eq.s32.totalorder %s82, 0
      %p648 = por %p646, %p647
      %p649 = scmp.ne.s32.totalorder %s641, %s643
      %p650 = scmp.eq.s32.totalorder %s87, 1
      %p651 = por %p649, %p650
      %p652 = scmp.ne.s32.totalorder %s643, %s644
      %p653 = scmp.eq.s32.totalorder %s87, 0
      %p654 = por %p652, %p653
      %p655 = scmp.ne.s32.totalorder %s643, %s644
      %p656 = scmp.eq.s32.totalorder %s88, 1
      %p657 = por %p655, %p656
      %p659 = scmp.ne.s32.totalorder %s644, %s658
      %p660 = scmp.eq.s32.totalorder %s88, 0
      %p661 = por %p659, %p660
      %s663 = sadd.s32 %s662, 1
      %p666 = scmp.eq.s32.totalorder %s82, 1
      %p667 = scmp.ne.s32.totalorder %s662, %s664
      %p668 = scmp.eq.s32.totalorder %s82, 0
      %p669 = por %p667, %p668
      %p670 = scmp.ne.s32.totalorder %s662, %s664
      %p671 = scmp.eq.s32.totalorder %s87, 1
      %p672 = por %p670, %p671
      %p673 = scmp.ne.s32.totalorder %s664, %s665
      %p674 = scmp.eq.s32.totalorder %s87, 0
      %p675 = por %p673, %p674
      %p676 = scmp.ne.s32.totalorder %s664, %s665
      %p677 = scmp.eq.s32.totalorder %s88, 1
      %p678 = por %p676, %p677
      %p680 = scmp.ne.s32.totalorder %s665, %s679
      %p681 = scmp.eq.s32.totalorder %s88, 0
      %p682 = por %p680, %p681
      %s684 = sadd.s32 %s683, 1
      %p687 = scmp.eq.s32.totalorder %s82, 1
      %p688 = scmp.ne.s32.totalorder %s683, %s685
      %p689 = scmp.eq.s32.totalorder %s82, 0
      %p690 = por %p688, %p689
      %p691 = scmp.ne.s32.totalorder %s683, %s685
      %p692 = scmp.eq.s32.totalorder %s87, 1
      %p693 = por %p691, %p692
      %p694 = scmp.ne.s32.totalorder %s685, %s686
      %p695 = scmp.eq.s32.totalorder %s87, 0
      %p696 = por %p694, %p695
      %p697 = scmp.ne.s32.totalorder %s685, %s686
      %p698 = scmp.eq.s32.totalorder %s88, 1
      %p699 = por %p697, %p698
      %p701 = scmp.ne.s32.totalorder %s686, %s700
      %p702 = scmp.eq.s32.totalorder %s88, 0
      %p703 = por %p701, %p702
      %s705 = sadd.s32 %s704, 1
      %p708 = scmp.eq.s32.totalorder %s82, 1
      %p709 = scmp.ne.s32.totalorder %s704, %s706
      %p710 = scmp.eq.s32.totalorder %s82, 0
      %p711 = por %p709, %p710
      %p712 = scmp.ne.s32.totalorder %s704, %s706
      %p713 = scmp.eq.s32.totalorder %s87, 1
      %p714 = por %p712, %p713
      %p715 = scmp.ne.s32.totalorder %s706, %s707
      %p716 = scmp.eq.s32.totalorder %s87, 0
      %p717 = por %p715, %p716
      %p718 = scmp.ne.s32.totalorder %s706, %s707
      %p719 = scmp.eq.s32.totalorder %s88, 1
      %p720 = por %p718, %p719
      %p722 = scmp.ne.s32.totalorder %s707, %s721
      %p723 = scmp.eq.s32.totalorder %s88, 0
      %p724 = por %p722, %p723
      %s726 = sadd.s32 %s725, 1
      %p729 = scmp.eq.s32.totalorder %s82, 1
      %p730 = scmp.ne.s32.totalorder %s725, %s727
      %p731 = scmp.eq.s32.totalorder %s82, 0
      %p732 = por %p730, %p731
      %p733 = scmp.ne.s32.totalorder %s725, %s727
      %p734 = scmp.eq.s32.totalorder %s87, 1
      %p735 = por %p733, %p734
      %p736 = scmp.ne.s32.totalorder %s727, %s728
      %p737 = scmp.eq.s32.totalorder %s87, 0
      %p738 = por %p736, %p737
      %p739 = scmp.ne.s32.totalorder %s727, %s728
      %p740 = scmp.eq.s32.totalorder %s88, 1
      %p741 = por %p739, %p740
      %p743 = scmp.ne.s32.totalorder %s728, %s742
      %p744 = scmp.eq.s32.totalorder %s88, 0
      %p745 = por %p743, %p744
      %s746 = ssub.s32 %s82, %s89
      %p747 = scmp.eq.s32.totalorder %s746, 0
      %s749 = sadd.s32 %s748, 1
      %s750 = scalar_select %p747, %s748, %s749
      %p753 = pneg %p747
      %p754 = scmp.eq.s32.totalorder %s82, 1
      %p755 = por %p753, %p754
      %p756 = scmp.ne.s32.totalorder %s748, %s751
      %p757 = scmp.eq.s32.totalorder %s82, 0
      %p758 = por %p756, %p757
      %p759 = scmp.ne.s32.totalorder %s748, %s751
      %p760 = scmp.eq.s32.totalorder %s87, 1
      %p761 = por %p759, %p760
      %p762 = scmp.ne.s32.totalorder %s751, %s752
      %p763 = scmp.eq.s32.totalorder %s87, 0
      %p764 = por %p762, %p763
      %p765 = scmp.ne.s32.totalorder %s751, %s752
      %p766 = scmp.eq.s32.totalorder %s88, 1
      %p767 = por %p765, %p766
      %p769 = scmp.ne.s32.totalorder %s752, %s768
      %p770 = scmp.eq.s32.totalorder %s88, 0
      %p771 = por %p769, %p770
      %p772 = scmp.le.s32.totalorder 1, %s82
      %p773 = scmp.lt.s32.totalorder %s82, 3
      %p774 = pnand %p772, %p773
      %p775 = pneg %p774
      // Predicated region
      $region9: #{spatial_transformer_forward.1} parent=5 // pred_check
        _
      $region10: #{spatial_transformer_forward.1} parent=5 // pred_check_branch
        %777 = sbr.rel (%p774) target = $region12
      $region11: #{spatial_transformer_forward.1} parent=5 // pred_region
        %s778 = ssub.s32 %s82, 1
        // Predicated region
        $region13: #{spatial_transformer_forward.1} parent=11 // pred_check
          %p779 = pneg %p129
        $region14: #{spatial_transformer_forward.1} parent=11 // pred_check_branch
          %781 = sbr.rel (%p779) target = $region16
        $region15: #{spatial_transformer_forward.1} parent=11 // pred_region
          _
        $region16: #{spatial_transformer_forward.1} parent=11 // pred_fallthru
          _
        // Predicated region
        $region17: #{spatial_transformer_forward.1} parent=11 // pred_check
          %p782 = pneg %p150
        $region18: #{spatial_transformer_forward.1} parent=11 // pred_check_branch
          %784 = sbr.rel (%p782) target = $region20
        $region19: #{spatial_transformer_forward.1} parent=11 // pred_region
          _
        $region20: #{spatial_transformer_forward.1} parent=11 // pred_fallthru
          _
        // Predicated region
        $region21: #{spatial_transformer_forward.1} parent=11 // pred_check
          %p785 = pneg %p171
        $region22: #{spatial_transformer_forward.1} parent=11 // pred_check_branch
          %787 = sbr.rel (%p785) target = $region24
        $region23: #{spatial_transformer_forward.1} parent=11 // pred_region
          _
        $region24: #{spatial_transformer_forward.1} parent=11 // pred_fallthru
          _
        // Predicated region
        $region25: #{spatial_transformer_forward.1} parent=11 // pred_check
          %p788 = pneg %p192
        $region26: #{spatial_transformer_forward.1} parent=11 // pred_check_branch
          %790 = sbr.rel (%p788) target = $region28
        $region27: #{spatial_transformer_forward.1} parent=11 // pred_region
          _
        $region28: #{spatial_transformer_forward.1} parent=11 // pred_fallthru
          _
        // Predicated region
        $region29: #{spatial_transformer_forward.1} parent=11 // pred_check
          %p791 = pneg %p213
        $region30: #{spatial_transformer_forward.1} parent=11 // pred_check_branch
          %793 = sbr.rel (%p791) target = $region32
        $region31: #{spatial_transformer_forward.1} parent=11 // pred_region
          _
        $region32: #{spatial_transformer_forward.1} parent=11 // pred_fallthru
          _
        // Predicated region
        $region33: #{spatial_transformer_forward.1} parent=11 // pred_check
          %p794 = pneg %p234
        $region34: #{spatial_transformer_forward.1} parent=11 // pred_check_branch
          %796 = sbr.rel (%p794) target = $region36
        $region35: #{spatial_transformer_forward.1} parent=11 // pred_region
          _
        $region36: #{spatial_transformer_forward.1} parent=11 // pred_fallthru
          _
        // Predicated region
        $region37: #{spatial_transformer_forward.1} parent=11 // pred_check
          %p797 = pneg %p255
        $region38: #{spatial_transformer_forward.1} parent=11 // pred_check_branch
          %799 = sbr.rel (%p797) target = $region40
        $region39: #{spatial_transformer_forward.1} parent=11 // pred_region
          _
        $region40: #{spatial_transformer_forward.1} parent=11 // pred_fallthru
          _
        // Predicated region
        $region41: #{spatial_transformer_forward.1} parent=11 // pred_check
          %p800 = pneg %p276
        $region42: #{spatial_transformer_forward.1} parent=11 // pred_check_branch
          %802 = sbr.rel (%p800) target = $region44
        $region43: #{spatial_transformer_forward.1} parent=11 // pred_region
          _
        $region44: #{spatial_transformer_forward.1} parent=11 // pred_fallthru
          _
        // Predicated region
        $region45: #{spatial_transformer_forward.1} parent=11 // pred_check
          %p803 = pneg %p297
        $region46: #{spatial_transformer_forward.1} parent=11 // pred_check_branch
          %805 = sbr.rel (%p803) target = $region48
        $region47: #{spatial_transformer_forward.1} parent=11 // pred_region
          %s807 = ssub.s32 256, 256
          %808 = vsyncadd [#allocation6], %s807
          %s809 = sshll.u32 [#allocation5], 4
          %s810 = int_to_ptr.vmem [resolvable:$true] %s809
          %815 = dma.hbm_to_vmem [thread:$0]  %s19, 256, %s810, [#allocation6], 64, 64, 4
        $region48: #{spatial_transformer_forward.1} parent=11 // pred_fallthru
          _
        // Predicated region
        $region49: #{spatial_transformer_forward.1} parent=11 // pred_check
          %p816 = pneg %p318
        $region50: #{spatial_transformer_forward.1} parent=11 // pred_check_branch
          %818 = sbr.rel (%p816) target = $region52
        $region51: #{spatial_transformer_forward.1} parent=11 // pred_region
          %s820 = ssub.s32 256, 256
          %821 = vsyncadd [#allocation6], %s820
          %s822 = sshll.u32 [#allocation7], 4
          %s823 = int_to_ptr.vmem [resolvable:$true] %s822
          %828 = dma.hbm_to_vmem [thread:$0]  %s21, 256, %s823, [#allocation6], 64, 64, 4
        $region52: #{spatial_transformer_forward.1} parent=11 // pred_fallthru
          _
        // Predicated region
        $region53: #{spatial_transformer_forward.1} parent=11 // pred_check
          %p829 = pneg %p339
        $region54: #{spatial_transformer_forward.1} parent=11 // pred_check_branch
          %831 = sbr.rel (%p829) target = $region56
        $region55: #{spatial_transformer_forward.1} parent=11 // pred_region
          %s833 = ssub.s32 256, 256
          %834 = vsyncadd [#allocation9], %s833
          %s835 = sshll.u32 [#allocation8], 4
          %s836 = int_to_ptr.vmem [resolvable:$true] %s835
          %841 = dma.hbm_to_vmem [thread:$0]  %s23, 256, %s836, [#allocation9], 64, 64, 4
        $region56: #{spatial_transformer_forward.1} parent=11 // pred_fallthru
          _
        // Predicated region
        $region57: #{spatial_transformer_forward.1} parent=11 // pred_check
          %p842 = pneg %p360
        $region58: #{spatial_transformer_forward.1} parent=11 // pred_check_branch
          %844 = sbr.rel (%p842) target = $region60
        $region59: #{spatial_transformer_forward.1} parent=11 // pred_region
          %s846 = ssub.s32 256, 256
          %847 = vsyncadd [#allocation9], %s846
          %s848 = sshll.u32 [#allocation10], 4
          %s849 = int_to_ptr.vmem [resolvable:$true] %s848
          %854 = dma.hbm_to_vmem [thread:$0]  %s25, 256, %s849, [#allocation9], 64, 64, 4
        $region60: #{spatial_transformer_forward.1} parent=11 // pred_fallthru
          _
        // Predicated region
        $region61: #{spatial_transformer_forward.1} parent=11 // pred_check
          %p855 = pneg %p381
        $region62: #{spatial_transformer_forward.1} parent=11 // pred_check_branch
          %857 = sbr.rel (%p855) target = $region64
        $region63: #{spatial_transformer_forward.1} parent=11 // pred_region
          %s859 = ssub.s32 16, 16
          %860 = vsyncadd [#allocation12], %s859
          %s862 = sshll.u32 [#allocation11], 4
          %s863 = int_to_ptr.vmem [resolvable:$true] %s862
          %865 = dma.hbm_to_vmem [thread:$0]  %s27, 16, %s863, [#allocation12]
        $region64: #{spatial_transformer_forward.1} parent=11 // pred_fallthru
          _
        // Predicated region
        $region65: #{spatial_transformer_forward.1} parent=11 // pred_check
          %p866 = pneg %p402
        $region66: #{spatial_transformer_forward.1} parent=11 // pred_check_branch
          %868 = sbr.rel (%p866) target = $region68
        $region67: #{spatial_transformer_forward.1} parent=11 // pred_region
          _
        $region68: #{spatial_transformer_forward.1} parent=11 // pred_fallthru
          _
        // Predicated region
        $region69: #{spatial_transformer_forward.1} parent=11 // pred_check
          %p869 = pneg %p423
        $region70: #{spatial_transformer_forward.1} parent=11 // pred_check_branch
          %871 = sbr.rel (%p869) target = $region72
        $region71: #{spatial_transformer_forward.1} parent=11 // pred_region
          _
        $region72: #{spatial_transformer_forward.1} parent=11 // pred_fallthru
          _
        // Predicated region
        $region73: #{spatial_transformer_forward.1} parent=11 // pred_check
          %p872 = pneg %p444
        $region74: #{spatial_transformer_forward.1} parent=11 // pred_check_branch
          %874 = sbr.rel (%p872) target = $region76
        $region75: #{spatial_transformer_forward.1} parent=11 // pred_region
          _
        $region76: #{spatial_transformer_forward.1} parent=11 // pred_fallthru
          _
        // Predicated region
        $region77: #{spatial_transformer_forward.1} parent=11 // pred_check
          %p875 = pneg %p465
        $region78: #{spatial_transformer_forward.1} parent=11 // pred_check_branch
          %877 = sbr.rel (%p875) target = $region80
        $region79: #{spatial_transformer_forward.1} parent=11 // pred_region
          %s879 = ssub.s32 256, 256
          %880 = vsyncadd [#allocation12], %s879
          %s881 = sshll.u32 [#allocation13], 4
          %s882 = int_to_ptr.vmem [resolvable:$true] %s881
          %887 = dma.hbm_to_vmem [thread:$0]  %s35, 256, %s882, [#allocation12], 64, 64, 4
        $region80: #{spatial_transformer_forward.1} parent=11 // pred_fallthru
          _
        // Predicated region
        $region81: #{spatial_transformer_forward.1} parent=11 // pred_check
          %p888 = pneg %p486
        $region82: #{spatial_transformer_forward.1} parent=11 // pred_check_branch
          %890 = sbr.rel (%p888) target = $region84
        $region83: #{spatial_transformer_forward.1} parent=11 // pred_region
          %s892 = ssub.s32 256, 256
          %893 = vsyncadd [#allocation15], %s892
          %s894 = sshll.u32 [#allocation14], 4
          %s895 = int_to_ptr.vmem [resolvable:$true] %s894
          %900 = dma.hbm_to_vmem [thread:$0]  %s37, 256, %s895, [#allocation15], 64, 64, 4
        $region84: #{spatial_transformer_forward.1} parent=11 // pred_fallthru
          _
        // Predicated region
        $region85: #{spatial_transformer_forward.1} parent=11 // pred_check
          %p901 = pneg %p507
        $region86: #{spatial_transformer_forward.1} parent=11 // pred_check_branch
          %903 = sbr.rel (%p901) target = $region88
        $region87: #{spatial_transformer_forward.1} parent=11 // pred_region
          %s905 = ssub.s32 256, 256
          %906 = vsyncadd [#allocation15], %s905
          %s907 = sshll.u32 [#allocation16], 4
          %s908 = int_to_ptr.vmem [resolvable:$true] %s907
          %913 = dma.hbm_to_vmem [thread:$0]  %s39, 256, %s908, [#allocation15], 64, 64, 4
        $region88: #{spatial_transformer_forward.1} parent=11 // pred_fallthru
          _
        // Predicated region
        $region89: #{spatial_transformer_forward.1} parent=11 // pred_check
          %p914 = pneg %p528
        $region90: #{spatial_transformer_forward.1} parent=11 // pred_check_branch
          %916 = sbr.rel (%p914) target = $region92
        $region91: #{spatial_transformer_forward.1} parent=11 // pred_region
          %s918 = ssub.s32 16, 16
          %919 = vsyncadd [#allocation18], %s918
          %s921 = sshll.u32 [#allocation17], 4
          %s922 = int_to_ptr.vmem [resolvable:$true] %s921
          %924 = dma.hbm_to_vmem [thread:$0]  %s41, 16, %s922, [#allocation18]
        $region92: #{spatial_transformer_forward.1} parent=11 // pred_fallthru
          _
        // Predicated region
        $region93: #{spatial_transformer_forward.1} parent=11 // pred_check
          %p925 = pneg %p549
        $region94: #{spatial_transformer_forward.1} parent=11 // pred_check_branch
          %927 = sbr.rel (%p925) target = $region96
        $region95: #{spatial_transformer_forward.1} parent=11 // pred_region
          _
        $region96: #{spatial_transformer_forward.1} parent=11 // pred_fallthru
          _
        // Predicated region
        $region97: #{spatial_transformer_forward.1} parent=11 // pred_check
          %p928 = pneg %p570
        $region98: #{spatial_transformer_forward.1} parent=11 // pred_check_branch
          %930 = sbr.rel (%p928) target = $region100
        $region99: #{spatial_transformer_forward.1} parent=11 // pred_region
          _
        $region100: #{spatial_transformer_forward.1} parent=11 // pred_fallthru
          _
        // Predicated region
        $region101: #{spatial_transformer_forward.1} parent=11 // pred_check
          %p931 = pneg %p591
        $region102: #{spatial_transformer_forward.1} parent=11 // pred_check_branch
          %933 = sbr.rel (%p931) target = $region104
        $region103: #{spatial_transformer_forward.1} parent=11 // pred_region
          _
        $region104: #{spatial_transformer_forward.1} parent=11 // pred_fallthru
          _
        // Predicated region
        $region105: #{spatial_transformer_forward.1} parent=11 // pred_check
          %p934 = pneg %p612
        $region106: #{spatial_transformer_forward.1} parent=11 // pred_check_branch
          %936 = sbr.rel (%p934) target = $region108
        $region107: #{spatial_transformer_forward.1} parent=11 // pred_region
          %s938 = ssub.s32 16, 16
          %939 = vsyncadd [#allocation18], %s938
          %s941 = sshll.u32 [#allocation19], 4
          %s942 = int_to_ptr.vmem [resolvable:$true] %s941
          %944 = dma.hbm_to_vmem [thread:$0]  %s49, 16, %s942, [#allocation18]
        $region108: #{spatial_transformer_forward.1} parent=11 // pred_fallthru
          _
        // Predicated region
        $region109: #{spatial_transformer_forward.1} parent=11 // pred_check
          %p945 = pneg %p633
        $region110: #{spatial_transformer_forward.1} parent=11 // pred_check_branch
          %947 = sbr.rel (%p945) target = $region112
        $region111: #{spatial_transformer_forward.1} parent=11 // pred_region
          %s949 = ssub.s32 256, 256
          %950 = vsyncadd [#allocation21], %s949
          %s951 = sshll.u32 [#allocation20], 4
          %s952 = int_to_ptr.vmem [resolvable:$true] %s951
          %957 = dma.hbm_to_vmem [thread:$0]  %s51, 256, %s952, [#allocation21], 64, 64, 4
        $region112: #{spatial_transformer_forward.1} parent=11 // pred_fallthru
          _
        // Predicated region
        $region113: #{spatial_transformer_forward.1} parent=11 // pred_check
          %p958 = pneg %p654
        $region114: #{spatial_transformer_forward.1} parent=11 // pred_check_branch
          %960 = sbr.rel (%p958) target = $region116
        $region115: #{spatial_transformer_forward.1} parent=11 // pred_region
          %s962 = ssub.s32 16, 16
          %963 = vsyncadd [#allocation21], %s962
          %s965 = sshll.u32 [#allocation22], 4
          %s966 = int_to_ptr.vmem [resolvable:$true] %s965
          %968 = dma.hbm_to_vmem [thread:$0]  %s53, 16, %s966, [#allocation21]
        $region116: #{spatial_transformer_forward.1} parent=11 // pred_fallthru
          _
        // Predicated region
        $region117: #{spatial_transformer_forward.1} parent=11 // pred_check
          %p969 = pneg %p675
        $region118: #{spatial_transformer_forward.1} parent=11 // pred_check_branch
          %971 = sbr.rel (%p969) target = $region120
        $region119: #{spatial_transformer_forward.1} parent=11 // pred_region
          _
        $region120: #{spatial_transformer_forward.1} parent=11 // pred_fallthru
          _
        // Predicated region
        $region121: #{spatial_transformer_forward.1} parent=11 // pred_check
          %p972 = pneg %p696
        $region122: #{spatial_transformer_forward.1} parent=11 // pred_check_branch
          %974 = sbr.rel (%p972) target = $region124
        $region123: #{spatial_transformer_forward.1} parent=11 // pred_region
          %s976 = ssub.s32 16, 16
          %977 = vsyncadd [#allocation24], %s976
          %s979 = sshll.u32 [#allocation23], 4
          %s980 = int_to_ptr.vmem [resolvable:$true] %s979
          %982 = dma.hbm_to_vmem [thread:$0]  %s57, 16, %s980, [#allocation24]
        $region124: #{spatial_transformer_forward.1} parent=11 // pred_fallthru
          _
        // Predicated region
        $region125: #{spatial_transformer_forward.1} parent=11 // pred_check
          %p983 = pneg %p717
        $region126: #{spatial_transformer_forward.1} parent=11 // pred_check_branch
          %985 = sbr.rel (%p983) target = $region128
        $region127: #{spatial_transformer_forward.1} parent=11 // pred_region
          _
        $region128: #{spatial_transformer_forward.1} parent=11 // pred_fallthru
          _
        // Predicated region
        $region129: #{spatial_transformer_forward.1} parent=11 // pred_check
          %p986 = pneg %p738
        $region130: #{spatial_transformer_forward.1} parent=11 // pred_check_branch
          %988 = sbr.rel (%p986) target = $region132
        $region131: #{spatial_transformer_forward.1} parent=11 // pred_region
          _
        $region132: #{spatial_transformer_forward.1} parent=11 // pred_fallthru
          _
      $region12: #{spatial_transformer_forward.1} parent=5 // pred_fallthru
        _
      %p989 = scmp.lt.s32.totalorder %s82, 2
      // Predicated region
      $region133: #{spatial_transformer_forward.1} parent=5 // pred_check
        %p990 = pneg %p989
      $region134: #{spatial_transformer_forward.1} parent=5 // pred_check_branch
        %992 = sbr.rel (%p990) target = $region136
      $region135: #{spatial_transformer_forward.1} parent=5 // pred_region
        // Predicated region
        $region137: #{spatial_transformer_forward.1} parent=135 // pred_check
          %p993 = pneg %p102
        $region138: #{spatial_transformer_forward.1} parent=135 // pred_check_branch
          %995 = sbr.rel (%p993) target = $region140
        $region139: #{spatial_transformer_forward.1} parent=135 // pred_region
          %s996 = sand.u32 %s92, 1
          %s997 = scalar_lea.sflag [#allocation3], %s996
          %s998 = sand.u32 %s92, 1
          %s999 = smul.addr %s998, 64
          %s1000 = scalar_lea.vmem [#allocation2], %s999
          %s1002 = ssub.s32 1024, 1024
          %1003 = vsyncadd %s997, %s1002
          %s1004 = smul.addr %s82, 8
          %s1005 = smul.addr %s1004, 128
          %s1006 = scalar_lea.hbm %s1, %s1005
          %s1007 = sshll.u32 %s1000, 4
          %s1008 = int_to_ptr.vmem [resolvable:$true] %s1007
          %1013 = dma.hbm_to_vmem [thread:$0]  %s1006, 1024, %s1008, %s997, 128, 128, 8
        $region140: #{spatial_transformer_forward.1} parent=135 // pred_fallthru
          _
      $region136: #{spatial_transformer_forward.1} parent=5 // pred_fallthru
        _
      %p1014 = scmp.le.s32.totalorder 1, %s82
      %p1015 = scmp.lt.s32.totalorder %s82, 3
      %p1016 = pnand %p1014, %p1015
      %p1017 = pneg %p1016
      // Predicated region
      $region141: #{spatial_transformer_forward.1} parent=5 // pred_check
        _
      $region142: #{spatial_transformer_forward.1} parent=5 // pred_check_branch
        %1019 = sbr.rel (%p1016) target = $region144
      $region143: #{spatial_transformer_forward.1} parent=5 // pred_region
        %s1020 = ssub.s32 %s82, 1
        %s1021 = sand.u32 %s95, 1
        %s1022 = scalar_lea.sflag [#allocation3], %s1021
        %s1023 = sand.u32 %s95, 1
        %s1024 = smul.addr %s1023, 64
        %s1025 = scalar_lea.vmem [#allocation2], %s1024
        // Predicated region
        $region145: #{spatial_transformer_forward.1} parent=143 // pred_check
          %p1026 = pneg %p108
        $region146: #{spatial_transformer_forward.1} parent=143 // pred_check_branch
          %1028 = sbr.rel (%p1026) target = $region148
        $region147: #{spatial_transformer_forward.1} parent=143 // pred_region
          %1029 = dma.done %s1022, 1024
        $region148: #{spatial_transformer_forward.1} parent=143 // pred_fallthru
          _
        // Predicated region
        $region149: #{spatial_transformer_forward.1} parent=143 // pred_check
          %p1030 = pneg %p297
        $region150: #{spatial_transformer_forward.1} parent=143 // pred_check_branch
          %1032 = sbr.rel (%p1030) target = $region152
        $region151: #{spatial_transformer_forward.1} parent=143 // pred_region
          %1033 = dma.done [#allocation6], 256
        $region152: #{spatial_transformer_forward.1} parent=143 // pred_fallthru
          _
        // Predicated region
        $region153: #{spatial_transformer_forward.1} parent=143 // pred_check
          %p1034 = pneg %p318
        $region154: #{spatial_transformer_forward.1} parent=143 // pred_check_branch
          %1036 = sbr.rel (%p1034) target = $region156
        $region155: #{spatial_transformer_forward.1} parent=143 // pred_region
          %1037 = dma.done [#allocation6], 256
        $region156: #{spatial_transformer_forward.1} parent=143 // pred_fallthru
          _
        // Predicated region
        $region157: #{spatial_transformer_forward.1} parent=143 // pred_check
          %p1038 = pneg %p339
        $region158: #{spatial_transformer_forward.1} parent=143 // pred_check_branch
          %1040 = sbr.rel (%p1038) target = $region160
        $region159: #{spatial_transformer_forward.1} parent=143 // pred_region
          %1041 = dma.done [#allocation9], 256
        $region160: #{spatial_transformer_forward.1} parent=143 // pred_fallthru
          _
        // Predicated region
        $region161: #{spatial_transformer_forward.1} parent=143 // pred_check
          %p1042 = pneg %p360
        $region162: #{spatial_transformer_forward.1} parent=143 // pred_check_branch
          %1044 = sbr.rel (%p1042) target = $region164
        $region163: #{spatial_transformer_forward.1} parent=143 // pred_region
          %1045 = dma.done [#allocation9], 256
        $region164: #{spatial_transformer_forward.1} parent=143 // pred_fallthru
          _
        // Predicated region
        $region165: #{spatial_transformer_forward.1} parent=143 // pred_check
          %p1046 = pneg %p381
        $region166: #{spatial_transformer_forward.1} parent=143 // pred_check_branch
          %1048 = sbr.rel (%p1046) target = $region168
        $region167: #{spatial_transformer_forward.1} parent=143 // pred_region
          %1049 = dma.done [#allocation12], 16
        $region168: #{spatial_transformer_forward.1} parent=143 // pred_fallthru
          _
        // Predicated region
        $region169: #{spatial_transformer_forward.1} parent=143 // pred_check
          %p1050 = pneg %p465
        $region170: #{spatial_transformer_forward.1} parent=143 // pred_check_branch
          %1052 = sbr.rel (%p1050) target = $region172
        $region171: #{spatial_transformer_forward.1} parent=143 // pred_region
          %1053 = dma.done [#allocation12], 256
        $region172: #{spatial_transformer_forward.1} parent=143 // pred_fallthru
          _
        // Predicated region
        $region173: #{spatial_transformer_forward.1} parent=143 // pred_check
          %p1054 = pneg %p486
        $region174: #{spatial_transformer_forward.1} parent=143 // pred_check_branch
          %1056 = sbr.rel (%p1054) target = $region176
        $region175: #{spatial_transformer_forward.1} parent=143 // pred_region
          %1057 = dma.done [#allocation15], 256
        $region176: #{spatial_transformer_forward.1} parent=143 // pred_fallthru
          _
        // Predicated region
        $region177: #{spatial_transformer_forward.1} parent=143 // pred_check
          %p1058 = pneg %p507
        $region178: #{spatial_transformer_forward.1} parent=143 // pred_check_branch
          %1060 = sbr.rel (%p1058) target = $region180
        $region179: #{spatial_transformer_forward.1} parent=143 // pred_region
          %1061 = dma.done [#allocation15], 256
        $region180: #{spatial_transformer_forward.1} parent=143 // pred_fallthru
          _
        // Predicated region
        $region181: #{spatial_transformer_forward.1} parent=143 // pred_check
          %p1062 = pneg %p528
        $region182: #{spatial_transformer_forward.1} parent=143 // pred_check_branch
          %1064 = sbr.rel (%p1062) target = $region184
        $region183: #{spatial_transformer_forward.1} parent=143 // pred_region
          %1065 = dma.done [#allocation18], 16
        $region184: #{spatial_transformer_forward.1} parent=143 // pred_fallthru
          _
        // Predicated region
        $region185: #{spatial_transformer_forward.1} parent=143 // pred_check
          %p1066 = pneg %p612
        $region186: #{spatial_transformer_forward.1} parent=143 // pred_check_branch
          %1068 = sbr.rel (%p1066) target = $region188
        $region187: #{spatial_transformer_forward.1} parent=143 // pred_region
          %1069 = dma.done [#allocation18], 16
        $region188: #{spatial_transformer_forward.1} parent=143 // pred_fallthru
          _
        // Predicated region
        $region189: #{spatial_transformer_forward.1} parent=143 // pred_check
          %p1070 = pneg %p633
        $region190: #{spatial_transformer_forward.1} parent=143 // pred_check_branch
          %1072 = sbr.rel (%p1070) target = $region192
        $region191: #{spatial_transformer_forward.1} parent=143 // pred_region
          %1073 = dma.done [#allocation21], 256
        $region192: #{spatial_transformer_forward.1} parent=143 // pred_fallthru
          _
        // Predicated region
        $region193: #{spatial_transformer_forward.1} parent=143 // pred_check
          %p1074 = pneg %p654
        $region194: #{spatial_transformer_forward.1} parent=143 // pred_check_branch
          %1076 = sbr.rel (%p1074) target = $region196
        $region195: #{spatial_transformer_forward.1} parent=143 // pred_region
          %1077 = dma.done [#allocation21], 16
        $region196: #{spatial_transformer_forward.1} parent=143 // pred_fallthru
          _
        // Predicated region
        $region197: #{spatial_transformer_forward.1} parent=143 // pred_check
          %p1078 = pneg %p696
        $region198: #{spatial_transformer_forward.1} parent=143 // pred_check_branch
          %1080 = sbr.rel (%p1078) target = $region200
        $region199: #{spatial_transformer_forward.1} parent=143 // pred_region
          %1081 = dma.done [#allocation24], 16
        $region200: #{spatial_transformer_forward.1} parent=143 // pred_fallthru
          _
        %s1082 = sand.u32 %s95, 1
        %s1083 = scalar_lea.sflag [#allocation3], %s1082
        %s1084 = sand.u32 %s95, 1
        %s1085 = smul.addr %s1084, 64
        %s1086 = scalar_lea.vmem [#allocation2], %s1085
        %p1087 = pneg %p108
        %p1088 = pneg %p105
        %p1089 = pneg %p129
        %p1090 = pneg %p126
        %p1091 = pneg %p150
        %p1092 = pneg %p147
        %p1093 = pneg %p171
        %p1094 = pneg %p168
        %p1095 = pneg %p192
        %p1096 = pneg %p189
        %p1097 = pneg %p213
        %p1098 = pneg %p210
        %p1099 = pneg %p234
        %p1100 = pneg %p231
        %p1101 = pneg %p255
        %p1102 = pneg %p252
        %p1103 = pneg %p276
        %p1104 = pneg %p273
        %p1105 = pneg %p297
        %p1106 = pneg %p294
        %p1107 = pneg %p318
        %p1108 = pneg %p315
        %p1109 = pneg %p339
        %p1110 = pneg %p336
        %p1111 = pneg %p360
        %p1112 = pneg %p357
        %p1113 = pneg %p381
        %p1114 = pneg %p378
        %p1115 = pneg %p402
        %p1116 = pneg %p399
        %p1117 = pneg %p423
        %p1118 = pneg %p420
        %p1119 = pneg %p444
        %p1120 = pneg %p441
        %p1121 = pneg %p465
        %p1122 = pneg %p462
        %p1123 = pneg %p486
        %p1124 = pneg %p483
        %p1125 = pneg %p507
        %p1126 = pneg %p504
        %p1127 = pneg %p528
        %p1128 = pneg %p525
        %p1129 = pneg %p549
        %p1130 = pneg %p546
        %p1131 = pneg %p570
        %p1132 = pneg %p567
        %p1133 = pneg %p591
        %p1134 = pneg %p588
        %p1135 = pneg %p612
        %p1136 = pneg %p609
        %p1137 = pneg %p633
        %p1138 = pneg %p630
        %p1139 = pneg %p654
        %p1140 = pneg %p651
        %p1141 = pneg %p675
        %p1142 = pneg %p672
        %p1143 = pneg %p696
        %p1144 = pneg %p693
        %p1145 = pneg %p717
        %p1146 = pneg %p714
        %p1147 = pneg %p738
        %p1148 = pneg %p735
        %p1149 = pneg %p764
        %p1150 = pneg %p761
        %s1151 = sand.u32 %s751, 1
        %s1152 = scalar_lea.sflag [#allocation4], %s1151
        %s1153 = sand.u32 %s751, 1
        %s1154 = smul.addr %s1153, 64
        %s1155 = scalar_lea.vmem [#allocation25], %s1154
        %v1157 = vld [vmem:[%s1025] sm:$0xff]
        %v1158 = vld [vmem:[%s1025 + $0x8] sm:$0xff]
        %v1159 = vld [vmem:[%s1025 + $0x10] sm:$0xff]
        %v1160 = vld [vmem:[%s1025 + $0x18] sm:$0xff]
        %v1161 = vld [vmem:[%s1025 + $0x20] sm:$0xff]
        %v1162 = vld [vmem:[%s1025 + $0x28] sm:$0xff]
        %v1163 = vld [vmem:[%s1025 + $0x30] sm:$0xff]
        %v1164 = vld [vmem:[%s1025 + $0x38] sm:$0xff]
        %v1165 = vld [vmem:[%s7] sm:$0x1]
        %v1166 = vld [vmem:[%s9] sm:$0x1]
        %v1167 = vld [vmem:[%s3] sm:$0xff]
        %v1168 = vld [vmem:[%s3 + $0x8] sm:$0xff]
        %v1169 = vld [vmem:[%s3 + $0x10] sm:$0xff]
        %v1170 = vld [vmem:[%s3 + $0x18] sm:$0xff]
        %v1171 = vld [vmem:[%s5] sm:$0xff]
        %v1172 = vld [vmem:[%s5 + $0x8] sm:$0xff]
        %v1173 = vld [vmem:[%s5 + $0x10] sm:$0xff]
        %v1174 = vld [vmem:[%s5 + $0x18] sm:$0xff]
        %vm1175 = vcmask 261120
        %v1176 = vsel %vm1175, %v1157, 0.0
        %v1177 = vsel %vm1175, %v1158, 0.0
        %v1178 = vadd.f32 %v1176, %v1177
        %v1179 = vsel %vm1175, %v1159, 0.0
        %v1180 = vadd.f32 %v1178, %v1179
        %v1181 = vsel %vm1175, %v1160, 0.0
        %v1182 = vadd.f32 %v1180, %v1181
        %v1183 = vsel %vm1175, %v1161, 0.0
        %v1184 = vadd.f32 %v1182, %v1183
        %v1185 = vsel %vm1175, %v1162, 0.0
        %v1186 = vadd.f32 %v1184, %v1185
        %v1187 = vsel %vm1175, %v1163, 0.0
        %v1188 = vadd.f32 %v1186, %v1187
        %v1189 = vsel %vm1175, %v1164, 0.0
        %v1190 = vadd.f32 %v1188, %v1189
        %v1191 = vrot.slane %v1190, 4
        %v1192 = vadd.f32 %v1190, %v1191
        %v1193 = vrot.slane %v1192, 2
        %v1194 = vadd.f32 %v1192, %v1193
        %v1195 = vrot.slane %v1194, 1
        %v1196 = vadd.f32 %v1194, %v1195
        %v1198 = vsel %vm1175, %v1196, 0
        %1200 = vmatprep.subr.mxu0 0.0
        %1201 = vmatpush1.msra.mxu0 %v1167
        %1202 = vmatprep.subr.mxu0 0.0
        %1203 = vmatpush1.msra.mxu0 %v1168
        %1204 = vmatprep.subr.mxu0 0.0
        %1205 = vmatpush1.msra.mxu0 %v1169
        %1206 = vmatprep.subr.mxu0 0.0
        %1207 = vmatpush1.msra.mxu0 %v1170
        %1208 = vmatprep.subr.mxu0 0.0
        %1209 = vmatpush1.msra.mxu0 0.0
        %1210 = vmatprep.subr.mxu0 0.0
        %1211 = vmatpush1.msra.mxu0 0.0
        %1212 = vmatprep.subr.mxu0 0.0
        %1213 = vmatpush1.msra.mxu0 0.0
        %1214 = vmatprep.subr.mxu0 0.0
        %1215 = vmatpush1.msra.mxu0 0.0
        %1216 = vmatprep.subr.mxu0 0.0
        %1217 = vmatpush1.msra.mxu0 0.0
        %1218 = vmatprep.subr.mxu0 0.0
        %1219 = vmatpush1.msra.mxu0 0.0
        %1220 = vmatprep.subr.mxu0 0.0
        %1221 = vmatpush1.msra.mxu0 0.0
        %1222 = vmatprep.subr.mxu0 0.0
        %1223 = vmatpush1.msra.mxu0 0.0
        %1224 = vmatprep.subr.mxu0 0.0
        %1225 = vmatpush1.msra.mxu0 0.0
        %1226 = vmatprep.subr.mxu0 0.0
        %1227 = vmatpush1.msra.mxu0 0.0
        %1228 = vmatprep.subr.mxu0 0.0
        %1229 = vmatpush1.msra.mxu0 0.0
        %1230 = vmatprep.subr.mxu0 0.0
        %1231 = vmatpush1.msra.mxu0 0.0
        %1232 = vmatprep.subr.mxu0 0.0
        %1233 = vmatpush1.msra.mxu0 0.0
        %1234 = vmatprep.subr.mxu0 0.0
        %1235 = vmatpush1.msra.mxu0 0.0
        %1236 = vmatprep.subr.mxu0 0.0
        %1237 = vmatpush1.msra.mxu0 0.0
        %1238 = vmatprep.subr.mxu0 0.0
        %1239 = vmatpush1.msra.mxu0 0.0
        %1240 = vmatprep.subr.mxu0 0.0
        %1241 = vmatpush1.msra.mxu0 0.0
        %1242 = vmatprep.subr.mxu0 0.0
        %1243 = vmatpush1.msra.mxu0 0.0
        %1244 = vmatprep.subr.mxu0 0.0
        %1245 = vmatpush1.msra.mxu0 0.0
        %1246 = vmatprep.subr.mxu0 0.0
        %1247 = vmatpush1.msra.mxu0 0.0
        %1248 = vmatprep.subr.mxu0 0.0
        %1249 = vmatpush1.msra.mxu0 0.0
        %1250 = vmatprep.subr.mxu0 0.0
        %1251 = vmatpush1.msra.mxu0 0.0
        %1252 = vmatprep.subr.mxu0 0.0
        %1253 = vmatpush1.msra.mxu0 0.0
        %1254 = vmatprep.subr.mxu0 0.0
        %1255 = vmatpush1.msra.mxu0 0.0
        %1256 = vmatprep.subr.mxu0 0.0
        %1257 = vmatpush1.msra.mxu0 0.0
        %1258 = vmatprep.subr.mxu0 0.0
        %1259 = vmatpush1.msra.mxu0 0.0
        %1260 = vmatprep.subr.mxu0 0.0
        %1261 = vmatpush1.msra.mxu0 0.0
        %1262 = vmatprep.subr.mxu0 0.0
        %1263 = vmatpush1.msra.mxu0 0.0
        %1264 = vmatprep.mubr.f32.mxu0 0.0
        %1265 = vmatmul.mubr.f32.gmra.mrb[0].mxu0 %v1198
        %v1266 = vpop.f32.mrb[0].mxu0
        %v1267 = vadd.f32 0.0, %v1266
        %v1268 = vpop.f32.mrb[0].mxu0
        %1269 = vdwg.mxu0
        %v1270 = vmul.f32 %v1267, 0.015625
        %v1272 = vsel %vm1175, %v1270, 0
        %1274 = vmatprep.subr.mxu0 0.0
        %1275 = vmatpush1.msra.mxu0 %v1171
        %1276 = vmatprep.subr.mxu0 0.0
        %1277 = vmatpush1.msra.mxu0 %v1172
        %1278 = vmatprep.subr.mxu0 0.0
        %1279 = vmatpush1.msra.mxu0 %v1173
        %1280 = vmatprep.subr.mxu0 0.0
        %1281 = vmatpush1.msra.mxu0 %v1174
        %1282 = vmatprep.subr.mxu0 0.0
        %1283 = vmatpush1.msra.mxu0 0.0
        %1284 = vmatprep.subr.mxu0 0.0
        %1285 = vmatpush1.msra.mxu0 0.0
        %1286 = vmatprep.subr.mxu0 0.0
        %1287 = vmatpush1.msra.mxu0 0.0
        %1288 = vmatprep.subr.mxu0 0.0
        %1289 = vmatpush1.msra.mxu0 0.0
        %1290 = vmatprep.subr.mxu0 0.0
        %1291 = vmatpush1.msra.mxu0 0.0
        %1292 = vmatprep.subr.mxu0 0.0
        %1293 = vmatpush1.msra.mxu0 0.0
        %1294 = vmatprep.subr.mxu0 0.0
        %1295 = vmatpush1.msra.mxu0 0.0
        %1296 = vmatprep.subr.mxu0 0.0
        %1297 = vmatpush1.msra.mxu0 0.0
        %1298 = vmatprep.subr.mxu0 0.0
        %1299 = vmatpush1.msra.mxu0 0.0
        %1300 = vmatprep.subr.mxu0 0.0
        %1301 = vmatpush1.msra.mxu0 0.0
        %1302 = vmatprep.subr.mxu0 0.0
        %1303 = vmatpush1.msra.mxu0 0.0
        %1304 = vmatprep.subr.mxu0 0.0
        %1305 = vmatpush1.msra.mxu0 0.0
        %1306 = vmatprep.subr.mxu0 0.0
        %1307 = vmatpush1.msra.mxu0 0.0
        %1308 = vmatprep.subr.mxu0 0.0
        %1309 = vmatpush1.msra.mxu0 0.0
        %1310 = vmatprep.subr.mxu0 0.0
        %1311 = vmatpush1.msra.mxu0 0.0
        %1312 = vmatprep.subr.mxu0 0.0
        %1313 = vmatpush1.msra.mxu0 0.0
        %1314 = vmatprep.subr.mxu0 0.0
        %1315 = vmatpush1.msra.mxu0 0.0
        %1316 = vmatprep.subr.mxu0 0.0
        %1317 = vmatpush1.msra.mxu0 0.0
        %1318 = vmatprep.subr.mxu0 0.0
        %1319 = vmatpush1.msra.mxu0 0.0
        %1320 = vmatprep.subr.mxu0 0.0
        %1321 = vmatpush1.msra.mxu0 0.0
        %1322 = vmatprep.subr.mxu0 0.0
        %1323 = vmatpush1.msra.mxu0 0.0
        %1324 = vmatprep.subr.mxu0 0.0
        %1325 = vmatpush1.msra.mxu0 0.0
        %1326 = vmatprep.subr.mxu0 0.0
        %1327 = vmatpush1.msra.mxu0 0.0
        %1328 = vmatprep.subr.mxu0 0.0
        %1329 = vmatpush1.msra.mxu0 0.0
        %1330 = vmatprep.subr.mxu0 0.0
        %1331 = vmatpush1.msra.mxu0 0.0
        %1332 = vmatprep.subr.mxu0 0.0
        %1333 = vmatpush1.msra.mxu0 0.0
        %1334 = vmatprep.subr.mxu0 0.0
        %1335 = vmatpush1.msra.mxu0 0.0
        %1336 = vmatprep.subr.mxu0 0.0
        %1337 = vmatpush1.msra.mxu0 0.0
        %1338 = vmatprep.mubr.f32.mxu0 0.0
        %1339 = vmatmul.mubr.f32.gmra.mrb[0].mxu0 %v1272
        %v1340 = vpop.f32.mrb[0].mxu0
        %v1341 = vadd.f32 0.0, %v1340
        %v1342 = vpop.f32.mrb[0].mxu0
        %1343 = vdwg.mxu0
        %v1344 = vlaneseq
        %v1345 = vshrl.u32 %v1344, 7
        %v1346 = vsub.s32 0, %v1345
        %v1347 = vrot.slane %v1341, %v1346
        %v1348 = vsub.f32 %v1157, %v1347
        %v1349 = vsub.f32 %v1158, %v1347
        %v1350 = vsub.f32 %v1159, %v1347
        %v1351 = vsub.f32 %v1160, %v1347
        %v1352 = vsub.f32 %v1161, %v1347
        %v1353 = vsub.f32 %v1162, %v1347
        %v1354 = vsub.f32 %v1163, %v1347
        %v1355 = vsub.f32 %v1164, %v1347
        %v1356 = vmul.f32 %v1348, %v1348
        %v1357 = vmul.f32 %v1349, %v1349
        %v1358 = vmul.f32 %v1350, %v1350
        %v1359 = vmul.f32 %v1351, %v1351
        %v1360 = vmul.f32 %v1352, %v1352
        %v1361 = vmul.f32 %v1353, %v1353
        %v1362 = vmul.f32 %v1354, %v1354
        %v1363 = vmul.f32 %v1355, %v1355
        %v1364 = vsel %vm1175, %v1356, 0.0
        %v1365 = vsel %vm1175, %v1357, 0.0
        %v1366 = vadd.f32 %v1364, %v1365
        %v1367 = vsel %vm1175, %v1358, 0.0
        %v1368 = vadd.f32 %v1366, %v1367
        %v1369 = vsel %vm1175, %v1359, 0.0
        %v1370 = vadd.f32 %v1368, %v1369
        %v1371 = vsel %vm1175, %v1360, 0.0
        %v1372 = vadd.f32 %v1370, %v1371
        %v1373 = vsel %vm1175, %v1361, 0.0
        %v1374 = vadd.f32 %v1372, %v1373
        %v1375 = vsel %vm1175, %v1362, 0.0
        %v1376 = vadd.f32 %v1374, %v1375
        %v1377 = vsel %vm1175, %v1363, 0.0
        %v1378 = vadd.f32 %v1376, %v1377
        %v1379 = vrot.slane %v1378, 4
        %v1380 = vadd.f32 %v1378, %v1379
        %v1381 = vrot.slane %v1380, 2
        %v1382 = vadd.f32 %v1380, %v1381
        %v1383 = vrot.slane %v1382, 1
        %v1384 = vadd.f32 %v1382, %v1383
        %v1386 = vsel %vm1175, %v1384, 0
        %1388 = vmatprep.subr.mxu0 0.0
        %1389 = vmatpush1.msra.mxu0 %v1167
        %1390 = vmatprep.subr.mxu0 0.0
        %1391 = vmatpush1.msra.mxu0 %v1168
        %1392 = vmatprep.subr.mxu0 0.0
        %1393 = vmatpush1.msra.mxu0 %v1169
        %1394 = vmatprep.subr.mxu0 0.0
        %1395 = vmatpush1.msra.mxu0 %v1170
        %1396 = vmatprep.subr.mxu0 0.0
        %1397 = vmatpush1.msra.mxu0 0.0
        %1398 = vmatprep.subr.mxu0 0.0
        %1399 = vmatpush1.msra.mxu0 0.0
        %1400 = vmatprep.subr.mxu0 0.0
        %1401 = vmatpush1.msra.mxu0 0.0
        %1402 = vmatprep.subr.mxu0 0.0
        %1403 = vmatpush1.msra.mxu0 0.0
        %1404 = vmatprep.subr.mxu0 0.0
        %1405 = vmatpush1.msra.mxu0 0.0
        %1406 = vmatprep.subr.mxu0 0.0
        %1407 = vmatpush1.msra.mxu0 0.0
        %1408 = vmatprep.subr.mxu0 0.0
        %1409 = vmatpush1.msra.mxu0 0.0
        %1410 = vmatprep.subr.mxu0 0.0
        %1411 = vmatpush1.msra.mxu0 0.0
        %1412 = vmatprep.subr.mxu0 0.0
        %1413 = vmatpush1.msra.mxu0 0.0
        %1414 = vmatprep.subr.mxu0 0.0
        %1415 = vmatpush1.msra.mxu0 0.0
        %1416 = vmatprep.subr.mxu0 0.0
        %1417 = vmatpush1.msra.mxu0 0.0
        %1418 = vmatprep.subr.mxu0 0.0
        %1419 = vmatpush1.msra.mxu0 0.0
        %1420 = vmatprep.subr.mxu0 0.0
        %1421 = vmatpush1.msra.mxu0 0.0
        %1422 = vmatprep.subr.mxu0 0.0
        %1423 = vmatpush1.msra.mxu0 0.0
        %1424 = vmatprep.subr.mxu0 0.0
        %1425 = vmatpush1.msra.mxu0 0.0
        %1426 = vmatprep.subr.mxu0 0.0
        %1427 = vmatpush1.msra.mxu0 0.0
        %1428 = vmatprep.subr.mxu0 0.0
        %1429 = vmatpush1.msra.mxu0 0.0
        %1430 = vmatprep.subr.mxu0 0.0
        %1431 = vmatpush1.msra.mxu0 0.0
        %1432 = vmatprep.subr.mxu0 0.0
        %1433 = vmatpush1.msra.mxu0 0.0
        %1434 = vmatprep.subr.mxu0 0.0
        %1435 = vmatpush1.msra.mxu0 0.0
        %1436 = vmatprep.subr.mxu0 0.0
        %1437 = vmatpush1.msra.mxu0 0.0
        %1438 = vmatprep.subr.mxu0 0.0
        %1439 = vmatpush1.msra.mxu0 0.0
        %1440 = vmatprep.subr.mxu0 0.0
        %1441 = vmatpush1.msra.mxu0 0.0
        %1442 = vmatprep.subr.mxu0 0.0
        %1443 = vmatpush1.msra.mxu0 0.0
        %1444 = vmatprep.subr.mxu0 0.0
        %1445 = vmatpush1.msra.mxu0 0.0
        %1446 = vmatprep.subr.mxu0 0.0
        %1447 = vmatpush1.msra.mxu0 0.0
        %1448 = vmatprep.subr.mxu0 0.0
        %1449 = vmatpush1.msra.mxu0 0.0
        %1450 = vmatprep.subr.mxu0 0.0
        %1451 = vmatpush1.msra.mxu0 0.0
        %1452 = vmatprep.mubr.f32.mxu0 0.0
        %1453 = vmatmul.mubr.f32.gmra.mrb[0].mxu0 %v1386
        %v1454 = vpop.f32.mrb[0].mxu0
        %v1455 = vadd.f32 0.0, %v1454
        %v1456 = vpop.f32.mrb[0].mxu0
        %1457 = vdwg.mxu0
        %v1458 = vmul.f32 %v1455, 0.015625
        %v1460 = vsel %vm1175, %v1458, 0
        %1462 = vmatprep.subr.mxu0 0.0
        %1463 = vmatpush1.msra.mxu0 %v1171
        %1464 = vmatprep.subr.mxu0 0.0
        %1465 = vmatpush1.msra.mxu0 %v1172
        %1466 = vmatprep.subr.mxu0 0.0
        %1467 = vmatpush1.msra.mxu0 %v1173
        %1468 = vmatprep.subr.mxu0 0.0
        %1469 = vmatpush1.msra.mxu0 %v1174
        %1470 = vmatprep.subr.mxu0 0.0
        %1471 = vmatpush1.msra.mxu0 0.0
        %1472 = vmatprep.subr.mxu0 0.0
        %1473 = vmatpush1.msra.mxu0 0.0
        %1474 = vmatprep.subr.mxu0 0.0
        %1475 = vmatpush1.msra.mxu0 0.0
        %1476 = vmatprep.subr.mxu0 0.0
        %1477 = vmatpush1.msra.mxu0 0.0
        %1478 = vmatprep.subr.mxu0 0.0
        %1479 = vmatpush1.msra.mxu0 0.0
        %1480 = vmatprep.subr.mxu0 0.0
        %1481 = vmatpush1.msra.mxu0 0.0
        %1482 = vmatprep.subr.mxu0 0.0
        %1483 = vmatpush1.msra.mxu0 0.0
        %1484 = vmatprep.subr.mxu0 0.0
        %1485 = vmatpush1.msra.mxu0 0.0
        %1486 = vmatprep.subr.mxu0 0.0
        %1487 = vmatpush1.msra.mxu0 0.0
        %1488 = vmatprep.subr.mxu0 0.0
        %1489 = vmatpush1.msra.mxu0 0.0
        %1490 = vmatprep.subr.mxu0 0.0
        %1491 = vmatpush1.msra.mxu0 0.0
        %1492 = vmatprep.subr.mxu0 0.0
        %1493 = vmatpush1.msra.mxu0 0.0
        %1494 = vmatprep.subr.mxu0 0.0
        %1495 = vmatpush1.msra.mxu0 0.0
        %1496 = vmatprep.subr.mxu0 0.0
        %1497 = vmatpush1.msra.mxu0 0.0
        %1498 = vmatprep.subr.mxu0 0.0
        %1499 = vmatpush1.msra.mxu0 0.0
        %1500 = vmatprep.subr.mxu0 0.0
        %1501 = vmatpush1.msra.mxu0 0.0
        %1502 = vmatprep.subr.mxu0 0.0
        %1503 = vmatpush1.msra.mxu0 0.0
        %1504 = vmatprep.subr.mxu0 0.0
        %1505 = vmatpush1.msra.mxu0 0.0
        %1506 = vmatprep.subr.mxu0 0.0
        %1507 = vmatpush1.msra.mxu0 0.0
        %1508 = vmatprep.subr.mxu0 0.0
        %1509 = vmatpush1.msra.mxu0 0.0
        %1510 = vmatprep.subr.mxu0 0.0
        %1511 = vmatpush1.msra.mxu0 0.0
        %1512 = vmatprep.subr.mxu0 0.0
        %1513 = vmatpush1.msra.mxu0 0.0
        %1514 = vmatprep.subr.mxu0 0.0
        %1515 = vmatpush1.msra.mxu0 0.0
        %1516 = vmatprep.subr.mxu0 0.0
        %1517 = vmatpush1.msra.mxu0 0.0
        %1518 = vmatprep.subr.mxu0 0.0
        %1519 = vmatpush1.msra.mxu0 0.0
        %1520 = vmatprep.subr.mxu0 0.0
        %1521 = vmatpush1.msra.mxu0 0.0
        %1522 = vmatprep.subr.mxu0 0.0
        %1523 = vmatpush1.msra.mxu0 0.0
        %1524 = vmatprep.subr.mxu0 0.0
        %1525 = vmatpush1.msra.mxu0 0.0
        %1526 = vmatprep.mubr.f32.mxu0 0.0
        %1527 = vmatmul.mubr.f32.gmra.mrb[0].mxu0 %v1460
        %v1528 = vpop.f32.mrb[0].mxu0
        %v1529 = vadd.f32 1e-06, %v1528
        %v1530 = vpop.f32.mrb[0].mxu0
        %1531 = vdwg.mxu0
        %v1532 = vrsqrt.pop %v1529
        %v1533 = vlaneseq
        %v1534 = vshrl.u32 %v1533, 7
        %v1535 = vsub.s32 0, %v1534
        %v1536 = vrot.slane %v1532, %v1535
        %v1537 = vmul.f32 %v1348, %v1536
        %v1538 = vmul.f32 %v1349, %v1536
        %v1539 = vmul.f32 %v1350, %v1536
        %v1540 = vmul.f32 %v1351, %v1536
        %v1541 = vmul.f32 %v1352, %v1536
        %v1542 = vmul.f32 %v1353, %v1536
        %v1543 = vmul.f32 %v1354, %v1536
        %v1544 = vmul.f32 %v1355, %v1536
        %v1546 = vlaneseq
        %v1547 = vshrl.u32 %v1546, 7
        %v1548 = vsub.s32 0, %v1547
        %v1549 = vrot.slane %v1165, %v1548
        %v1551 = vmul.f32 %v1537, %v1549
        %v1552 = vmul.f32 %v1538, %v1549
        %v1553 = vmul.f32 %v1539, %v1549
        %v1554 = vmul.f32 %v1540, %v1549
        %v1555 = vmul.f32 %v1541, %v1549
        %v1556 = vmul.f32 %v1542, %v1549
        %v1557 = vmul.f32 %v1543, %v1549
        %v1558 = vmul.f32 %v1544, %v1549
        %v1560 = vlaneseq
        %v1561 = vshrl.u32 %v1560, 7
        %v1562 = vsub.s32 0, %v1561
        %v1563 = vrot.slane %v1166, %v1562
        %v1565 = vadd.f32 %v1551, %v1563
        %v1566 = vadd.f32 %v1552, %v1563
        %v1567 = vadd.f32 %v1553, %v1563
        %v1568 = vadd.f32 %v1554, %v1563
        %v1569 = vadd.f32 %v1555, %v1563
        %v1570 = vadd.f32 %v1556, %v1563
        %v1571 = vadd.f32 %v1557, %v1563
        %v1572 = vadd.f32 %v1558, %v1563
        %v1573 = vpack.c.bf16 %v1566, %v1565
        %v1574 = vpack.c.bf16 %v1568, %v1567
        %v1575 = vpack.c.bf16 %v1570, %v1569
        %v1576 = vpack.c.bf16 %v1572, %v1571
        %v1577 = vld [vmem:[%s11] sm:$0xf]
        %v1578 = vld [vmem:[%s11 + $0x4] sm:$0xf]
        %v1579 = vld [vmem:[%s11 + $0x8] sm:$0xf]
        %v1580 = vld [vmem:[%s11 + $0xc] sm:$0xf]
        %v1581 = vld [vmem:[%s13] sm:$0x1]
        %v1583 = vlaneseq
        %v1584 = vshrl.u32 %v1583, 7
        %v1585 = vsub.s32 0, %v1584
        %v1586 = vrot.slane %v1581, %v1585
        %v1592 = vunpack.c.l.b16 %v1577
        %v1593 = vunpack.c.l.b16 %v1578
        %v1594 = vunpack.c.l.b16 %v1579
        %v1595 = vunpack.c.l.b16 %v1580
        %v1596 = vpack.c.b16 %v1593, %v1592
        %v1597 = vpack.c.b16 %v1595, %v1594
        %v1601 = vsel %vm1175, %v1573, 0
        %v1604 = vsel %vm1175, %v1574, 0
        %v1607 = vsel %vm1175, %v1575, 0
        %v1610 = vsel %vm1175, %v1576, 0
        %1612 = vmatprep.subr.bf16.mxu0 0
        %1613 = vmatpush1.bf16.msra.mxu0 %v1596
        %1614 = vmatprep.subr.bf16.mxu0 0
        %1615 = vmatpush1.bf16.msra.mxu0 %v1597
        %1616 = vmatprep.subr.bf16.mxu0 0
        %1617 = vmatpush1.bf16.msra.mxu0 0
        %1618 = vmatprep.subr.bf16.mxu0 0
        %1619 = vmatpush1.bf16.msra.mxu0 0
        %1620 = vmatprep.subr.bf16.mxu0 0
        %1621 = vmatpush1.bf16.msra.mxu0 0
        %1622 = vmatprep.subr.bf16.mxu0 0
        %1623 = vmatpush1.bf16.msra.mxu0 0
        %1624 = vmatprep.subr.bf16.mxu0 0
        %1625 = vmatpush1.bf16.msra.mxu0 0
        %1626 = vmatprep.subr.bf16.mxu0 0
        %1627 = vmatpush1.bf16.msra.mxu0 0
        %1628 = vmatprep.subr.bf16.mxu0 0
        %1629 = vmatpush1.bf16.msra.mxu0 0
        %1630 = vmatprep.subr.bf16.mxu0 0
        %1631 = vmatpush1.bf16.msra.mxu0 0
        %1632 = vmatprep.subr.bf16.mxu0 0
        %1633 = vmatpush1.bf16.msra.mxu0 0
        %1634 = vmatprep.subr.bf16.mxu0 0
        %1635 = vmatpush1.bf16.msra.mxu0 0
        %1636 = vmatprep.subr.bf16.mxu0 0
        %1637 = vmatpush1.bf16.msra.mxu0 0
        %1638 = vmatprep.subr.bf16.mxu0 0
        %1639 = vmatpush1.bf16.msra.mxu0 0
        %1640 = vmatprep.subr.bf16.mxu0 0
        %1641 = vmatpush1.bf16.msra.mxu0 0
        %1642 = vmatprep.subr.bf16.mxu0 0
        %1643 = vmatpush1.bf16.msra.mxu0 0
        %1644 = vmatprep.mubr.bf16.mxu0 0
        %1645 = vmatmul.mubr.bf16.gmra.mrb[0].mxu0 %v1601
        %v1646 = vpop.f32.mrb[0].mxu0
        %v1647 = vadd.f32 %v1586, %v1646
        %v1648 = vpop.f32.mrb[0].mxu0
        %v1649 = vpop.f32.mrb[0].mxu0
        %v1650 = vadd.f32 %v1586, %v1649
        %v1651 = vpop.f32.mrb[0].mxu0
        %1652 = vmatprep.mubr.bf16.mxu0 0
        %1653 = vmatmul.mubr.bf16.gmra.mrb[0].mxu0 %v1604
        %v1654 = vpop.f32.mrb[0].mxu0
        %v1655 = vadd.f32 %v1586, %v1654
        %v1656 = vpop.f32.mrb[0].mxu0
        %v1657 = vpop.f32.mrb[0].mxu0
        %v1658 = vadd.f32 %v1586, %v1657
        %v1659 = vpop.f32.mrb[0].mxu0
        %1660 = vmatprep.mubr.bf16.mxu0 0
        %1661 = vmatmul.mubr.bf16.gmra.mrb[0].mxu0 %v1607
        %v1662 = vpop.f32.mrb[0].mxu0
        %v1663 = vadd.f32 %v1586, %v1662
        %v1664 = vpop.f32.mrb[0].mxu0
        %v1665 = vpop.f32.mrb[0].mxu0
        %v1666 = vadd.f32 %v1586, %v1665
        %v1667 = vpop.f32.mrb[0].mxu0
        %1668 = vmatprep.mubr.bf16.mxu0 0
        %1669 = vmatmul.mubr.bf16.gmra.mrb[0].mxu0 %v1610
        %v1670 = vpop.f32.mrb[0].mxu0
        %v1671 = vadd.f32 %v1586, %v1670
        %v1672 = vpop.f32.mrb[0].mxu0
        %v1673 = vpop.f32.mrb[0].mxu0
        %v1674 = vadd.f32 %v1586, %v1673
        %v1675 = vpop.f32.mrb[0].mxu0
        %1676 = vdwg.mxu0
        %v1677 = vld [vmem:[%s15] sm:$0x1]
        %v1678 = vld [vmem:[%s17] sm:$0x1]
        %v1679 = vsel %vm1175, %v1647, 0.0
        %1680 = vadd.xlane.f32.xlu0 %v1679
        %v1681 = vpop.xlane.xlu0 %1680
        %v1682 = vsel %vm1175, %v1650, 0.0
        %1683 = vadd.xlane.f32.xlu0 %v1682
        %v1684 = vpop.xlane.xlu0 %1683
        %v1685 = vsel %vm1175, %v1655, 0.0
        %1686 = vadd.xlane.f32.xlu0 %v1685
        %v1687 = vpop.xlane.xlu0 %1686
        %v1688 = vsel %vm1175, %v1658, 0.0
        %1689 = vadd.xlane.f32.xlu0 %v1688
        %v1690 = vpop.xlane.xlu0 %1689
        %v1691 = vsel %vm1175, %v1663, 0.0
        %1692 = vadd.xlane.f32.xlu0 %v1691
        %v1693 = vpop.xlane.xlu0 %1692
        %v1694 = vsel %vm1175, %v1666, 0.0
        %1695 = vadd.xlane.f32.xlu0 %v1694
        %v1696 = vpop.xlane.xlu0 %1695
        %v1697 = vsel %vm1175, %v1671, 0.0
        %1698 = vadd.xlane.f32.xlu0 %v1697
        %v1699 = vpop.xlane.xlu0 %1698
        %v1700 = vsel %vm1175, %v1674, 0.0
        %1701 = vadd.xlane.f32.xlu0 %v1700
        %v1702 = vpop.xlane.xlu0 %1701
        %v1703 = vrcp.pop 32.0
        %v1704 = vmul.f32 %v1681, %v1703
        %v1705 = vmul.f32 %v1684, %v1703
        %v1706 = vmul.f32 %v1687, %v1703
        %v1707 = vmul.f32 %v1690, %v1703
        %v1708 = vmul.f32 %v1693, %v1703
        %v1709 = vmul.f32 %v1696, %v1703
        %v1710 = vmul.f32 %v1699, %v1703
        %v1711 = vmul.f32 %v1702, %v1703
        %v1712 = vsub.f32 %v1647, %v1704
        %v1713 = vsub.f32 %v1650, %v1705
        %v1714 = vsub.f32 %v1655, %v1706
        %v1715 = vsub.f32 %v1658, %v1707
        %v1716 = vsub.f32 %v1663, %v1708
        %v1717 = vsub.f32 %v1666, %v1709
        %v1718 = vsub.f32 %v1671, %v1710
        %v1719 = vsub.f32 %v1674, %v1711
        %v1720 = vmul.f32 %v1712, %v1712
        %v1721 = vmul.f32 %v1713, %v1713
        %v1722 = vmul.f32 %v1714, %v1714
        %v1723 = vmul.f32 %v1715, %v1715
        %v1724 = vmul.f32 %v1716, %v1716
        %v1725 = vmul.f32 %v1717, %v1717
        %v1726 = vmul.f32 %v1718, %v1718
        %v1727 = vmul.f32 %v1719, %v1719
        %v1728 = vsel %vm1175, %v1720, 0.0
        %1729 = vadd.xlane.f32.xlu0 %v1728
        %v1730 = vpop.xlane.xlu0 %1729
        %v1731 = vsel %vm1175, %v1721, 0.0
        %1732 = vadd.xlane.f32.xlu0 %v1731
        %v1733 = vpop.xlane.xlu0 %1732
        %v1734 = vsel %vm1175, %v1722, 0.0
        %1735 = vadd.xlane.f32.xlu0 %v1734
        %v1736 = vpop.xlane.xlu0 %1735
        %v1737 = vsel %vm1175, %v1723, 0.0
        %1738 = vadd.xlane.f32.xlu0 %v1737
        %v1739 = vpop.xlane.xlu0 %1738
        %v1740 = vsel %vm1175, %v1724, 0.0
        %1741 = vadd.xlane.f32.xlu0 %v1740
        %v1742 = vpop.xlane.xlu0 %1741
        %v1743 = vsel %vm1175, %v1725, 0.0
        %1744 = vadd.xlane.f32.xlu0 %v1743
        %v1745 = vpop.xlane.xlu0 %1744
        %v1746 = vsel %vm1175, %v1726, 0.0
        %1747 = vadd.xlane.f32.xlu0 %v1746
        %v1748 = vpop.xlane.xlu0 %1747
        %v1749 = vsel %vm1175, %v1727, 0.0
        %1750 = vadd.xlane.f32.xlu0 %v1749
        %v1751 = vpop.xlane.xlu0 %1750
        %v1752 = vmul.f32 %v1730, %v1703
        %v1753 = vmul.f32 %v1733, %v1703
        %v1754 = vmul.f32 %v1736, %v1703
        %v1755 = vmul.f32 %v1739, %v1703
        %v1756 = vmul.f32 %v1742, %v1703
        %v1757 = vmul.f32 %v1745, %v1703
        %v1758 = vmul.f32 %v1748, %v1703
        %v1759 = vmul.f32 %v1751, %v1703
        %v1760 = vadd.f32 %v1752, 1e-05
        %v1761 = vadd.f32 %v1753, 1e-05
        %v1762 = vadd.f32 %v1754, 1e-05
        %v1763 = vadd.f32 %v1755, 1e-05
        %v1764 = vadd.f32 %v1756, 1e-05
        %v1765 = vadd.f32 %v1757, 1e-05
        %v1766 = vadd.f32 %v1758, 1e-05
        %v1767 = vadd.f32 %v1759, 1e-05
        %v1768 = vrsqrt.pop %v1760
        %v1769 = vrsqrt.pop %v1761
        %v1770 = vrsqrt.pop %v1762
        %v1771 = vrsqrt.pop %v1763
        %v1772 = vrsqrt.pop %v1764
        %v1773 = vrsqrt.pop %v1765
        %v1774 = vrsqrt.pop %v1766
        %v1775 = vrsqrt.pop %v1767
        %v1776 = vmul.f32 %v1712, %v1768
        %v1777 = vmul.f32 %v1713, %v1769
        %v1778 = vmul.f32 %v1714, %v1770
        %v1779 = vmul.f32 %v1715, %v1771
        %v1780 = vmul.f32 %v1716, %v1772
        %v1781 = vmul.f32 %v1717, %v1773
        %v1782 = vmul.f32 %v1718, %v1774
        %v1783 = vmul.f32 %v1719, %v1775
        %v1785 = vlaneseq
        %v1786 = vshrl.u32 %v1785, 7
        %v1787 = vsub.s32 0, %v1786
        %v1788 = vrot.slane %v1677, %v1787
        %v1790 = vmul.f32 %v1776, %v1788
        %v1791 = vmul.f32 %v1777, %v1788
        %v1792 = vmul.f32 %v1778, %v1788
        %v1793 = vmul.f32 %v1779, %v1788
        %v1794 = vmul.f32 %v1780, %v1788
        %v1795 = vmul.f32 %v1781, %v1788
        %v1796 = vmul.f32 %v1782, %v1788
        %v1797 = vmul.f32 %v1783, %v1788
        %v1799 = vlaneseq
        %v1800 = vshrl.u32 %v1799, 7
        %v1801 = vsub.s32 0, %v1800
        %v1802 = vrot.slane %v1678, %v1801
        %v1804 = vadd.f32 %v1790, %v1802
        %v1805 = vadd.f32 %v1791, %v1802
        %v1806 = vadd.f32 %v1792, %v1802
        %v1807 = vadd.f32 %v1793, %v1802
        %v1808 = vadd.f32 %v1794, %v1802
        %v1809 = vadd.f32 %v1795, %v1802
        %v1810 = vadd.f32 %v1796, %v1802
        %v1811 = vadd.f32 %v1797, %v1802
        %v1812 = vld [vmem:[#allocation11] sm:$0x1]
        %v1813 = vpack.c.bf16 %v1805, %v1804
        %v1814 = vpack.c.bf16 %v1807, %v1806
        %v1815 = vpack.c.bf16 %v1809, %v1808
        %v1816 = vpack.c.bf16 %v1811, %v1810
        loop: start=0, step=1, limit=2
        $region201: #{spatial_transformer_forward.1} parent=143 // loop_pre_header
          _
        $region202: #{spatial_transformer_forward.1} parent=143 // loop_header
          %s1818 = sphi 0, %s1822
          %p1819 = scmp.ge.s32.totalorder %s1818, 2
          %v1823 = vphi 0.0, %v2438
          %v1824 = vphi 0.0, %v2439
          %v1825 = vphi 0.0, %v2440
          %v1826 = vphi 0.0, %v2441
          %v1827 = vphi 0.0, %v2442
          %v1828 = vphi 0.0, %v2443
          %v1829 = vphi 0.0, %v2444
          %v1830 = vphi 0.0, %v2445
        $region203: #{spatial_transformer_forward.1} parent=143 // loop_header_branch
          %1821 = sbr.rel (%p1819) target = $region207
        $region204: #{spatial_transformer_forward.1} parent=143 // loop_body
          %s1831 = smul.u32 %s1818, 2
          %s1832 = smul.addr %s1831, 4
          %s1833 = scalar_lea.vmem [#allocation5], %s1832
          %v1834 = vld [vmem:[%s1833] sm:$0xf]
          %v1835 = vld [vmem:[%s1833 + $0x4] sm:$0xf]
          %s1836 = smul.addr %s1831, 4
          %s1837 = scalar_lea.vmem [#allocation7], %s1836
          %v1838 = vld [vmem:[%s1837] sm:$0xf]
          %v1839 = vld [vmem:[%s1837 + $0x4] sm:$0xf]
          %s1840 = smul.addr %s1831, 4
          %s1841 = scalar_lea.vmem [#allocation8], %s1840
          %v1842 = vld [vmem:[%s1841] sm:$0xf]
          %v1843 = vld [vmem:[%s1841 + $0x4] sm:$0xf]
          %v1846 = vunpack.c.l.b16 %v1834
          %v1847 = vunpack.c.l.b16 %v1835
          %v1848 = vpack.c.b16 %v1847, %v1846
          %v1850 = vsel %vm1175, %v1813, 0
          %v1853 = vsel %vm1175, %v1814, 0
          %v1856 = vsel %vm1175, %v1815, 0
          %v1859 = vsel %vm1175, %v1816, 0
          %v1862 = vsel %vm1175, %v1848, 0
          %1864 = vmatprep.subr.bf16.mxu0 0
          %1865 = vmatpush1.bf16.xpose.msra.mxu0 %v1862
          %1866 = vmatprep.subr.bf16.mxu0 0
          %1867 = vmatpush1.bf16.xpose.msra.mxu0 0
          %1868 = vmatprep.subr.bf16.mxu0 0
          %1869 = vmatpush1.bf16.xpose.msra.mxu0 0
          %1870 = vmatprep.subr.bf16.mxu0 0
          %1871 = vmatpush1.bf16.xpose.msra.mxu0 0
          %1872 = vmatprep.subr.bf16.mxu0 0
          %1873 = vmatpush1.bf16.xpose.msra.mxu0 0
          %1874 = vmatprep.subr.bf16.mxu0 0
          %1875 = vmatpush1.bf16.xpose.msra.mxu0 0
          %1876 = vmatprep.subr.bf16.mxu0 0
          %1877 = vmatpush1.bf16.xpose.msra.mxu0 0
          %1878 = vmatprep.subr.bf16.mxu0 0
          %1879 = vmatpush1.bf16.xpose.msra.mxu0 0
          %1880 = vmatprep.subr.bf16.mxu0 0
          %1881 = vmatpush1.bf16.xpose.msra.mxu0 0
          %1882 = vmatprep.subr.bf16.mxu0 0
          %1883 = vmatpush1.bf16.xpose.msra.mxu0 0
          %1884 = vmatprep.subr.bf16.mxu0 0
          %1885 = vmatpush1.bf16.xpose.msra.mxu0 0
          %1886 = vmatprep.subr.bf16.mxu0 0
          %1887 = vmatpush1.bf16.xpose.msra.mxu0 0
          %1888 = vmatprep.subr.bf16.mxu0 0
          %1889 = vmatpush1.bf16.xpose.msra.mxu0 0
          %1890 = vmatprep.subr.bf16.mxu0 0
          %1891 = vmatpush1.bf16.xpose.msra.mxu0 0
          %1892 = vmatprep.subr.bf16.mxu0 0
          %1893 = vmatpush1.bf16.xpose.msra.mxu0 0
          %1894 = vmatprep.subr.bf16.mxu0 0
          %1895 = vmatpush1.bf16.xpose.msra.mxu0 0
          %1896 = vmatprep.mubr.bf16.mxu0 0
          %1897 = vmatmul.mubr.bf16.gmra.mrb[0].mxu0 %v1850
          %v1898 = vpop.f32.mrb[0].mxu0
          %v1899 = vadd.f32 0.0, %v1898
          %v1900 = vpop.f32.mrb[0].mxu0
          %v1901 = vpop.f32.mrb[0].mxu0
          %v1902 = vadd.f32 0.0, %v1901
          %v1903 = vpop.f32.mrb[0].mxu0
          %1904 = vmatprep.mubr.bf16.mxu0 0
          %1905 = vmatmul.mubr.bf16.gmra.mrb[0].mxu0 %v1853
          %v1906 = vpop.f32.mrb[0].mxu0
          %v1907 = vadd.f32 0.0, %v1906
          %v1908 = vpop.f32.mrb[0].mxu0
          %v1909 = vpop.f32.mrb[0].mxu0
          %v1910 = vadd.f32 0.0, %v1909
          %v1911 = vpop.f32.mrb[0].mxu0
          %1912 = vmatprep.mubr.bf16.mxu0 0
          %1913 = vmatmul.mubr.bf16.gmra.mrb[0].mxu0 %v1856
          %v1914 = vpop.f32.mrb[0].mxu0
          %v1915 = vadd.f32 0.0, %v1914
          %v1916 = vpop.f32.mrb[0].mxu0
          %v1917 = vpop.f32.mrb[0].mxu0
          %v1918 = vadd.f32 0.0, %v1917
          %v1919 = vpop.f32.mrb[0].mxu0
          %1920 = vmatprep.mubr.bf16.mxu0 0
          %1921 = vmatmul.mubr.bf16.gmra.mrb[0].mxu0 %v1859
          %v1922 = vpop.f32.mrb[0].mxu0
          %v1923 = vadd.f32 0.0, %v1922
          %v1924 = vpop.f32.mrb[0].mxu0
          %v1925 = vpop.f32.mrb[0].mxu0
          %v1926 = vadd.f32 0.0, %v1925
          %v1927 = vpop.f32.mrb[0].mxu0
          %1928 = vdwg.mxu0
          %v1929 = vpack.c.bf16 %v1902, %v1899
          %v1930 = vpack.c.bf16 %v1910, %v1907
          %v1931 = vpack.c.bf16 %v1918, %v1915
          %v1932 = vpack.c.bf16 %v1926, %v1923
          %v1935 = vunpack.c.l.b16 %v1838
          %v1936 = vunpack.c.l.b16 %v1839
          %v1937 = vpack.c.b16 %v1936, %v1935
          %v1939 = vsel %vm1175, %v1937, 0
          %1941 = vmatprep.subr.bf16.mxu0 0
          %1942 = vmatpush1.bf16.xpose.msra.mxu0 %v1939
          %1943 = vmatprep.subr.bf16.mxu0 0
          %1944 = vmatpush1.bf16.xpose.msra.mxu0 0
          %1945 = vmatprep.subr.bf16.mxu0 0
          %1946 = vmatpush1.bf16.xpose.msra.mxu0 0
          %1947 = vmatprep.subr.bf16.mxu0 0
          %1948 = vmatpush1.bf16.xpose.msra.mxu0 0
          %1949 = vmatprep.subr.bf16.mxu0 0
          %1950 = vmatpush1.bf16.xpose.msra.mxu0 0
          %1951 = vmatprep.subr.bf16.mxu0 0
          %1952 = vmatpush1.bf16.xpose.msra.mxu0 0
          %1953 = vmatprep.subr.bf16.mxu0 0
          %1954 = vmatpush1.bf16.xpose.msra.mxu0 0
          %1955 = vmatprep.subr.bf16.mxu0 0
          %1956 = vmatpush1.bf16.xpose.msra.mxu0 0
          %1957 = vmatprep.subr.bf16.mxu0 0
          %1958 = vmatpush1.bf16.xpose.msra.mxu0 0
          %1959 = vmatprep.subr.bf16.mxu0 0
          %1960 = vmatpush1.bf16.xpose.msra.mxu0 0
          %1961 = vmatprep.subr.bf16.mxu0 0
          %1962 = vmatpush1.bf16.xpose.msra.mxu0 0
          %1963 = vmatprep.subr.bf16.mxu0 0
          %1964 = vmatpush1.bf16.xpose.msra.mxu0 0
          %1965 = vmatprep.subr.bf16.mxu0 0
          %1966 = vmatpush1.bf16.xpose.msra.mxu0 0
          %1967 = vmatprep.subr.bf16.mxu0 0
          %1968 = vmatpush1.bf16.xpose.msra.mxu0 0
          %1969 = vmatprep.subr.bf16.mxu0 0
          %1970 = vmatpush1.bf16.xpose.msra.mxu0 0
          %1971 = vmatprep.subr.bf16.mxu0 0
          %1972 = vmatpush1.bf16.xpose.msra.mxu0 0
          %1973 = vmatprep.mubr.bf16.mxu0 0
          %1974 = vmatmul.mubr.bf16.gmra.mrb[0].mxu0 %v1850
          %v1975 = vpop.f32.mrb[0].mxu0
          %v1976 = vadd.f32 0.0, %v1975
          %v1977 = vpop.f32.mrb[0].mxu0
          %v1978 = vpop.f32.mrb[0].mxu0
          %v1979 = vadd.f32 0.0, %v1978
          %v1980 = vpop.f32.mrb[0].mxu0
          %1981 = vmatprep.mubr.bf16.mxu0 0
          %1982 = vmatmul.mubr.bf16.gmra.mrb[0].mxu0 %v1853
          %v1983 = vpop.f32.mrb[0].mxu0
          %v1984 = vadd.f32 0.0, %v1983
          %v1985 = vpop.f32.mrb[0].mxu0
          %v1986 = vpop.f32.mrb[0].mxu0
          %v1987 = vadd.f32 0.0, %v1986
          %v1988 = vpop.f32.mrb[0].mxu0
          %1989 = vmatprep.mubr.bf16.mxu0 0
          %1990 = vmatmul.mubr.bf16.gmra.mrb[0].mxu0 %v1856
          %v1991 = vpop.f32.mrb[0].mxu0
          %v1992 = vadd.f32 0.0, %v1991
          %v1993 = vpop.f32.mrb[0].mxu0
          %v1994 = vpop.f32.mrb[0].mxu0
          %v1995 = vadd.f32 0.0, %v1994
          %v1996 = vpop.f32.mrb[0].mxu0
          %1997 = vmatprep.mubr.bf16.mxu0 0
          %1998 = vmatmul.mubr.bf16.gmra.mrb[0].mxu0 %v1859
          %v1999 = vpop.f32.mrb[0].mxu0
          %v2000 = vadd.f32 0.0, %v1999
          %v2001 = vpop.f32.mrb[0].mxu0
          %v2002 = vpop.f32.mrb[0].mxu0
          %v2003 = vadd.f32 0.0, %v2002
          %v2004 = vpop.f32.mrb[0].mxu0
          %2005 = vdwg.mxu0
          %v2006 = vpack.c.bf16 %v1979, %v1976
          %v2007 = vpack.c.bf16 %v1987, %v1984
          %v2008 = vpack.c.bf16 %v1995, %v1992
          %v2009 = vpack.c.bf16 %v2003, %v2000
          %v2012 = vunpack.c.l.b16 %v1842
          %v2013 = vunpack.c.l.b16 %v1843
          %v2014 = vpack.c.b16 %v2013, %v2012
          %v2016 = vsel %vm1175, %v2014, 0
          %2018 = vmatprep.subr.bf16.mxu0 0
          %2019 = vmatpush1.bf16.xpose.msra.mxu0 %v2016
          %2020 = vmatprep.subr.bf16.mxu0 0
          %2021 = vmatpush1.bf16.xpose.msra.mxu0 0
          %2022 = vmatprep.subr.bf16.mxu0 0
          %2023 = vmatpush1.bf16.xpose.msra.mxu0 0
          %2024 = vmatprep.subr.bf16.mxu0 0
          %2025 = vmatpush1.bf16.xpose.msra.mxu0 0
          %2026 = vmatprep.subr.bf16.mxu0 0
          %2027 = vmatpush1.bf16.xpose.msra.mxu0 0
          %2028 = vmatprep.subr.bf16.mxu0 0
          %2029 = vmatpush1.bf16.xpose.msra.mxu0 0
          %2030 = vmatprep.subr.bf16.mxu0 0
          %2031 = vmatpush1.bf16.xpose.msra.mxu0 0
          %2032 = vmatprep.subr.bf16.mxu0 0
          %2033 = vmatpush1.bf16.xpose.msra.mxu0 0
          %2034 = vmatprep.subr.bf16.mxu0 0
          %2035 = vmatpush1.bf16.xpose.msra.mxu0 0
          %2036 = vmatprep.subr.bf16.mxu0 0
          %2037 = vmatpush1.bf16.xpose.msra.mxu0 0
          %2038 = vmatprep.subr.bf16.mxu0 0
          %2039 = vmatpush1.bf16.xpose.msra.mxu0 0
          %2040 = vmatprep.subr.bf16.mxu0 0
          %2041 = vmatpush1.bf16.xpose.msra.mxu0 0
          %2042 = vmatprep.subr.bf16.mxu0 0
          %2043 = vmatpush1.bf16.xpose.msra.mxu0 0
          %2044 = vmatprep.subr.bf16.mxu0 0
          %2045 = vmatpush1.bf16.xpose.msra.mxu0 0
          %2046 = vmatprep.subr.bf16.mxu0 0
          %2047 = vmatpush1.bf16.xpose.msra.mxu0 0
          %2048 = vmatprep.subr.bf16.mxu0 0
          %2049 = vmatpush1.bf16.xpose.msra.mxu0 0
          %2050 = vmatprep.mubr.bf16.mxu0 0
          %2051 = vmatmul.mubr.bf16.gmra.mrb[0].mxu0 %v1850
          %v2052 = vpop.f32.mrb[0].mxu0
          %v2053 = vadd.f32 0.0, %v2052
          %v2054 = vpop.f32.mrb[0].mxu0
          %v2055 = vpop.f32.mrb[0].mxu0
          %v2056 = vadd.f32 0.0, %v2055
          %v2057 = vpop.f32.mrb[0].mxu0
          %2058 = vmatprep.mubr.bf16.mxu0 0
          %2059 = vmatmul.mubr.bf16.gmra.mrb[0].mxu0 %v1853
          %v2060 = vpop.f32.mrb[0].mxu0
          %v2061 = vadd.f32 0.0, %v2060
          %v2062 = vpop.f32.mrb[0].mxu0
          %v2063 = vpop.f32.mrb[0].mxu0
          %v2064 = vadd.f32 0.0, %v2063
          %v2065 = vpop.f32.mrb[0].mxu0
          %2066 = vmatprep.mubr.bf16.mxu0 0
          %2067 = vmatmul.mubr.bf16.gmra.mrb[0].mxu0 %v1856
          %v2068 = vpop.f32.mrb[0].mxu0
          %v2069 = vadd.f32 0.0, %v2068
          %v2070 = vpop.f32.mrb[0].mxu0
          %v2071 = vpop.f32.mrb[0].mxu0
          %v2072 = vadd.f32 0.0, %v2071
          %v2073 = vpop.f32.mrb[0].mxu0
          %2074 = vmatprep.mubr.bf16.mxu0 0
          %2075 = vmatmul.mubr.bf16.gmra.mrb[0].mxu0 %v1859
          %v2076 = vpop.f32.mrb[0].mxu0
          %v2077 = vadd.f32 0.0, %v2076
          %v2078 = vpop.f32.mrb[0].mxu0
          %v2079 = vpop.f32.mrb[0].mxu0
          %v2080 = vadd.f32 0.0, %v2079
          %v2081 = vpop.f32.mrb[0].mxu0
          %2082 = vdwg.mxu0
          %v2083 = vpack.c.bf16 %v2056, %v2053
          %v2084 = vpack.c.bf16 %v2064, %v2061
          %v2085 = vpack.c.bf16 %v2072, %v2069
          %v2086 = vpack.c.bf16 %v2080, %v2077
          %vm2087 = vcmask 130048
          %v2089 = vsel %vm2087, %v1929, 0
          %v2092 = vsel %vm2087, %v1930, 0
          %v2095 = vsel %vm2087, %v1931, 0
          %v2098 = vsel %vm2087, %v1932, 0
          %v2101 = vsel %vm2087, %v2006, 0
          %v2104 = vsel %vm2087, %v2007, 0
          %v2107 = vsel %vm2087, %v2008, 0
          %v2110 = vsel %vm2087, %v2009, 0
          %2112 = vmatprep.subr.bf16.mxu0 0
          %2113 = vmatpush1.bf16.xpose.msra.mxu0 %v2101
          %2114 = vmatprep.subr.bf16.mxu0 0
          %2115 = vmatpush1.bf16.xpose.msra.mxu0 %v2104
          %2116 = vmatprep.subr.bf16.mxu0 0
          %2117 = vmatpush1.bf16.xpose.msra.mxu0 %v2107
          %2118 = vmatprep.subr.bf16.mxu0 0
          %2119 = vmatpush1.bf16.xpose.msra.mxu0 %v2110
          %2120 = vmatprep.subr.bf16.mxu0 0
          %2121 = vmatpush1.bf16.xpose.msra.mxu0 0
          %2122 = vmatprep.subr.bf16.mxu0 0
          %2123 = vmatpush1.bf16.xpose.msra.mxu0 0
          %2124 = vmatprep.subr.bf16.mxu0 0
          %2125 = vmatpush1.bf16.xpose.msra.mxu0 0
          %2126 = vmatprep.subr.bf16.mxu0 0
          %2127 = vmatpush1.bf16.xpose.msra.mxu0 0
          %2128 = vmatprep.subr.bf16.mxu0 0
          %2129 = vmatpush1.bf16.xpose.msra.mxu0 0
          %2130 = vmatprep.subr.bf16.mxu0 0
          %2131 = vmatpush1.bf16.xpose.msra.mxu0 0
          %2132 = vmatprep.subr.bf16.mxu0 0
          %2133 = vmatpush1.bf16.xpose.msra.mxu0 0
          %2134 = vmatprep.subr.bf16.mxu0 0
          %2135 = vmatpush1.bf16.xpose.msra.mxu0 0
          %2136 = vmatprep.subr.bf16.mxu0 0
          %2137 = vmatpush1.bf16.xpose.msra.mxu0 0
          %2138 = vmatprep.subr.bf16.mxu0 0
          %2139 = vmatpush1.bf16.xpose.msra.mxu0 0
          %2140 = vmatprep.subr.bf16.mxu0 0
          %2141 = vmatpush1.bf16.xpose.msra.mxu0 0
          %2142 = vmatprep.subr.bf16.mxu0 0
          %2143 = vmatpush1.bf16.xpose.msra.mxu0 0
          %2144 = vmatprep.mubr.bf16.mxu0 0
          %2145 = vmatmul.mubr.bf16.gmra.mrb[0].mxu0 %v2089
          %v2146 = vpop.f32.mrb[0].mxu0
          %v2147 = vadd.f32 0.0, %v2146
          %v2148 = vpop.f32.mrb[0].mxu0
          %v2149 = vpop.f32.mrb[0].mxu0
          %v2150 = vadd.f32 0.0, %v2149
          %v2151 = vpop.f32.mrb[0].mxu0
          %2152 = vmatprep.mubr.bf16.mxu0 0
          %2153 = vmatmul.mubr.bf16.gmra.mrb[0].mxu0 %v2092
          %v2154 = vpop.f32.mrb[0].mxu0
          %v2155 = vadd.f32 0.0, %v2154
          %v2156 = vpop.f32.mrb[0].mxu0
          %v2157 = vpop.f32.mrb[0].mxu0
          %v2158 = vadd.f32 0.0, %v2157
          %v2159 = vpop.f32.mrb[0].mxu0
          %2160 = vmatprep.mubr.bf16.mxu0 0
          %2161 = vmatmul.mubr.bf16.gmra.mrb[0].mxu0 %v2095
          %v2162 = vpop.f32.mrb[0].mxu0
          %v2163 = vadd.f32 0.0, %v2162
          %v2164 = vpop.f32.mrb[0].mxu0
          %v2165 = vpop.f32.mrb[0].mxu0
          %v2166 = vadd.f32 0.0, %v2165
          %v2167 = vpop.f32.mrb[0].mxu0
          %2168 = vmatprep.mubr.bf16.mxu0 0
          %2169 = vmatmul.mubr.bf16.gmra.mrb[0].mxu0 %v2098
          %v2170 = vpop.f32.mrb[0].mxu0
          %v2171 = vadd.f32 0.0, %v2170
          %v2172 = vpop.f32.mrb[0].mxu0
          %v2173 = vpop.f32.mrb[0].mxu0
          %v2174 = vadd.f32 0.0, %v2173
          %v2175 = vpop.f32.mrb[0].mxu0
          %2176 = vdwg.mxu0
          %vm2177 = vcmask 523264
          %v2178 = vsel %vm2177, %v2147, -inf
          %2179 = vmax.xlane.f32.xlu0 %v2178
          %v2180 = vpop.xlane.xlu0 %2179
          %v2181 = vsel %vm2177, %v2150, -inf
          %2182 = vmax.xlane.f32.xlu0 %v2181
          %v2183 = vpop.xlane.xlu0 %2182
          %v2184 = vsel %vm2177, %v2155, -inf
          %2185 = vmax.xlane.f32.xlu0 %v2184
          %v2186 = vpop.xlane.xlu0 %2185
          %v2187 = vsel %vm2177, %v2158, -inf
          %2188 = vmax.xlane.f32.xlu0 %v2187
          %v2189 = vpop.xlane.xlu0 %2188
          %v2190 = vsel %vm2177, %v2163, -inf
          %2191 = vmax.xlane.f32.xlu0 %v2190
          %v2192 = vpop.xlane.xlu0 %2191
          %v2193 = vsel %vm2177, %v2166, -inf
          %2194 = vmax.xlane.f32.xlu0 %v2193
          %v2195 = vpop.xlane.xlu0 %2194
          %v2196 = vsel %vm2177, %v2171, -inf
          %2197 = vmax.xlane.f32.xlu0 %v2196
          %v2198 = vpop.xlane.xlu0 %2197
          %v2199 = vsel %vm2177, %v2174, -inf
          %2200 = vmax.xlane.f32.xlu0 %v2199
          %v2201 = vpop.xlane.xlu0 %2200
          %v2202 = vsub.f32 %v2147, %v2180
          %v2203 = vsub.f32 %v2150, %v2183
          %v2204 = vsub.f32 %v2155, %v2186
          %v2205 = vsub.f32 %v2158, %v2189
          %v2206 = vsub.f32 %v2163, %v2192
          %v2207 = vsub.f32 %v2166, %v2195
          %v2208 = vsub.f32 %v2171, %v2198
          %v2209 = vsub.f32 %v2174, %v2201
          %v2210 = vmul.f32 %v2202, 1.442695
          %v2211 = vpow.pop %v2210
          %v2212 = vmul.f32 %v2203, 1.442695
          %v2213 = vpow.pop %v2212
          %v2214 = vmul.f32 %v2204, 1.442695
          %v2215 = vpow.pop %v2214
          %v2216 = vmul.f32 %v2205, 1.442695
          %v2217 = vpow.pop %v2216
          %v2218 = vmul.f32 %v2206, 1.442695
          %v2219 = vpow.pop %v2218
          %v2220 = vmul.f32 %v2207, 1.442695
          %v2221 = vpow.pop %v2220
          %v2222 = vmul.f32 %v2208, 1.442695
          %v2223 = vpow.pop %v2222
          %v2224 = vmul.f32 %v2209, 1.442695
          %v2225 = vpow.pop %v2224
          %v2226 = vsel %vm2177, %v2211, 0.0
          %2227 = vadd.xlane.f32.xlu0 %v2226
          %v2228 = vpop.xlane.xlu0 %2227
          %v2229 = vsel %vm2177, %v2213, 0.0
          %2230 = vadd.xlane.f32.xlu0 %v2229
          %v2231 = vpop.xlane.xlu0 %2230
          %v2232 = vsel %vm2177, %v2215, 0.0
          %2233 = vadd.xlane.f32.xlu0 %v2232
          %v2234 = vpop.xlane.xlu0 %2233
          %v2235 = vsel %vm2177, %v2217, 0.0
          %2236 = vadd.xlane.f32.xlu0 %v2235
          %v2237 = vpop.xlane.xlu0 %2236
          %v2238 = vsel %vm2177, %v2219, 0.0
          %2239 = vadd.xlane.f32.xlu0 %v2238
          %v2240 = vpop.xlane.xlu0 %2239
          %v2241 = vsel %vm2177, %v2221, 0.0
          %2242 = vadd.xlane.f32.xlu0 %v2241
          %v2243 = vpop.xlane.xlu0 %2242
          %v2244 = vsel %vm2177, %v2223, 0.0
          %2245 = vadd.xlane.f32.xlu0 %v2244
          %v2246 = vpop.xlane.xlu0 %2245
          %v2247 = vsel %vm2177, %v2225, 0.0
          %2248 = vadd.xlane.f32.xlu0 %v2247
          %v2249 = vpop.xlane.xlu0 %2248
          %v2250 = vpack.c.bf16 %v2213, %v2211
          %v2251 = vpack.c.bf16 %v2217, %v2215
          %v2252 = vpack.c.bf16 %v2221, %v2219
          %v2253 = vpack.c.bf16 %v2225, %v2223
          %v2255 = vsel %vm2177, %v2250, 0
          %v2258 = vsel %vm2177, %v2251, 0
          %v2261 = vsel %vm2177, %v2252, 0
          %v2264 = vsel %vm2177, %v2253, 0
          %2266 = vmatprep.subr.bf16.mxu0 0
          %2267 = vmatpush1.bf16.msra.mxu0 %v2083
          %2268 = vmatprep.subr.bf16.mxu0 0
          %2269 = vmatpush1.bf16.msra.mxu0 %v2084
          %2270 = vmatprep.subr.bf16.mxu0 0
          %2271 = vmatpush1.bf16.msra.mxu0 %v2085
          %2272 = vmatprep.subr.bf16.mxu0 0
          %2273 = vmatpush1.bf16.msra.mxu0 %v2086
          %2274 = vmatprep.subr.bf16.mxu0 0
          %2275 = vmatpush1.bf16.msra.mxu0 0
          %2276 = vmatprep.subr.bf16.mxu0 0
          %2277 = vmatpush1.bf16.msra.mxu0 0
          %2278 = vmatprep.subr.bf16.mxu0 0
          %2279 = vmatpush1.bf16.msra.mxu0 0
          %2280 = vmatprep.subr.bf16.mxu0 0
          %2281 = vmatpush1.bf16.msra.mxu0 0
          %2282 = vmatprep.subr.bf16.mxu0 0
          %2283 = vmatpush1.bf16.msra.mxu0 0
          %2284 = vmatprep.subr.bf16.mxu0 0
          %2285 = vmatpush1.bf16.msra.mxu0 0
          %2286 = vmatprep.subr.bf16.mxu0 0
          %2287 = vmatpush1.bf16.msra.mxu0 0
          %2288 = vmatprep.subr.bf16.mxu0 0
          %2289 = vmatpush1.bf16.msra.mxu0 0
          %2290 = vmatprep.subr.bf16.mxu0 0
          %2291 = vmatpush1.bf16.msra.mxu0 0
          %2292 = vmatprep.subr.bf16.mxu0 0
          %2293 = vmatpush1.bf16.msra.mxu0 0
          %2294 = vmatprep.subr.bf16.mxu0 0
          %2295 = vmatpush1.bf16.msra.mxu0 0
          %2296 = vmatprep.subr.bf16.mxu0 0
          %2297 = vmatpush1.bf16.msra.mxu0 0
          %2298 = vmatprep.mubr.bf16.mxu0 0
          %2299 = vmatmul.mubr.bf16.gmra.mrb[0].mxu0 %v2255
          %v2300 = vpop.f32.mrb[0].mxu0
          %v2301 = vadd.f32 0.0, %v2300
          %v2302 = vpop.f32.mrb[0].mxu0
          %v2303 = vpop.f32.mrb[0].mxu0
          %v2304 = vadd.f32 0.0, %v2303
          %v2305 = vpop.f32.mrb[0].mxu0
          %2306 = vmatprep.mubr.bf16.mxu0 0
          %2307 = vmatmul.mubr.bf16.gmra.mrb[0].mxu0 %v2258
          %v2308 = vpop.f32.mrb[0].mxu0
          %v2309 = vadd.f32 0.0, %v2308
          %v2310 = vpop.f32.mrb[0].mxu0
          %v2311 = vpop.f32.mrb[0].mxu0
          %v2312 = vadd.f32 0.0, %v2311
          %v2313 = vpop.f32.mrb[0].mxu0
          %2314 = vmatprep.mubr.bf16.mxu0 0
          %2315 = vmatmul.mubr.bf16.gmra.mrb[0].mxu0 %v2261
          %v2316 = vpop.f32.mrb[0].mxu0
          %v2317 = vadd.f32 0.0, %v2316
          %v2318 = vpop.f32.mrb[0].mxu0
          %v2319 = vpop.f32.mrb[0].mxu0
          %v2320 = vadd.f32 0.0, %v2319
          %v2321 = vpop.f32.mrb[0].mxu0
          %2322 = vmatprep.mubr.bf16.mxu0 0
          %2323 = vmatmul.mubr.bf16.gmra.mrb[0].mxu0 %v2264
          %v2324 = vpop.f32.mrb[0].mxu0
          %v2325 = vadd.f32 0.0, %v2324
          %v2326 = vpop.f32.mrb[0].mxu0
          %v2327 = vpop.f32.mrb[0].mxu0
          %v2328 = vadd.f32 0.0, %v2327
          %v2329 = vpop.f32.mrb[0].mxu0
          %2330 = vdwg.mxu0
          %v2331 = vrcp.pop %v2228
          %v2332 = vrcp.pop %v2231
          %v2333 = vrcp.pop %v2234
          %v2334 = vrcp.pop %v2237
          %v2335 = vrcp.pop %v2240
          %v2336 = vrcp.pop %v2243
          %v2337 = vrcp.pop %v2246
          %v2338 = vrcp.pop %v2249
          %v2339 = vmul.f32 %v2301, %v2331
          %v2340 = vmul.f32 %v2304, %v2332
          %v2341 = vmul.f32 %v2309, %v2333
          %v2342 = vmul.f32 %v2312, %v2334
          %v2343 = vmul.f32 %v2317, %v2335
          %v2344 = vmul.f32 %v2320, %v2336
          %v2345 = vmul.f32 %v2325, %v2337
          %v2346 = vmul.f32 %v2328, %v2338
          %v2347 = vpack.c.bf16 %v2340, %v2339
          %v2348 = vpack.c.bf16 %v2342, %v2341
          %v2349 = vpack.c.bf16 %v2344, %v2343
          %v2350 = vpack.c.bf16 %v2346, %v2345
          %s2351 = smul.addr %s1831, 4
          %s2352 = scalar_lea.vmem [#allocation10], %s2351
          %v2353 = vld [vmem:[%s2352] sm:$0xf]
          %v2354 = vld [vmem:[%s2352 + $0x4] sm:$0xf]
          %v2357 = vunpack.c.l.b16 %v2353
          %v2358 = vunpack.c.l.b16 %v2354
          %v2359 = vpack.c.b16 %v2358, %v2357
          %v2362 = vsel %vm2087, %v2347, 0
          %v2365 = vsel %vm2087, %v2348, 0
          %v2368 = vsel %vm2087, %v2349, 0
          %v2371 = vsel %vm2087, %v2350, 0
          %2373 = vmatprep.subr.bf16.mxu0 0
          %2374 = vmatpush1.bf16.msra.mxu0 %v2359
          %2375 = vmatprep.subr.bf16.mxu0 0
          %2376 = vmatpush1.bf16.msra.mxu0 0
          %2377 = vmatprep.subr.bf16.mxu0 0
          %2378 = vmatpush1.bf16.msra.mxu0 0
          %2379 = vmatprep.subr.bf16.mxu0 0
          %2380 = vmatpush1.bf16.msra.mxu0 0
          %2381 = vmatprep.subr.bf16.mxu0 0
          %2382 = vmatpush1.bf16.msra.mxu0 0
          %2383 = vmatprep.subr.bf16.mxu0 0
          %2384 = vmatpush1.bf16.msra.mxu0 0
          %2385 = vmatprep.subr.bf16.mxu0 0
          %2386 = vmatpush1.bf16.msra.mxu0 0
          %2387 = vmatprep.subr.bf16.mxu0 0
          %2388 = vmatpush1.bf16.msra.mxu0 0
          %2389 = vmatprep.subr.bf16.mxu0 0
          %2390 = vmatpush1.bf16.msra.mxu0 0
          %2391 = vmatprep.subr.bf16.mxu0 0
          %2392 = vmatpush1.bf16.msra.mxu0 0
          %2393 = vmatprep.subr.bf16.mxu0 0
          %2394 = vmatpush1.bf16.msra.mxu0 0
          %2395 = vmatprep.subr.bf16.mxu0 0
          %2396 = vmatpush1.bf16.msra.mxu0 0
          %2397 = vmatprep.subr.bf16.mxu0 0
          %2398 = vmatpush1.bf16.msra.mxu0 0
          %2399 = vmatprep.subr.bf16.mxu0 0
          %2400 = vmatpush1.bf16.msra.mxu0 0
          %2401 = vmatprep.subr.bf16.mxu0 0
          %2402 = vmatpush1.bf16.msra.mxu0 0
          %2403 = vmatprep.subr.bf16.mxu0 0
          %2404 = vmatpush1.bf16.msra.mxu0 0
          %2405 = vmatprep.mubr.bf16.mxu0 0
          %2406 = vmatmul.mubr.bf16.gmra.mrb[0].mxu0 %v2362
          %v2407 = vpop.f32.mrb[0].mxu0
          %v2408 = vadd.f32 0.0, %v2407
          %v2409 = vpop.f32.mrb[0].mxu0
          %v2410 = vpop.f32.mrb[0].mxu0
          %v2411 = vadd.f32 0.0, %v2410
          %v2412 = vpop.f32.mrb[0].mxu0
          %2413 = vmatprep.mubr.bf16.mxu0 0
          %2414 = vmatmul.mubr.bf16.gmra.mrb[0].mxu0 %v2365
          %v2415 = vpop.f32.mrb[0].mxu0
          %v2416 = vadd.f32 0.0, %v2415
          %v2417 = vpop.f32.mrb[0].mxu0
          %v2418 = vpop.f32.mrb[0].mxu0
          %v2419 = vadd.f32 0.0, %v2418
          %v2420 = vpop.f32.mrb[0].mxu0
          %2421 = vmatprep.mubr.bf16.mxu0 0
          %2422 = vmatmul.mubr.bf16.gmra.mrb[0].mxu0 %v2368
          %v2423 = vpop.f32.mrb[0].mxu0
          %v2424 = vadd.f32 0.0, %v2423
          %v2425 = vpop.f32.mrb[0].mxu0
          %v2426 = vpop.f32.mrb[0].mxu0
          %v2427 = vadd.f32 0.0, %v2426
          %v2428 = vpop.f32.mrb[0].mxu0
          %2429 = vmatprep.mubr.bf16.mxu0 0
          %2430 = vmatmul.mubr.bf16.gmra.mrb[0].mxu0 %v2371
          %v2431 = vpop.f32.mrb[0].mxu0
          %v2432 = vadd.f32 0.0, %v2431
          %v2433 = vpop.f32.mrb[0].mxu0
          %v2434 = vpop.f32.mrb[0].mxu0
          %v2435 = vadd.f32 0.0, %v2434
          %v2436 = vpop.f32.mrb[0].mxu0
          %2437 = vdwg.mxu0
          %v2438 = vadd.f32 %v1823, %v2408
          %v2439 = vadd.f32 %v1824, %v2411
          %v2440 = vadd.f32 %v1825, %v2416
          %v2441 = vadd.f32 %v1826, %v2419
          %v2442 = vadd.f32 %v1827, %v2424
          %v2443 = vadd.f32 %v1828, %v2427
          %v2444 = vadd.f32 %v1829, %v2432
          %v2445 = vadd.f32 %v1830, %v2435
        $region205: #{spatial_transformer_forward.1} parent=143 // loop_footer
          %s1822 = sadd.s32 1, %s1818
        $region206: #{spatial_transformer_forward.1} parent=143 // loop_footer_branch
          %1817 = sbr.rel target = $region202
        $region207: #{spatial_transformer_forward.1} parent=143 // loop_exit
          _
        %v2447 = vlaneseq
        %v2448 = vshrl.u32 %v2447, 7
        %v2449 = vsub.s32 0, %v2448
        %v2450 = vrot.slane %v1812, %v2449
        %v2452 = vadd.f32 %v1823, %v2450
        %v2453 = vadd.f32 %v1824, %v2450
        %v2454 = vadd.f32 %v1825, %v2450
        %v2455 = vadd.f32 %v1826, %v2450
        %v2456 = vadd.f32 %v1827, %v2450
        %v2457 = vadd.f32 %v1828, %v2450
        %v2458 = vadd.f32 %v1829, %v2450
        %v2459 = vadd.f32 %v1830, %v2450
        %v2460 = vadd.f32 %v2452, %v1647
        %v2461 = vadd.f32 %v2453, %v1650
        %v2462 = vadd.f32 %v2454, %v1655
        %v2463 = vadd.f32 %v2455, %v1658
        %v2464 = vadd.f32 %v2456, %v1663
        %v2465 = vadd.f32 %v2457, %v1666
        %v2466 = vadd.f32 %v2458, %v1671
        %v2467 = vadd.f32 %v2459, %v1674
        %v2468 = vld [vmem:[%s29] sm:$0x1]
        %v2469 = vld [vmem:[%s31] sm:$0x1]
        %v2470 = vsel %vm1175, %v2460, 0.0
        %2471 = vadd.xlane.f32.xlu0 %v2470
        %v2472 = vpop.xlane.xlu0 %2471
        %v2473 = vsel %vm1175, %v2461, 0.0
        %2474 = vadd.xlane.f32.xlu0 %v2473
        %v2475 = vpop.xlane.xlu0 %2474
        %v2476 = vsel %vm1175, %v2462, 0.0
        %2477 = vadd.xlane.f32.xlu0 %v2476
        %v2478 = vpop.xlane.xlu0 %2477
        %v2479 = vsel %vm1175, %v2463, 0.0
        %2480 = vadd.xlane.f32.xlu0 %v2479
        %v2481 = vpop.xlane.xlu0 %2480
        %v2482 = vsel %vm1175, %v2464, 0.0
        %2483 = vadd.xlane.f32.xlu0 %v2482
        %v2484 = vpop.xlane.xlu0 %2483
        %v2485 = vsel %vm1175, %v2465, 0.0
        %2486 = vadd.xlane.f32.xlu0 %v2485
        %v2487 = vpop.xlane.xlu0 %2486
        %v2488 = vsel %vm1175, %v2466, 0.0
        %2489 = vadd.xlane.f32.xlu0 %v2488
        %v2490 = vpop.xlane.xlu0 %2489
        %v2491 = vsel %vm1175, %v2467, 0.0
        %2492 = vadd.xlane.f32.xlu0 %v2491
        %v2493 = vpop.xlane.xlu0 %2492
        %v2494 = vmul.f32 %v2472, %v1703
        %v2495 = vmul.f32 %v2475, %v1703
        %v2496 = vmul.f32 %v2478, %v1703
        %v2497 = vmul.f32 %v2481, %v1703
        %v2498 = vmul.f32 %v2484, %v1703
        %v2499 = vmul.f32 %v2487, %v1703
        %v2500 = vmul.f32 %v2490, %v1703
        %v2501 = vmul.f32 %v2493, %v1703
        %v2502 = vsub.f32 %v2460, %v2494
        %v2503 = vsub.f32 %v2461, %v2495
        %v2504 = vsub.f32 %v2462, %v2496
        %v2505 = vsub.f32 %v2463, %v2497
        %v2506 = vsub.f32 %v2464, %v2498
        %v2507 = vsub.f32 %v2465, %v2499
        %v2508 = vsub.f32 %v2466, %v2500
        %v2509 = vsub.f32 %v2467, %v2501
        %v2510 = vmul.f32 %v2502, %v2502
        %v2511 = vmul.f32 %v2503, %v2503
        %v2512 = vmul.f32 %v2504, %v2504
        %v2513 = vmul.f32 %v2505, %v2505
        %v2514 = vmul.f32 %v2506, %v2506
        %v2515 = vmul.f32 %v2507, %v2507
        %v2516 = vmul.f32 %v2508, %v2508
        %v2517 = vmul.f32 %v2509, %v2509
        %v2518 = vsel %vm1175, %v2510, 0.0
        %2519 = vadd.xlane.f32.xlu0 %v2518
        %v2520 = vpop.xlane.xlu0 %2519
        %v2521 = vsel %vm1175, %v2511, 0.0
        %2522 = vadd.xlane.f32.xlu0 %v2521
        %v2523 = vpop.xlane.xlu0 %2522
        %v2524 = vsel %vm1175, %v2512, 0.0
        %2525 = vadd.xlane.f32.xlu0 %v2524
        %v2526 = vpop.xlane.xlu0 %2525
        %v2527 = vsel %vm1175, %v2513, 0.0
        %2528 = vadd.xlane.f32.xlu0 %v2527
        %v2529 = vpop.xlane.xlu0 %2528
        %v2530 = vsel %vm1175, %v2514, 0.0
        %2531 = vadd.xlane.f32.xlu0 %v2530
        %v2532 = vpop.xlane.xlu0 %2531
        %v2533 = vsel %vm1175, %v2515, 0.0
        %2534 = vadd.xlane.f32.xlu0 %v2533
        %v2535 = vpop.xlane.xlu0 %2534
        %v2536 = vsel %vm1175, %v2516, 0.0
        %2537 = vadd.xlane.f32.xlu0 %v2536
        %v2538 = vpop.xlane.xlu0 %2537
        %v2539 = vsel %vm1175, %v2517, 0.0
        %2540 = vadd.xlane.f32.xlu0 %v2539
        %v2541 = vpop.xlane.xlu0 %2540
        %v2542 = vmul.f32 %v2520, %v1703
        %v2543 = vmul.f32 %v2523, %v1703
        %v2544 = vmul.f32 %v2526, %v1703
        %v2545 = vmul.f32 %v2529, %v1703
        %v2546 = vmul.f32 %v2532, %v1703
        %v2547 = vmul.f32 %v2535, %v1703
        %v2548 = vmul.f32 %v2538, %v1703
        %v2549 = vmul.f32 %v2541, %v1703
        %v2550 = vadd.f32 %v2542, 1e-05
        %v2551 = vadd.f32 %v2543, 1e-05
        %v2552 = vadd.f32 %v2544, 1e-05
        %v2553 = vadd.f32 %v2545, 1e-05
        %v2554 = vadd.f32 %v2546, 1e-05
        %v2555 = vadd.f32 %v2547, 1e-05
        %v2556 = vadd.f32 %v2548, 1e-05
        %v2557 = vadd.f32 %v2549, 1e-05
        %v2558 = vrsqrt.pop %v2550
        %v2559 = vrsqrt.pop %v2551
        %v2560 = vrsqrt.pop %v2552
        %v2561 = vrsqrt.pop %v2553
        %v2562 = vrsqrt.pop %v2554
        %v2563 = vrsqrt.pop %v2555
        %v2564 = vrsqrt.pop %v2556
        %v2565 = vrsqrt.pop %v2557
        %v2566 = vmul.f32 %v2502, %v2558
        %v2567 = vmul.f32 %v2503, %v2559
        %v2568 = vmul.f32 %v2504, %v2560
        %v2569 = vmul.f32 %v2505, %v2561
        %v2570 = vmul.f32 %v2506, %v2562
        %v2571 = vmul.f32 %v2507, %v2563
        %v2572 = vmul.f32 %v2508, %v2564
        %v2573 = vmul.f32 %v2509, %v2565
        %v2575 = vlaneseq
        %v2576 = vshrl.u32 %v2575, 7
        %v2577 = vsub.s32 0, %v2576
        %v2578 = vrot.slane %v2468, %v2577
        %v2580 = vmul.f32 %v2566, %v2578
        %v2581 = vmul.f32 %v2567, %v2578
        %v2582 = vmul.f32 %v2568, %v2578
        %v2583 = vmul.f32 %v2569, %v2578
        %v2584 = vmul.f32 %v2570, %v2578
        %v2585 = vmul.f32 %v2571, %v2578
        %v2586 = vmul.f32 %v2572, %v2578
        %v2587 = vmul.f32 %v2573, %v2578
        %v2589 = vlaneseq
        %v2590 = vshrl.u32 %v2589, 7
        %v2591 = vsub.s32 0, %v2590
        %v2592 = vrot.slane %v2469, %v2591
        %v2594 = vadd.f32 %v2580, %v2592
        %v2595 = vadd.f32 %v2581, %v2592
        %v2596 = vadd.f32 %v2582, %v2592
        %v2597 = vadd.f32 %v2583, %v2592
        %v2598 = vadd.f32 %v2584, %v2592
        %v2599 = vadd.f32 %v2585, %v2592
        %v2600 = vadd.f32 %v2586, %v2592
        %v2601 = vadd.f32 %v2587, %v2592
        %v2602 = vld [vmem:[#allocation17] sm:$0x1]
        %v2603 = vpack.c.bf16 %v2595, %v2594
        %v2604 = vpack.c.bf16 %v2597, %v2596
        %v2605 = vpack.c.bf16 %v2599, %v2598
        %v2606 = vpack.c.bf16 %v2601, %v2600
        loop: start=0, step=1, limit=2
        $region208: #{spatial_transformer_forward.1} parent=143 // loop_pre_header
          _
        $region209: #{spatial_transformer_forward.1} parent=143 // loop_header
          %s2608 = sphi 0, %s2612
          %p2609 = scmp.ge.s32.totalorder %s2608, 2
          %v2613 = vphi 0.0, %v3228
          %v2614 = vphi 0.0, %v3229
          %v2615 = vphi 0.0, %v3230
          %v2616 = vphi 0.0, %v3231
          %v2617 = vphi 0.0, %v3232
          %v2618 = vphi 0.0, %v3233
          %v2619 = vphi 0.0, %v3234
          %v2620 = vphi 0.0, %v3235
        $region210: #{spatial_transformer_forward.1} parent=143 // loop_header_branch
          %2611 = sbr.rel (%p2609) target = $region214
        $region211: #{spatial_transformer_forward.1} parent=143 // loop_body
          %s2621 = smul.u32 %s2608, 2
          %s2622 = smul.addr %s2621, 4
          %s2623 = scalar_lea.vmem %s33, %s2622
          %v2624 = vld [vmem:[%s2623] sm:$0xf]
          %v2625 = vld [vmem:[%s2623 + $0x4] sm:$0xf]
          %s2626 = smul.addr %s2621, 4
          %s2627 = scalar_lea.vmem [#allocation13], %s2626
          %v2628 = vld [vmem:[%s2627] sm:$0xf]
          %v2629 = vld [vmem:[%s2627 + $0x4] sm:$0xf]
          %s2630 = smul.addr %s2621, 4
          %s2631 = scalar_lea.vmem [#allocation14], %s2630
          %v2632 = vld [vmem:[%s2631] sm:$0xf]
          %v2633 = vld [vmem:[%s2631 + $0x4] sm:$0xf]
          %v2636 = vunpack.c.l.b16 %v2624
          %v2637 = vunpack.c.l.b16 %v2625
          %v2638 = vpack.c.b16 %v2637, %v2636
          %v2640 = vsel %vm1175, %v2603, 0
          %v2643 = vsel %vm1175, %v2604, 0
          %v2646 = vsel %vm1175, %v2605, 0
          %v2649 = vsel %vm1175, %v2606, 0
          %v2652 = vsel %vm1175, %v2638, 0
          %2654 = vmatprep.subr.bf16.mxu0 0
          %2655 = vmatpush1.bf16.xpose.msra.mxu0 %v2652
          %2656 = vmatprep.subr.bf16.mxu0 0
          %2657 = vmatpush1.bf16.xpose.msra.mxu0 0
          %2658 = vmatprep.subr.bf16.mxu0 0
          %2659 = vmatpush1.bf16.xpose.msra.mxu0 0
          %2660 = vmatprep.subr.bf16.mxu0 0
          %2661 = vmatpush1.bf16.xpose.msra.mxu0 0
          %2662 = vmatprep.subr.bf16.mxu0 0
          %2663 = vmatpush1.bf16.xpose.msra.mxu0 0
          %2664 = vmatprep.subr.bf16.mxu0 0
          %2665 = vmatpush1.bf16.xpose.msra.mxu0 0
          %2666 = vmatprep.subr.bf16.mxu0 0
          %2667 = vmatpush1.bf16.xpose.msra.mxu0 0
          %2668 = vmatprep.subr.bf16.mxu0 0
          %2669 = vmatpush1.bf16.xpose.msra.mxu0 0
          %2670 = vmatprep.subr.bf16.mxu0 0
          %2671 = vmatpush1.bf16.xpose.msra.mxu0 0
          %2672 = vmatprep.subr.bf16.mxu0 0
          %2673 = vmatpush1.bf16.xpose.msra.mxu0 0
          %2674 = vmatprep.subr.bf16.mxu0 0
          %2675 = vmatpush1.bf16.xpose.msra.mxu0 0
          %2676 = vmatprep.subr.bf16.mxu0 0
          %2677 = vmatpush1.bf16.xpose.msra.mxu0 0
          %2678 = vmatprep.subr.bf16.mxu0 0
          %2679 = vmatpush1.bf16.xpose.msra.mxu0 0
          %2680 = vmatprep.subr.bf16.mxu0 0
          %2681 = vmatpush1.bf16.xpose.msra.mxu0 0
          %2682 = vmatprep.subr.bf16.mxu0 0
          %2683 = vmatpush1.bf16.xpose.msra.mxu0 0
          %2684 = vmatprep.subr.bf16.mxu0 0
          %2685 = vmatpush1.bf16.xpose.msra.mxu0 0
          %2686 = vmatprep.mubr.bf16.mxu0 0
          %2687 = vmatmul.mubr.bf16.gmra.mrb[0].mxu0 %v2640
          %v2688 = vpop.f32.mrb[0].mxu0
          %v2689 = vadd.f32 0.0, %v2688
          %v2690 = vpop.f32.mrb[0].mxu0
          %v2691 = vpop.f32.mrb[0].mxu0
          %v2692 = vadd.f32 0.0, %v2691
          %v2693 = vpop.f32.mrb[0].mxu0
          %2694 = vmatprep.mubr.bf16.mxu0 0
          %2695 = vmatmul.mubr.bf16.gmra.mrb[0].mxu0 %v2643
          %v2696 = vpop.f32.mrb[0].mxu0
          %v2697 = vadd.f32 0.0, %v2696
          %v2698 = vpop.f32.mrb[0].mxu0
          %v2699 = vpop.f32.mrb[0].mxu0
          %v2700 = vadd.f32 0.0, %v2699
          %v2701 = vpop.f32.mrb[0].mxu0
          %2702 = vmatprep.mubr.bf16.mxu0 0
          %2703 = vmatmul.mubr.bf16.gmra.mrb[0].mxu0 %v2646
          %v2704 = vpop.f32.mrb[0].mxu0
          %v2705 = vadd.f32 0.0, %v2704
          %v2706 = vpop.f32.mrb[0].mxu0
          %v2707 = vpop.f32.mrb[0].mxu0
          %v2708 = vadd.f32 0.0, %v2707
          %v2709 = vpop.f32.mrb[0].mxu0
          %2710 = vmatprep.mubr.bf16.mxu0 0
          %2711 = vmatmul.mubr.bf16.gmra.mrb[0].mxu0 %v2649
          %v2712 = vpop.f32.mrb[0].mxu0
          %v2713 = vadd.f32 0.0, %v2712
          %v2714 = vpop.f32.mrb[0].mxu0
          %v2715 = vpop.f32.mrb[0].mxu0
          %v2716 = vadd.f32 0.0, %v2715
          %v2717 = vpop.f32.mrb[0].mxu0
          %2718 = vdwg.mxu0
          %v2719 = vpack.c.bf16 %v2692, %v2689
          %v2720 = vpack.c.bf16 %v2700, %v2697
          %v2721 = vpack.c.bf16 %v2708, %v2705
          %v2722 = vpack.c.bf16 %v2716, %v2713
          %v2725 = vunpack.c.l.b16 %v2628
          %v2726 = vunpack.c.l.b16 %v2629
          %v2727 = vpack.c.b16 %v2726, %v2725
          %v2729 = vsel %vm1175, %v2727, 0
          %2731 = vmatprep.subr.bf16.mxu0 0
          %2732 = vmatpush1.bf16.xpose.msra.mxu0 %v2729
          %2733 = vmatprep.subr.bf16.mxu0 0
          %2734 = vmatpush1.bf16.xpose.msra.mxu0 0
          %2735 = vmatprep.subr.bf16.mxu0 0
          %2736 = vmatpush1.bf16.xpose.msra.mxu0 0
          %2737 = vmatprep.subr.bf16.mxu0 0
          %2738 = vmatpush1.bf16.xpose.msra.mxu0 0
          %2739 = vmatprep.subr.bf16.mxu0 0
          %2740 = vmatpush1.bf16.xpose.msra.mxu0 0
          %2741 = vmatprep.subr.bf16.mxu0 0
          %2742 = vmatpush1.bf16.xpose.msra.mxu0 0
          %2743 = vmatprep.subr.bf16.mxu0 0
          %2744 = vmatpush1.bf16.xpose.msra.mxu0 0
          %2745 = vmatprep.subr.bf16.mxu0 0
          %2746 = vmatpush1.bf16.xpose.msra.mxu0 0
          %2747 = vmatprep.subr.bf16.mxu0 0
          %2748 = vmatpush1.bf16.xpose.msra.mxu0 0
          %2749 = vmatprep.subr.bf16.mxu0 0
          %2750 = vmatpush1.bf16.xpose.msra.mxu0 0
          %2751 = vmatprep.subr.bf16.mxu0 0
          %2752 = vmatpush1.bf16.xpose.msra.mxu0 0
          %2753 = vmatprep.subr.bf16.mxu0 0
          %2754 = vmatpush1.bf16.xpose.msra.mxu0 0
          %2755 = vmatprep.subr.bf16.mxu0 0
          %2756 = vmatpush1.bf16.xpose.msra.mxu0 0
          %2757 = vmatprep.subr.bf16.mxu0 0
          %2758 = vmatpush1.bf16.xpose.msra.mxu0 0
          %2759 = vmatprep.subr.bf16.mxu0 0
          %2760 = vmatpush1.bf16.xpose.msra.mxu0 0
          %2761 = vmatprep.subr.bf16.mxu0 0
          %2762 = vmatpush1.bf16.xpose.msra.mxu0 0
          %2763 = vmatprep.mubr.bf16.mxu0 0
          %2764 = vmatmul.mubr.bf16.gmra.mrb[0].mxu0 %v2640
          %v2765 = vpop.f32.mrb[0].mxu0
          %v2766 = vadd.f32 0.0, %v2765
          %v2767 = vpop.f32.mrb[0].mxu0
          %v2768 = vpop.f32.mrb[0].mxu0
          %v2769 = vadd.f32 0.0, %v2768
          %v2770 = vpop.f32.mrb[0].mxu0
          %2771 = vmatprep.mubr.bf16.mxu0 0
          %2772 = vmatmul.mubr.bf16.gmra.mrb[0].mxu0 %v2643
          %v2773 = vpop.f32.mrb[0].mxu0
          %v2774 = vadd.f32 0.0, %v2773
          %v2775 = vpop.f32.mrb[0].mxu0
          %v2776 = vpop.f32.mrb[0].mxu0
          %v2777 = vadd.f32 0.0, %v2776
          %v2778 = vpop.f32.mrb[0].mxu0
          %2779 = vmatprep.mubr.bf16.mxu0 0
          %2780 = vmatmul.mubr.bf16.gmra.mrb[0].mxu0 %v2646
          %v2781 = vpop.f32.mrb[0].mxu0
          %v2782 = vadd.f32 0.0, %v2781
          %v2783 = vpop.f32.mrb[0].mxu0
          %v2784 = vpop.f32.mrb[0].mxu0
          %v2785 = vadd.f32 0.0, %v2784
          %v2786 = vpop.f32.mrb[0].mxu0
          %2787 = vmatprep.mubr.bf16.mxu0 0
          %2788 = vmatmul.mubr.bf16.gmra.mrb[0].mxu0 %v2649
          %v2789 = vpop.f32.mrb[0].mxu0
          %v2790 = vadd.f32 0.0, %v2789
          %v2791 = vpop.f32.mrb[0].mxu0
          %v2792 = vpop.f32.mrb[0].mxu0
          %v2793 = vadd.f32 0.0, %v2792
          %v2794 = vpop.f32.mrb[0].mxu0
          %2795 = vdwg.mxu0
          %v2796 = vpack.c.bf16 %v2769, %v2766
          %v2797 = vpack.c.bf16 %v2777, %v2774
          %v2798 = vpack.c.bf16 %v2785, %v2782
          %v2799 = vpack.c.bf16 %v2793, %v2790
          %v2802 = vunpack.c.l.b16 %v2632
          %v2803 = vunpack.c.l.b16 %v2633
          %v2804 = vpack.c.b16 %v2803, %v2802
          %v2806 = vsel %vm1175, %v2804, 0
          %2808 = vmatprep.subr.bf16.mxu0 0
          %2809 = vmatpush1.bf16.xpose.msra.mxu0 %v2806
          %2810 = vmatprep.subr.bf16.mxu0 0
          %2811 = vmatpush1.bf16.xpose.msra.mxu0 0
          %2812 = vmatprep.subr.bf16.mxu0 0
          %2813 = vmatpush1.bf16.xpose.msra.mxu0 0
          %2814 = vmatprep.subr.bf16.mxu0 0
          %2815 = vmatpush1.bf16.xpose.msra.mxu0 0
          %2816 = vmatprep.subr.bf16.mxu0 0
          %2817 = vmatpush1.bf16.xpose.msra.mxu0 0
          %2818 = vmatprep.subr.bf16.mxu0 0
          %2819 = vmatpush1.bf16.xpose.msra.mxu0 0
          %2820 = vmatprep.subr.bf16.mxu0 0
          %2821 = vmatpush1.bf16.xpose.msra.mxu0 0
          %2822 = vmatprep.subr.bf16.mxu0 0
          %2823 = vmatpush1.bf16.xpose.msra.mxu0 0
          %2824 = vmatprep.subr.bf16.mxu0 0
          %2825 = vmatpush1.bf16.xpose.msra.mxu0 0
          %2826 = vmatprep.subr.bf16.mxu0 0
          %2827 = vmatpush1.bf16.xpose.msra.mxu0 0
          %2828 = vmatprep.subr.bf16.mxu0 0
          %2829 = vmatpush1.bf16.xpose.msra.mxu0 0
          %2830 = vmatprep.subr.bf16.mxu0 0
          %2831 = vmatpush1.bf16.xpose.msra.mxu0 0
          %2832 = vmatprep.subr.bf16.mxu0 0
          %2833 = vmatpush1.bf16.xpose.msra.mxu0 0
          %2834 = vmatprep.subr.bf16.mxu0 0
          %2835 = vmatpush1.bf16.xpose.msra.mxu0 0
          %2836 = vmatprep.subr.bf16.mxu0 0
          %2837 = vmatpush1.bf16.xpose.msra.mxu0 0
          %2838 = vmatprep.subr.bf16.mxu0 0
          %2839 = vmatpush1.bf16.xpose.msra.mxu0 0
          %2840 = vmatprep.mubr.bf16.mxu0 0
          %2841 = vmatmul.mubr.bf16.gmra.mrb[0].mxu0 %v2640
          %v2842 = vpop.f32.mrb[0].mxu0
          %v2843 = vadd.f32 0.0, %v2842
          %v2844 = vpop.f32.mrb[0].mxu0
          %v2845 = vpop.f32.mrb[0].mxu0
          %v2846 = vadd.f32 0.0, %v2845
          %v2847 = vpop.f32.mrb[0].mxu0
          %2848 = vmatprep.mubr.bf16.mxu0 0
          %2849 = vmatmul.mubr.bf16.gmra.mrb[0].mxu0 %v2643
          %v2850 = vpop.f32.mrb[0].mxu0
          %v2851 = vadd.f32 0.0, %v2850
          %v2852 = vpop.f32.mrb[0].mxu0
          %v2853 = vpop.f32.mrb[0].mxu0
          %v2854 = vadd.f32 0.0, %v2853
          %v2855 = vpop.f32.mrb[0].mxu0
          %2856 = vmatprep.mubr.bf16.mxu0 0
          %2857 = vmatmul.mubr.bf16.gmra.mrb[0].mxu0 %v2646
          %v2858 = vpop.f32.mrb[0].mxu0
          %v2859 = vadd.f32 0.0, %v2858
          %v2860 = vpop.f32.mrb[0].mxu0
          %v2861 = vpop.f32.mrb[0].mxu0
          %v2862 = vadd.f32 0.0, %v2861
          %v2863 = vpop.f32.mrb[0].mxu0
          %2864 = vmatprep.mubr.bf16.mxu0 0
          %2865 = vmatmul.mubr.bf16.gmra.mrb[0].mxu0 %v2649
          %v2866 = vpop.f32.mrb[0].mxu0
          %v2867 = vadd.f32 0.0, %v2866
          %v2868 = vpop.f32.mrb[0].mxu0
          %v2869 = vpop.f32.mrb[0].mxu0
          %v2870 = vadd.f32 0.0, %v2869
          %v2871 = vpop.f32.mrb[0].mxu0
          %2872 = vdwg.mxu0
          %v2873 = vpack.c.bf16 %v2846, %v2843
          %v2874 = vpack.c.bf16 %v2854, %v2851
          %v2875 = vpack.c.bf16 %v2862, %v2859
          %v2876 = vpack.c.bf16 %v2870, %v2867
          %vm2877 = vcmask 130048
          %v2879 = vsel %vm2877, %v2719, 0
          %v2882 = vsel %vm2877, %v2720, 0
          %v2885 = vsel %vm2877, %v2721, 0
          %v2888 = vsel %vm2877, %v2722, 0
          %v2891 = vsel %vm2877, %v2796, 0
          %v2894 = vsel %vm2877, %v2797, 0
          %v2897 = vsel %vm2877, %v2798, 0
          %v2900 = vsel %vm2877, %v2799, 0
          %2902 = vmatprep.subr.bf16.mxu0 0
          %2903 = vmatpush1.bf16.xpose.msra.mxu0 %v2891
          %2904 = vmatprep.subr.bf16.mxu0 0
          %2905 = vmatpush1.bf16.xpose.msra.mxu0 %v2894
          %2906 = vmatprep.subr.bf16.mxu0 0
          %2907 = vmatpush1.bf16.xpose.msra.mxu0 %v2897
          %2908 = vmatprep.subr.bf16.mxu0 0
          %2909 = vmatpush1.bf16.xpose.msra.mxu0 %v2900
          %2910 = vmatprep.subr.bf16.mxu0 0
          %2911 = vmatpush1.bf16.xpose.msra.mxu0 0
          %2912 = vmatprep.subr.bf16.mxu0 0
          %2913 = vmatpush1.bf16.xpose.msra.mxu0 0
          %2914 = vmatprep.subr.bf16.mxu0 0
          %2915 = vmatpush1.bf16.xpose.msra.mxu0 0
          %2916 = vmatprep.subr.bf16.mxu0 0
          %2917 = vmatpush1.bf16.xpose.msra.mxu0 0
          %2918 = vmatprep.subr.bf16.mxu0 0
          %2919 = vmatpush1.bf16.xpose.msra.mxu0 0
          %2920 = vmatprep.subr.bf16.mxu0 0
          %2921 = vmatpush1.bf16.xpose.msra.mxu0 0
          %2922 = vmatprep.subr.bf16.mxu0 0
          %2923 = vmatpush1.bf16.xpose.msra.mxu0 0
          %2924 = vmatprep.subr.bf16.mxu0 0
          %2925 = vmatpush1.bf16.xpose.msra.mxu0 0
          %2926 = vmatprep.subr.bf16.mxu0 0
          %2927 = vmatpush1.bf16.xpose.msra.mxu0 0
          %2928 = vmatprep.subr.bf16.mxu0 0
          %2929 = vmatpush1.bf16.xpose.msra.mxu0 0
          %2930 = vmatprep.subr.bf16.mxu0 0
          %2931 = vmatpush1.bf16.xpose.msra.mxu0 0
          %2932 = vmatprep.subr.bf16.mxu0 0
          %2933 = vmatpush1.bf16.xpose.msra.mxu0 0
          %2934 = vmatprep.mubr.bf16.mxu0 0
          %2935 = vmatmul.mubr.bf16.gmra.mrb[0].mxu0 %v2879
          %v2936 = vpop.f32.mrb[0].mxu0
          %v2937 = vadd.f32 0.0, %v2936
          %v2938 = vpop.f32.mrb[0].mxu0
          %v2939 = vpop.f32.mrb[0].mxu0
          %v2940 = vadd.f32 0.0, %v2939
          %v2941 = vpop.f32.mrb[0].mxu0
          %2942 = vmatprep.mubr.bf16.mxu0 0
          %2943 = vmatmul.mubr.bf16.gmra.mrb[0].mxu0 %v2882
          %v2944 = vpop.f32.mrb[0].mxu0
          %v2945 = vadd.f32 0.0, %v2944
          %v2946 = vpop.f32.mrb[0].mxu0
          %v2947 = vpop.f32.mrb[0].mxu0
          %v2948 = vadd.f32 0.0, %v2947
          %v2949 = vpop.f32.mrb[0].mxu0
          %2950 = vmatprep.mubr.bf16.mxu0 0
          %2951 = vmatmul.mubr.bf16.gmra.mrb[0].mxu0 %v2885
          %v2952 = vpop.f32.mrb[0].mxu0
          %v2953 = vadd.f32 0.0, %v2952
          %v2954 = vpop.f32.mrb[0].mxu0
          %v2955 = vpop.f32.mrb[0].mxu0
          %v2956 = vadd.f32 0.0, %v2955
          %v2957 = vpop.f32.mrb[0].mxu0
          %2958 = vmatprep.mubr.bf16.mxu0 0
          %2959 = vmatmul.mubr.bf16.gmra.mrb[0].mxu0 %v2888
          %v2960 = vpop.f32.mrb[0].mxu0
          %v2961 = vadd.f32 0.0, %v2960
          %v2962 = vpop.f32.mrb[0].mxu0
          %v2963 = vpop.f32.mrb[0].mxu0
          %v2964 = vadd.f32 0.0, %v2963
          %v2965 = vpop.f32.mrb[0].mxu0
          %2966 = vdwg.mxu0
          %vm2967 = vcmask 523264
          %v2968 = vsel %vm2967, %v2937, -inf
          %2969 = vmax.xlane.f32.xlu0 %v2968
          %v2970 = vpop.xlane.xlu0 %2969
          %v2971 = vsel %vm2967, %v2940, -inf
          %2972 = vmax.xlane.f32.xlu0 %v2971
          %v2973 = vpop.xlane.xlu0 %2972
          %v2974 = vsel %vm2967, %v2945, -inf
          %2975 = vmax.xlane.f32.xlu0 %v2974
          %v2976 = vpop.xlane.xlu0 %2975
          %v2977 = vsel %vm2967, %v2948, -inf
          %2978 = vmax.xlane.f32.xlu0 %v2977
          %v2979 = vpop.xlane.xlu0 %2978
          %v2980 = vsel %vm2967, %v2953, -inf
          %2981 = vmax.xlane.f32.xlu0 %v2980
          %v2982 = vpop.xlane.xlu0 %2981
          %v2983 = vsel %vm2967, %v2956, -inf
          %2984 = vmax.xlane.f32.xlu0 %v2983
          %v2985 = vpop.xlane.xlu0 %2984
          %v2986 = vsel %vm2967, %v2961, -inf
          %2987 = vmax.xlane.f32.xlu0 %v2986
          %v2988 = vpop.xlane.xlu0 %2987
          %v2989 = vsel %vm2967, %v2964, -inf
          %2990 = vmax.xlane.f32.xlu0 %v2989
          %v2991 = vpop.xlane.xlu0 %2990
          %v2992 = vsub.f32 %v2937, %v2970
          %v2993 = vsub.f32 %v2940, %v2973
          %v2994 = vsub.f32 %v2945, %v2976
          %v2995 = vsub.f32 %v2948, %v2979
          %v2996 = vsub.f32 %v2953, %v2982
          %v2997 = vsub.f32 %v2956, %v2985
          %v2998 = vsub.f32 %v2961, %v2988
          %v2999 = vsub.f32 %v2964, %v2991
          %v3000 = vmul.f32 %v2992, 1.442695
          %v3001 = vpow.pop %v3000
          %v3002 = vmul.f32 %v2993, 1.442695
          %v3003 = vpow.pop %v3002
          %v3004 = vmul.f32 %v2994, 1.442695
          %v3005 = vpow.pop %v3004
          %v3006 = vmul.f32 %v2995, 1.442695
          %v3007 = vpow.pop %v3006
          %v3008 = vmul.f32 %v2996, 1.442695
          %v3009 = vpow.pop %v3008
          %v3010 = vmul.f32 %v2997, 1.442695
          %v3011 = vpow.pop %v3010
          %v3012 = vmul.f32 %v2998, 1.442695
          %v3013 = vpow.pop %v3012
          %v3014 = vmul.f32 %v2999, 1.442695
          %v3015 = vpow.pop %v3014
          %v3016 = vsel %vm2967, %v3001, 0.0
          %3017 = vadd.xlane.f32.xlu0 %v3016
          %v3018 = vpop.xlane.xlu0 %3017
          %v3019 = vsel %vm2967, %v3003, 0.0
          %3020 = vadd.xlane.f32.xlu0 %v3019
          %v3021 = vpop.xlane.xlu0 %3020
          %v3022 = vsel %vm2967, %v3005, 0.0
          %3023 = vadd.xlane.f32.xlu0 %v3022
          %v3024 = vpop.xlane.xlu0 %3023
          %v3025 = vsel %vm2967, %v3007, 0.0
          %3026 = vadd.xlane.f32.xlu0 %v3025
          %v3027 = vpop.xlane.xlu0 %3026
          %v3028 = vsel %vm2967, %v3009, 0.0
          %3029 = vadd.xlane.f32.xlu0 %v3028
          %v3030 = vpop.xlane.xlu0 %3029
          %v3031 = vsel %vm2967, %v3011, 0.0
          %3032 = vadd.xlane.f32.xlu0 %v3031
          %v3033 = vpop.xlane.xlu0 %3032
          %v3034 = vsel %vm2967, %v3013, 0.0
          %3035 = vadd.xlane.f32.xlu0 %v3034
          %v3036 = vpop.xlane.xlu0 %3035
          %v3037 = vsel %vm2967, %v3015, 0.0
          %3038 = vadd.xlane.f32.xlu0 %v3037
          %v3039 = vpop.xlane.xlu0 %3038
          %v3040 = vpack.c.bf16 %v3003, %v3001
          %v3041 = vpack.c.bf16 %v3007, %v3005
          %v3042 = vpack.c.bf16 %v3011, %v3009
          %v3043 = vpack.c.bf16 %v3015, %v3013
          %v3045 = vsel %vm2967, %v3040, 0
          %v3048 = vsel %vm2967, %v3041, 0
          %v3051 = vsel %vm2967, %v3042, 0
          %v3054 = vsel %vm2967, %v3043, 0
          %3056 = vmatprep.subr.bf16.mxu0 0
          %3057 = vmatpush1.bf16.msra.mxu0 %v2873
          %3058 = vmatprep.subr.bf16.mxu0 0
          %3059 = vmatpush1.bf16.msra.mxu0 %v2874
          %3060 = vmatprep.subr.bf16.mxu0 0
          %3061 = vmatpush1.bf16.msra.mxu0 %v2875
          %3062 = vmatprep.subr.bf16.mxu0 0
          %3063 = vmatpush1.bf16.msra.mxu0 %v2876
          %3064 = vmatprep.subr.bf16.mxu0 0
          %3065 = vmatpush1.bf16.msra.mxu0 0
          %3066 = vmatprep.subr.bf16.mxu0 0
          %3067 = vmatpush1.bf16.msra.mxu0 0
          %3068 = vmatprep.subr.bf16.mxu0 0
          %3069 = vmatpush1.bf16.msra.mxu0 0
          %3070 = vmatprep.subr.bf16.mxu0 0
          %3071 = vmatpush1.bf16.msra.mxu0 0
          %3072 = vmatprep.subr.bf16.mxu0 0
          %3073 = vmatpush1.bf16.msra.mxu0 0
          %3074 = vmatprep.subr.bf16.mxu0 0
          %3075 = vmatpush1.bf16.msra.mxu0 0
          %3076 = vmatprep.subr.bf16.mxu0 0
          %3077 = vmatpush1.bf16.msra.mxu0 0
          %3078 = vmatprep.subr.bf16.mxu0 0
          %3079 = vmatpush1.bf16.msra.mxu0 0
          %3080 = vmatprep.subr.bf16.mxu0 0
          %3081 = vmatpush1.bf16.msra.mxu0 0
          %3082 = vmatprep.subr.bf16.mxu0 0
          %3083 = vmatpush1.bf16.msra.mxu0 0
          %3084 = vmatprep.subr.bf16.mxu0 0
          %3085 = vmatpush1.bf16.msra.mxu0 0
          %3086 = vmatprep.subr.bf16.mxu0 0
          %3087 = vmatpush1.bf16.msra.mxu0 0
          %3088 = vmatprep.mubr.bf16.mxu0 0
          %3089 = vmatmul.mubr.bf16.gmra.mrb[0].mxu0 %v3045
          %v3090 = vpop.f32.mrb[0].mxu0
          %v3091 = vadd.f32 0.0, %v3090
          %v3092 = vpop.f32.mrb[0].mxu0
          %v3093 = vpop.f32.mrb[0].mxu0
          %v3094 = vadd.f32 0.0, %v3093
          %v3095 = vpop.f32.mrb[0].mxu0
          %3096 = vmatprep.mubr.bf16.mxu0 0
          %3097 = vmatmul.mubr.bf16.gmra.mrb[0].mxu0 %v3048
          %v3098 = vpop.f32.mrb[0].mxu0
          %v3099 = vadd.f32 0.0, %v3098
          %v3100 = vpop.f32.mrb[0].mxu0
          %v3101 = vpop.f32.mrb[0].mxu0
          %v3102 = vadd.f32 0.0, %v3101
          %v3103 = vpop.f32.mrb[0].mxu0
          %3104 = vmatprep.mubr.bf16.mxu0 0
          %3105 = vmatmul.mubr.bf16.gmra.mrb[0].mxu0 %v3051
          %v3106 = vpop.f32.mrb[0].mxu0
          %v3107 = vadd.f32 0.0, %v3106
          %v3108 = vpop.f32.mrb[0].mxu0
          %v3109 = vpop.f32.mrb[0].mxu0
          %v3110 = vadd.f32 0.0, %v3109
          %v3111 = vpop.f32.mrb[0].mxu0
          %3112 = vmatprep.mubr.bf16.mxu0 0
          %3113 = vmatmul.mubr.bf16.gmra.mrb[0].mxu0 %v3054
          %v3114 = vpop.f32.mrb[0].mxu0
          %v3115 = vadd.f32 0.0, %v3114
          %v3116 = vpop.f32.mrb[0].mxu0
          %v3117 = vpop.f32.mrb[0].mxu0
          %v3118 = vadd.f32 0.0, %v3117
          %v3119 = vpop.f32.mrb[0].mxu0
          %3120 = vdwg.mxu0
          %v3121 = vrcp.pop %v3018
          %v3122 = vrcp.pop %v3021
          %v3123 = vrcp.pop %v3024
          %v3124 = vrcp.pop %v3027
          %v3125 = vrcp.pop %v3030
          %v3126 = vrcp.pop %v3033
          %v3127 = vrcp.pop %v3036
          %v3128 = vrcp.pop %v3039
          %v3129 = vmul.f32 %v3091, %v3121
          %v3130 = vmul.f32 %v3094, %v3122
          %v3131 = vmul.f32 %v3099, %v3123
          %v3132 = vmul.f32 %v3102, %v3124
          %v3133 = vmul.f32 %v3107, %v3125
          %v3134 = vmul.f32 %v3110, %v3126
          %v3135 = vmul.f32 %v3115, %v3127
          %v3136 = vmul.f32 %v3118, %v3128
          %v3137 = vpack.c.bf16 %v3130, %v3129
          %v3138 = vpack.c.bf16 %v3132, %v3131
          %v3139 = vpack.c.bf16 %v3134, %v3133
          %v3140 = vpack.c.bf16 %v3136, %v3135
          %s3141 = smul.addr %s2621, 4
          %s3142 = scalar_lea.vmem [#allocation16], %s3141
          %v3143 = vld [vmem:[%s3142] sm:$0xf]
          %v3144 = vld [vmem:[%s3142 + $0x4] sm:$0xf]
          %v3147 = vunpack.c.l.b16 %v3143
          %v3148 = vunpack.c.l.b16 %v3144
          %v3149 = vpack.c.b16 %v3148, %v3147
          %v3152 = vsel %vm2877, %v3137, 0
          %v3155 = vsel %vm2877, %v3138, 0
          %v3158 = vsel %vm2877, %v3139, 0
          %v3161 = vsel %vm2877, %v3140, 0
          %3163 = vmatprep.subr.bf16.mxu0 0
          %3164 = vmatpush1.bf16.msra.mxu0 %v3149
          %3165 = vmatprep.subr.bf16.mxu0 0
          %3166 = vmatpush1.bf16.msra.mxu0 0
          %3167 = vmatprep.subr.bf16.mxu0 0
          %3168 = vmatpush1.bf16.msra.mxu0 0
          %3169 = vmatprep.subr.bf16.mxu0 0
          %3170 = vmatpush1.bf16.msra.mxu0 0
          %3171 = vmatprep.subr.bf16.mxu0 0
          %3172 = vmatpush1.bf16.msra.mxu0 0
          %3173 = vmatprep.subr.bf16.mxu0 0
          %3174 = vmatpush1.bf16.msra.mxu0 0
          %3175 = vmatprep.subr.bf16.mxu0 0
          %3176 = vmatpush1.bf16.msra.mxu0 0
          %3177 = vmatprep.subr.bf16.mxu0 0
          %3178 = vmatpush1.bf16.msra.mxu0 0
          %3179 = vmatprep.subr.bf16.mxu0 0
          %3180 = vmatpush1.bf16.msra.mxu0 0
          %3181 = vmatprep.subr.bf16.mxu0 0
          %3182 = vmatpush1.bf16.msra.mxu0 0
          %3183 = vmatprep.subr.bf16.mxu0 0
          %3184 = vmatpush1.bf16.msra.mxu0 0
          %3185 = vmatprep.subr.bf16.mxu0 0
          %3186 = vmatpush1.bf16.msra.mxu0 0
          %3187 = vmatprep.subr.bf16.mxu0 0
          %3188 = vmatpush1.bf16.msra.mxu0 0
          %3189 = vmatprep.subr.bf16.mxu0 0
          %3190 = vmatpush1.bf16.msra.mxu0 0
          %3191 = vmatprep.subr.bf16.mxu0 0
          %3192 = vmatpush1.bf16.msra.mxu0 0
          %3193 = vmatprep.subr.bf16.mxu0 0
          %3194 = vmatpush1.bf16.msra.mxu0 0
          %3195 = vmatprep.mubr.bf16.mxu0 0
          %3196 = vmatmul.mubr.bf16.gmra.mrb[0].mxu0 %v3152
          %v3197 = vpop.f32.mrb[0].mxu0
          %v3198 = vadd.f32 0.0, %v3197
          %v3199 = vpop.f32.mrb[0].mxu0
          %v3200 = vpop.f32.mrb[0].mxu0
          %v3201 = vadd.f32 0.0, %v3200
          %v3202 = vpop.f32.mrb[0].mxu0
          %3203 = vmatprep.mubr.bf16.mxu0 0
          %3204 = vmatmul.mubr.bf16.gmra.mrb[0].mxu0 %v3155
          %v3205 = vpop.f32.mrb[0].mxu0
          %v3206 = vadd.f32 0.0, %v3205
          %v3207 = vpop.f32.mrb[0].mxu0
          %v3208 = vpop.f32.mrb[0].mxu0
          %v3209 = vadd.f32 0.0, %v3208
          %v3210 = vpop.f32.mrb[0].mxu0
          %3211 = vmatprep.mubr.bf16.mxu0 0
          %3212 = vmatmul.mubr.bf16.gmra.mrb[0].mxu0 %v3158
          %v3213 = vpop.f32.mrb[0].mxu0
          %v3214 = vadd.f32 0.0, %v3213
          %v3215 = vpop.f32.mrb[0].mxu0
          %v3216 = vpop.f32.mrb[0].mxu0
          %v3217 = vadd.f32 0.0, %v3216
          %v3218 = vpop.f32.mrb[0].mxu0
          %3219 = vmatprep.mubr.bf16.mxu0 0
          %3220 = vmatmul.mubr.bf16.gmra.mrb[0].mxu0 %v3161
          %v3221 = vpop.f32.mrb[0].mxu0
          %v3222 = vadd.f32 0.0, %v3221
          %v3223 = vpop.f32.mrb[0].mxu0
          %v3224 = vpop.f32.mrb[0].mxu0
          %v3225 = vadd.f32 0.0, %v3224
          %v3226 = vpop.f32.mrb[0].mxu0
          %3227 = vdwg.mxu0
          %v3228 = vadd.f32 %v2613, %v3198
          %v3229 = vadd.f32 %v2614, %v3201
          %v3230 = vadd.f32 %v2615, %v3206
          %v3231 = vadd.f32 %v2616, %v3209
          %v3232 = vadd.f32 %v2617, %v3214
          %v3233 = vadd.f32 %v2618, %v3217
          %v3234 = vadd.f32 %v2619, %v3222
          %v3235 = vadd.f32 %v2620, %v3225
        $region212: #{spatial_transformer_forward.1} parent=143 // loop_footer
          %s2612 = sadd.s32 1, %s2608
        $region213: #{spatial_transformer_forward.1} parent=143 // loop_footer_branch
          %2607 = sbr.rel target = $region209
        $region214: #{spatial_transformer_forward.1} parent=143 // loop_exit
          _
        %v3237 = vlaneseq
        %v3238 = vshrl.u32 %v3237, 7
        %v3239 = vsub.s32 0, %v3238
        %v3240 = vrot.slane %v2602, %v3239
        %v3242 = vadd.f32 %v2613, %v3240
        %v3243 = vadd.f32 %v2614, %v3240
        %v3244 = vadd.f32 %v2615, %v3240
        %v3245 = vadd.f32 %v2616, %v3240
        %v3246 = vadd.f32 %v2617, %v3240
        %v3247 = vadd.f32 %v2618, %v3240
        %v3248 = vadd.f32 %v2619, %v3240
        %v3249 = vadd.f32 %v2620, %v3240
        %v3250 = vadd.f32 %v3242, %v2460
        %v3251 = vadd.f32 %v3243, %v2461
        %v3252 = vadd.f32 %v3244, %v2462
        %v3253 = vadd.f32 %v3245, %v2463
        %v3254 = vadd.f32 %v3246, %v2464
        %v3255 = vadd.f32 %v3247, %v2465
        %v3256 = vadd.f32 %v3248, %v2466
        %v3257 = vadd.f32 %v3249, %v2467
        %v3258 = vld [vmem:[%s43] sm:$0x1]
        %v3259 = vld [vmem:[%s45] sm:$0x1]
        %v3260 = vsel %vm1175, %v3250, 0.0
        %3261 = vadd.xlane.f32.xlu0 %v3260
        %v3262 = vpop.xlane.xlu0 %3261
        %v3263 = vsel %vm1175, %v3251, 0.0
        %3264 = vadd.xlane.f32.xlu0 %v3263
        %v3265 = vpop.xlane.xlu0 %3264
        %v3266 = vsel %vm1175, %v3252, 0.0
        %3267 = vadd.xlane.f32.xlu0 %v3266
        %v3268 = vpop.xlane.xlu0 %3267
        %v3269 = vsel %vm1175, %v3253, 0.0
        %3270 = vadd.xlane.f32.xlu0 %v3269
        %v3271 = vpop.xlane.xlu0 %3270
        %v3272 = vsel %vm1175, %v3254, 0.0
        %3273 = vadd.xlane.f32.xlu0 %v3272
        %v3274 = vpop.xlane.xlu0 %3273
        %v3275 = vsel %vm1175, %v3255, 0.0
        %3276 = vadd.xlane.f32.xlu0 %v3275
        %v3277 = vpop.xlane.xlu0 %3276
        %v3278 = vsel %vm1175, %v3256, 0.0
        %3279 = vadd.xlane.f32.xlu0 %v3278
        %v3280 = vpop.xlane.xlu0 %3279
        %v3281 = vsel %vm1175, %v3257, 0.0
        %3282 = vadd.xlane.f32.xlu0 %v3281
        %v3283 = vpop.xlane.xlu0 %3282
        %v3284 = vmul.f32 %v3262, %v1703
        %v3285 = vmul.f32 %v3265, %v1703
        %v3286 = vmul.f32 %v3268, %v1703
        %v3287 = vmul.f32 %v3271, %v1703
        %v3288 = vmul.f32 %v3274, %v1703
        %v3289 = vmul.f32 %v3277, %v1703
        %v3290 = vmul.f32 %v3280, %v1703
        %v3291 = vmul.f32 %v3283, %v1703
        %v3292 = vsub.f32 %v3250, %v3284
        %v3293 = vsub.f32 %v3251, %v3285
        %v3294 = vsub.f32 %v3252, %v3286
        %v3295 = vsub.f32 %v3253, %v3287
        %v3296 = vsub.f32 %v3254, %v3288
        %v3297 = vsub.f32 %v3255, %v3289
        %v3298 = vsub.f32 %v3256, %v3290
        %v3299 = vsub.f32 %v3257, %v3291
        %v3300 = vmul.f32 %v3292, %v3292
        %v3301 = vmul.f32 %v3293, %v3293
        %v3302 = vmul.f32 %v3294, %v3294
        %v3303 = vmul.f32 %v3295, %v3295
        %v3304 = vmul.f32 %v3296, %v3296
        %v3305 = vmul.f32 %v3297, %v3297
        %v3306 = vmul.f32 %v3298, %v3298
        %v3307 = vmul.f32 %v3299, %v3299
        %v3308 = vsel %vm1175, %v3300, 0.0
        %3309 = vadd.xlane.f32.xlu0 %v3308
        %v3310 = vpop.xlane.xlu0 %3309
        %v3311 = vsel %vm1175, %v3301, 0.0
        %3312 = vadd.xlane.f32.xlu0 %v3311
        %v3313 = vpop.xlane.xlu0 %3312
        %v3314 = vsel %vm1175, %v3302, 0.0
        %3315 = vadd.xlane.f32.xlu0 %v3314
        %v3316 = vpop.xlane.xlu0 %3315
        %v3317 = vsel %vm1175, %v3303, 0.0
        %3318 = vadd.xlane.f32.xlu0 %v3317
        %v3319 = vpop.xlane.xlu0 %3318
        %v3320 = vsel %vm1175, %v3304, 0.0
        %3321 = vadd.xlane.f32.xlu0 %v3320
        %v3322 = vpop.xlane.xlu0 %3321
        %v3323 = vsel %vm1175, %v3305, 0.0
        %3324 = vadd.xlane.f32.xlu0 %v3323
        %v3325 = vpop.xlane.xlu0 %3324
        %v3326 = vsel %vm1175, %v3306, 0.0
        %3327 = vadd.xlane.f32.xlu0 %v3326
        %v3328 = vpop.xlane.xlu0 %3327
        %v3329 = vsel %vm1175, %v3307, 0.0
        %3330 = vadd.xlane.f32.xlu0 %v3329
        %v3331 = vpop.xlane.xlu0 %3330
        %v3332 = vmul.f32 %v3310, %v1703
        %v3333 = vmul.f32 %v3313, %v1703
        %v3334 = vmul.f32 %v3316, %v1703
        %v3335 = vmul.f32 %v3319, %v1703
        %v3336 = vmul.f32 %v3322, %v1703
        %v3337 = vmul.f32 %v3325, %v1703
        %v3338 = vmul.f32 %v3328, %v1703
        %v3339 = vmul.f32 %v3331, %v1703
        %v3340 = vadd.f32 %v3332, 1e-05
        %v3341 = vadd.f32 %v3333, 1e-05
        %v3342 = vadd.f32 %v3334, 1e-05
        %v3343 = vadd.f32 %v3335, 1e-05
        %v3344 = vadd.f32 %v3336, 1e-05
        %v3345 = vadd.f32 %v3337, 1e-05
        %v3346 = vadd.f32 %v3338, 1e-05
        %v3347 = vadd.f32 %v3339, 1e-05
        %v3348 = vrsqrt.pop %v3340
        %v3349 = vrsqrt.pop %v3341
        %v3350 = vrsqrt.pop %v3342
        %v3351 = vrsqrt.pop %v3343
        %v3352 = vrsqrt.pop %v3344
        %v3353 = vrsqrt.pop %v3345
        %v3354 = vrsqrt.pop %v3346
        %v3355 = vrsqrt.pop %v3347
        %v3356 = vmul.f32 %v3292, %v3348
        %v3357 = vmul.f32 %v3293, %v3349
        %v3358 = vmul.f32 %v3294, %v3350
        %v3359 = vmul.f32 %v3295, %v3351
        %v3360 = vmul.f32 %v3296, %v3352
        %v3361 = vmul.f32 %v3297, %v3353
        %v3362 = vmul.f32 %v3298, %v3354
        %v3363 = vmul.f32 %v3299, %v3355
        %v3365 = vlaneseq
        %v3366 = vshrl.u32 %v3365, 7
        %v3367 = vsub.s32 0, %v3366
        %v3368 = vrot.slane %v3258, %v3367
        %v3370 = vmul.f32 %v3356, %v3368
        %v3371 = vmul.f32 %v3357, %v3368
        %v3372 = vmul.f32 %v3358, %v3368
        %v3373 = vmul.f32 %v3359, %v3368
        %v3374 = vmul.f32 %v3360, %v3368
        %v3375 = vmul.f32 %v3361, %v3368
        %v3376 = vmul.f32 %v3362, %v3368
        %v3377 = vmul.f32 %v3363, %v3368
        %v3379 = vlaneseq
        %v3380 = vshrl.u32 %v3379, 7
        %v3381 = vsub.s32 0, %v3380
        %v3382 = vrot.slane %v3259, %v3381
        %v3384 = vadd.f32 %v3370, %v3382
        %v3385 = vadd.f32 %v3371, %v3382
        %v3386 = vadd.f32 %v3372, %v3382
        %v3387 = vadd.f32 %v3373, %v3382
        %v3388 = vadd.f32 %v3374, %v3382
        %v3389 = vadd.f32 %v3375, %v3382
        %v3390 = vadd.f32 %v3376, %v3382
        %v3391 = vadd.f32 %v3377, %v3382
        %v3392 = vpack.c.bf16 %v3385, %v3384
        %v3393 = vpack.c.bf16 %v3387, %v3386
        %v3394 = vpack.c.bf16 %v3389, %v3388
        %v3395 = vpack.c.bf16 %v3391, %v3390
        %v3396 = vld [vmem:[%s47] sm:$0xf]
        %v3397 = vld [vmem:[%s47 + $0x4] sm:$0xf]
        %v3398 = vld [vmem:[%s47 + $0x8] sm:$0xf]
        %v3399 = vld [vmem:[%s47 + $0xc] sm:$0xf]
        %v3400 = vld [vmem:[#allocation19] sm:$0x1]
        %v3402 = vlaneseq
        %v3403 = vshrl.u32 %v3402, 7
        %v3404 = vsub.s32 0, %v3403
        %v3405 = vrot.slane %v3400, %v3404
        %v3411 = vunpack.c.l.b16 %v3396
        %v3412 = vunpack.c.l.b16 %v3397
        %v3413 = vunpack.c.l.b16 %v3398
        %v3414 = vunpack.c.l.b16 %v3399
        %v3415 = vpack.c.b16 %v3412, %v3411
        %v3416 = vpack.c.b16 %v3414, %v3413
        %v3420 = vsel %vm1175, %v3392, 0
        %v3423 = vsel %vm1175, %v3393, 0
        %v3426 = vsel %vm1175, %v3394, 0
        %v3429 = vsel %vm1175, %v3395, 0
        %3431 = vmatprep.subr.bf16.mxu0 0
        %3432 = vmatpush1.bf16.msra.mxu0 %v3415
        %3433 = vmatprep.subr.bf16.mxu0 0
        %3434 = vmatpush1.bf16.msra.mxu0 %v3416
        %3435 = vmatprep.subr.bf16.mxu0 0
        %3436 = vmatpush1.bf16.msra.mxu0 0
        %3437 = vmatprep.subr.bf16.mxu0 0
        %3438 = vmatpush1.bf16.msra.mxu0 0
        %3439 = vmatprep.subr.bf16.mxu0 0
        %3440 = vmatpush1.bf16.msra.mxu0 0
        %3441 = vmatprep.subr.bf16.mxu0 0
        %3442 = vmatpush1.bf16.msra.mxu0 0
        %3443 = vmatprep.subr.bf16.mxu0 0
        %3444 = vmatpush1.bf16.msra.mxu0 0
        %3445 = vmatprep.subr.bf16.mxu0 0
        %3446 = vmatpush1.bf16.msra.mxu0 0
        %3447 = vmatprep.subr.bf16.mxu0 0
        %3448 = vmatpush1.bf16.msra.mxu0 0
        %3449 = vmatprep.subr.bf16.mxu0 0
        %3450 = vmatpush1.bf16.msra.mxu0 0
        %3451 = vmatprep.subr.bf16.mxu0 0
        %3452 = vmatpush1.bf16.msra.mxu0 0
        %3453 = vmatprep.subr.bf16.mxu0 0
        %3454 = vmatpush1.bf16.msra.mxu0 0
        %3455 = vmatprep.subr.bf16.mxu0 0
        %3456 = vmatpush1.bf16.msra.mxu0 0
        %3457 = vmatprep.subr.bf16.mxu0 0
        %3458 = vmatpush1.bf16.msra.mxu0 0
        %3459 = vmatprep.subr.bf16.mxu0 0
        %3460 = vmatpush1.bf16.msra.mxu0 0
        %3461 = vmatprep.subr.bf16.mxu0 0
        %3462 = vmatpush1.bf16.msra.mxu0 0
        %3463 = vmatprep.mubr.bf16.mxu0 0
        %3464 = vmatmul.mubr.bf16.gmra.mrb[0].mxu0 %v3420
        %v3465 = vpop.f32.mrb[0].mxu0
        %v3466 = vadd.f32 %v3405, %v3465
        %v3467 = vpop.f32.mrb[0].mxu0
        %v3468 = vpop.f32.mrb[0].mxu0
        %v3469 = vadd.f32 %v3405, %v3468
        %v3470 = vpop.f32.mrb[0].mxu0
        %3471 = vmatprep.mubr.bf16.mxu0 0
        %3472 = vmatmul.mubr.bf16.gmra.mrb[0].mxu0 %v3423
        %v3473 = vpop.f32.mrb[0].mxu0
        %v3474 = vadd.f32 %v3405, %v3473
        %v3475 = vpop.f32.mrb[0].mxu0
        %v3476 = vpop.f32.mrb[0].mxu0
        %v3477 = vadd.f32 %v3405, %v3476
        %v3478 = vpop.f32.mrb[0].mxu0
        %3479 = vmatprep.mubr.bf16.mxu0 0
        %3480 = vmatmul.mubr.bf16.gmra.mrb[0].mxu0 %v3426
        %v3481 = vpop.f32.mrb[0].mxu0
        %v3482 = vadd.f32 %v3405, %v3481
        %v3483 = vpop.f32.mrb[0].mxu0
        %v3484 = vpop.f32.mrb[0].mxu0
        %v3485 = vadd.f32 %v3405, %v3484
        %v3486 = vpop.f32.mrb[0].mxu0
        %3487 = vmatprep.mubr.bf16.mxu0 0
        %3488 = vmatmul.mubr.bf16.gmra.mrb[0].mxu0 %v3429
        %v3489 = vpop.f32.mrb[0].mxu0
        %v3490 = vadd.f32 %v3405, %v3489
        %v3491 = vpop.f32.mrb[0].mxu0
        %v3492 = vpop.f32.mrb[0].mxu0
        %v3493 = vadd.f32 %v3405, %v3492
        %v3494 = vpop.f32.mrb[0].mxu0
        %3495 = vdwg.mxu0
        %v3496 = vld [vmem:[#allocation20] sm:$0xf]
        %v3497 = vld [vmem:[#allocation20 + $0x4] sm:$0xf]
        %v3498 = vld [vmem:[#allocation20 + $0x8] sm:$0xf]
        %v3499 = vld [vmem:[#allocation20 + $0xc] sm:$0xf]
        %v3500 = vld [vmem:[#allocation22] sm:$0x1]
        %v3502 = vlaneseq
        %v3503 = vshrl.u32 %v3502, 7
        %v3504 = vsub.s32 0, %v3503
        %v3505 = vrot.slane %v3500, %v3504
        %v3511 = vunpack.c.l.b16 %v3496
        %v3512 = vunpack.c.l.b16 %v3497
        %v3513 = vunpack.c.l.b16 %v3498
        %v3514 = vunpack.c.l.b16 %v3499
        %v3515 = vpack.c.b16 %v3512, %v3511
        %v3516 = vpack.c.b16 %v3514, %v3513
        %3519 = vmatprep.subr.bf16.mxu0 0
        %3520 = vmatpush1.bf16.msra.mxu0 %v3515
        %3521 = vmatprep.subr.bf16.mxu0 0
        %3522 = vmatpush1.bf16.msra.mxu0 %v3516
        %3523 = vmatprep.subr.bf16.mxu0 0
        %3524 = vmatpush1.bf16.msra.mxu0 0
        %3525 = vmatprep.subr.bf16.mxu0 0
        %3526 = vmatpush1.bf16.msra.mxu0 0
        %3527 = vmatprep.subr.bf16.mxu0 0
        %3528 = vmatpush1.bf16.msra.mxu0 0
        %3529 = vmatprep.subr.bf16.mxu0 0
        %3530 = vmatpush1.bf16.msra.mxu0 0
        %3531 = vmatprep.subr.bf16.mxu0 0
        %3532 = vmatpush1.bf16.msra.mxu0 0
        %3533 = vmatprep.subr.bf16.mxu0 0
        %3534 = vmatpush1.bf16.msra.mxu0 0
        %3535 = vmatprep.subr.bf16.mxu0 0
        %3536 = vmatpush1.bf16.msra.mxu0 0
        %3537 = vmatprep.subr.bf16.mxu0 0
        %3538 = vmatpush1.bf16.msra.mxu0 0
        %3539 = vmatprep.subr.bf16.mxu0 0
        %3540 = vmatpush1.bf16.msra.mxu0 0
        %3541 = vmatprep.subr.bf16.mxu0 0
        %3542 = vmatpush1.bf16.msra.mxu0 0
        %3543 = vmatprep.subr.bf16.mxu0 0
        %3544 = vmatpush1.bf16.msra.mxu0 0
        %3545 = vmatprep.subr.bf16.mxu0 0
        %3546 = vmatpush1.bf16.msra.mxu0 0
        %3547 = vmatprep.subr.bf16.mxu0 0
        %3548 = vmatpush1.bf16.msra.mxu0 0
        %3549 = vmatprep.subr.bf16.mxu0 0
        %3550 = vmatpush1.bf16.msra.mxu0 0
        %3551 = vmatprep.mubr.bf16.mxu0 0
        %3552 = vmatmul.mubr.bf16.gmra.mrb[0].mxu0 %v3420
        %v3553 = vpop.f32.mrb[0].mxu0
        %v3554 = vadd.f32 %v3505, %v3553
        %v3555 = vpop.f32.mrb[0].mxu0
        %v3556 = vpop.f32.mrb[0].mxu0
        %v3557 = vadd.f32 %v3505, %v3556
        %v3558 = vpop.f32.mrb[0].mxu0
        %3559 = vmatprep.mubr.bf16.mxu0 0
        %3560 = vmatmul.mubr.bf16.gmra.mrb[0].mxu0 %v3423
        %v3561 = vpop.f32.mrb[0].mxu0
        %v3562 = vadd.f32 %v3505, %v3561
        %v3563 = vpop.f32.mrb[0].mxu0
        %v3564 = vpop.f32.mrb[0].mxu0
        %v3565 = vadd.f32 %v3505, %v3564
        %v3566 = vpop.f32.mrb[0].mxu0
        %3567 = vmatprep.mubr.bf16.mxu0 0
        %3568 = vmatmul.mubr.bf16.gmra.mrb[0].mxu0 %v3426
        %v3569 = vpop.f32.mrb[0].mxu0
        %v3570 = vadd.f32 %v3505, %v3569
        %v3571 = vpop.f32.mrb[0].mxu0
        %v3572 = vpop.f32.mrb[0].mxu0
        %v3573 = vadd.f32 %v3505, %v3572
        %v3574 = vpop.f32.mrb[0].mxu0
        %3575 = vmatprep.mubr.bf16.mxu0 0
        %3576 = vmatmul.mubr.bf16.gmra.mrb[0].mxu0 %v3429
        %v3577 = vpop.f32.mrb[0].mxu0
        %v3578 = vadd.f32 %v3505, %v3577
        %v3579 = vpop.f32.mrb[0].mxu0
        %v3580 = vpop.f32.mrb[0].mxu0
        %v3581 = vadd.f32 %v3505, %v3580
        %v3582 = vpop.f32.mrb[0].mxu0
        %3583 = vdwg.mxu0
        %v3584 = vmul.f32 %v3554, 0.5
        %v3585 = vmul.f32 %v3557, 0.5
        %v3586 = vmul.f32 %v3562, 0.5
        %v3587 = vmul.f32 %v3565, 0.5
        %v3588 = vmul.f32 %v3570, 0.5
        %v3589 = vmul.f32 %v3573, 0.5
        %v3590 = vmul.f32 %v3578, 0.5
        %v3591 = vmul.f32 %v3581, 0.5
        %v3592 = vmul.f32 %v3554, 0.70710677
        %v3593 = vmul.f32 %v3557, 0.70710677
        %v3594 = vmul.f32 %v3562, 0.70710677
        %v3595 = vmul.f32 %v3565, 0.70710677
        %v3596 = vmul.f32 %v3570, 0.70710677
        %v3597 = vmul.f32 %v3573, 0.70710677
        %v3598 = vmul.f32 %v3578, 0.70710677
        %v3599 = vmul.f32 %v3581, 0.70710677
        %vm3600 = vcmp.ge.f32.partialorder %v3592, 0.0
        %vm3601 = vcmp.ge.f32.partialorder %v3593, 0.0
        %vm3602 = vcmp.ge.f32.partialorder %v3594, 0.0
        %vm3603 = vcmp.ge.f32.partialorder %v3595, 0.0
        %vm3604 = vcmp.ge.f32.partialorder %v3596, 0.0
        %vm3605 = vcmp.ge.f32.partialorder %v3597, 0.0
        %vm3606 = vcmp.ge.f32.partialorder %v3598, 0.0
        %vm3607 = vcmp.ge.f32.partialorder %v3599, 0.0
        %v3608 = vsel %vm3600, 1.0, -1.0
        %v3609 = vsel %vm3601, 1.0, -1.0
        %v3610 = vsel %vm3602, 1.0, -1.0
        %v3611 = vsel %vm3603, 1.0, -1.0
        %v3612 = vsel %vm3604, 1.0, -1.0
        %v3613 = vsel %vm3605, 1.0, -1.0
        %v3614 = vsel %vm3606, 1.0, -1.0
        %v3615 = vsel %vm3607, 1.0, -1.0
        %v3616 = vand.u32 2147483647, %v3592
        %v3617 = vand.u32 2147483647, %v3593
        %v3618 = vand.u32 2147483647, %v3594
        %v3619 = vand.u32 2147483647, %v3595
        %v3620 = vand.u32 2147483647, %v3596
        %v3621 = vand.u32 2147483647, %v3597
        %v3622 = vand.u32 2147483647, %v3598
        %v3623 = vand.u32 2147483647, %v3599
        %v3624 = vmul.f32 %v3616, 0.3275911
        %v3625 = vmul.f32 %v3617, 0.3275911
        %v3626 = vmul.f32 %v3618, 0.3275911
        %v3627 = vmul.f32 %v3619, 0.3275911
        %v3628 = vmul.f32 %v3620, 0.3275911
        %v3629 = vmul.f32 %v3621, 0.3275911
        %v3630 = vmul.f32 %v3622, 0.3275911
        %v3631 = vmul.f32 %v3623, 0.3275911
        %v3632 = vadd.f32 %v3624, 1.0
        %v3633 = vadd.f32 %v3625, 1.0
        %v3634 = vadd.f32 %v3626, 1.0
        %v3635 = vadd.f32 %v3627, 1.0
        %v3636 = vadd.f32 %v3628, 1.0
        %v3637 = vadd.f32 %v3629, 1.0
        %v3638 = vadd.f32 %v3630, 1.0
        %v3639 = vadd.f32 %v3631, 1.0
        %v3640 = vrcp.pop %v3632
        %v3641 = vrcp.pop %v3633
        %v3642 = vrcp.pop %v3634
        %v3643 = vrcp.pop %v3635
        %v3644 = vrcp.pop %v3636
        %v3645 = vrcp.pop %v3637
        %v3646 = vrcp.pop %v3638
        %v3647 = vrcp.pop %v3639
        %v3648 = vmul.f32 %v3640, 1.0614054
        %v3649 = vmul.f32 %v3641, 1.0614054
        %v3650 = vmul.f32 %v3642, 1.0614054
        %v3651 = vmul.f32 %v3643, 1.0614054
        %v3652 = vmul.f32 %v3644, 1.0614054
        %v3653 = vmul.f32 %v3645, 1.0614054
        %v3654 = vmul.f32 %v3646, 1.0614054
        %v3655 = vmul.f32 %v3647, 1.0614054
        %v3656 = vadd.f32 %v3648, -1.4531521
        %v3657 = vadd.f32 %v3649, -1.4531521
        %v3658 = vadd.f32 %v3650, -1.4531521
        %v3659 = vadd.f32 %v3651, -1.4531521
        %v3660 = vadd.f32 %v3652, -1.4531521
        %v3661 = vadd.f32 %v3653, -1.4531521
        %v3662 = vadd.f32 %v3654, -1.4531521
        %v3663 = vadd.f32 %v3655, -1.4531521
        %v3664 = vmul.f32 %v3656, %v3640
        %v3665 = vmul.f32 %v3657, %v3641
        %v3666 = vmul.f32 %v3658, %v3642
        %v3667 = vmul.f32 %v3659, %v3643
        %v3668 = vmul.f32 %v3660, %v3644
        %v3669 = vmul.f32 %v3661, %v3645
        %v3670 = vmul.f32 %v3662, %v3646
        %v3671 = vmul.f32 %v3663, %v3647
        %v3672 = vadd.f32 %v3664, 1.4214138
        %v3673 = vadd.f32 %v3665, 1.4214138
        %v3674 = vadd.f32 %v3666, 1.4214138
        %v3675 = vadd.f32 %v3667, 1.4214138
        %v3676 = vadd.f32 %v3668, 1.4214138
        %v3677 = vadd.f32 %v3669, 1.4214138
        %v3678 = vadd.f32 %v3670, 1.4214138
        %v3679 = vadd.f32 %v3671, 1.4214138
        %v3680 = vmul.f32 %v3672, %v3640
        %v3681 = vmul.f32 %v3673, %v3641
        %v3682 = vmul.f32 %v3674, %v3642
        %v3683 = vmul.f32 %v3675, %v3643
        %v3684 = vmul.f32 %v3676, %v3644
        %v3685 = vmul.f32 %v3677, %v3645
        %v3686 = vmul.f32 %v3678, %v3646
        %v3687 = vmul.f32 %v3679, %v3647
        %v3688 = vadd.f32 %v3680, -0.28449672
        %v3689 = vadd.f32 %v3681, -0.28449672
        %v3690 = vadd.f32 %v3682, -0.28449672
        %v3691 = vadd.f32 %v3683, -0.28449672
        %v3692 = vadd.f32 %v3684, -0.28449672
        %v3693 = vadd.f32 %v3685, -0.28449672
        %v3694 = vadd.f32 %v3686, -0.28449672
        %v3695 = vadd.f32 %v3687, -0.28449672
        %v3696 = vmul.f32 %v3688, %v3640
        %v3697 = vmul.f32 %v3689, %v3641
        %v3698 = vmul.f32 %v3690, %v3642
        %v3699 = vmul.f32 %v3691, %v3643
        %v3700 = vmul.f32 %v3692, %v3644
        %v3701 = vmul.f32 %v3693, %v3645
        %v3702 = vmul.f32 %v3694, %v3646
        %v3703 = vmul.f32 %v3695, %v3647
        %v3704 = vadd.f32 %v3696, 0.2548296
        %v3705 = vadd.f32 %v3697, 0.2548296
        %v3706 = vadd.f32 %v3698, 0.2548296
        %v3707 = vadd.f32 %v3699, 0.2548296
        %v3708 = vadd.f32 %v3700, 0.2548296
        %v3709 = vadd.f32 %v3701, 0.2548296
        %v3710 = vadd.f32 %v3702, 0.2548296
        %v3711 = vadd.f32 %v3703, 0.2548296
        %v3712 = vmul.f32 %v3704, %v3640
        %v3713 = vmul.f32 %v3705, %v3641
        %v3714 = vmul.f32 %v3706, %v3642
        %v3715 = vmul.f32 %v3707, %v3643
        %v3716 = vmul.f32 %v3708, %v3644
        %v3717 = vmul.f32 %v3709, %v3645
        %v3718 = vmul.f32 %v3710, %v3646
        %v3719 = vmul.f32 %v3711, %v3647
        %v3720 = vsub.f32 0.0, %v3616
        %v3721 = vsub.f32 0.0, %v3617
        %v3722 = vsub.f32 0.0, %v3618
        %v3723 = vsub.f32 0.0, %v3619
        %v3724 = vsub.f32 0.0, %v3620
        %v3725 = vsub.f32 0.0, %v3621
        %v3726 = vsub.f32 0.0, %v3622
        %v3727 = vsub.f32 0.0, %v3623
        %v3728 = vmul.f32 %v3720, %v3616
        %v3729 = vmul.f32 %v3721, %v3617
        %v3730 = vmul.f32 %v3722, %v3618
        %v3731 = vmul.f32 %v3723, %v3619
        %v3732 = vmul.f32 %v3724, %v3620
        %v3733 = vmul.f32 %v3725, %v3621
        %v3734 = vmul.f32 %v3726, %v3622
        %v3735 = vmul.f32 %v3727, %v3623
        %v3736 = vmul.f32 %v3728, 1.442695
        %v3737 = vpow.pop %v3736
        %v3738 = vmul.f32 %v3729, 1.442695
        %v3739 = vpow.pop %v3738
        %v3740 = vmul.f32 %v3730, 1.442695
        %v3741 = vpow.pop %v3740
        %v3742 = vmul.f32 %v3731, 1.442695
        %v3743 = vpow.pop %v3742
        %v3744 = vmul.f32 %v3732, 1.442695
        %v3745 = vpow.pop %v3744
        %v3746 = vmul.f32 %v3733, 1.442695
        %v3747 = vpow.pop %v3746
        %v3748 = vmul.f32 %v3734, 1.442695
        %v3749 = vpow.pop %v3748
        %v3750 = vmul.f32 %v3735, 1.442695
        %v3751 = vpow.pop %v3750
        %v3752 = vmul.f32 %v3712, %v3737
        %v3753 = vmul.f32 %v3713, %v3739
        %v3754 = vmul.f32 %v3714, %v3741
        %v3755 = vmul.f32 %v3715, %v3743
        %v3756 = vmul.f32 %v3716, %v3745
        %v3757 = vmul.f32 %v3717, %v3747
        %v3758 = vmul.f32 %v3718, %v3749
        %v3759 = vmul.f32 %v3719, %v3751
        %v3760 = vsub.f32 1.0, %v3752
        %v3761 = vsub.f32 1.0, %v3753
        %v3762 = vsub.f32 1.0, %v3754
        %v3763 = vsub.f32 1.0, %v3755
        %v3764 = vsub.f32 1.0, %v3756
        %v3765 = vsub.f32 1.0, %v3757
        %v3766 = vsub.f32 1.0, %v3758
        %v3767 = vsub.f32 1.0, %v3759
        %v3768 = vmul.f32 %v3608, %v3760
        %v3769 = vmul.f32 %v3609, %v3761
        %v3770 = vmul.f32 %v3610, %v3762
        %v3771 = vmul.f32 %v3611, %v3763
        %v3772 = vmul.f32 %v3612, %v3764
        %v3773 = vmul.f32 %v3613, %v3765
        %v3774 = vmul.f32 %v3614, %v3766
        %v3775 = vmul.f32 %v3615, %v3767
        %v3776 = vadd.f32 %v3768, 1.0
        %v3777 = vadd.f32 %v3769, 1.0
        %v3778 = vadd.f32 %v3770, 1.0
        %v3779 = vadd.f32 %v3771, 1.0
        %v3780 = vadd.f32 %v3772, 1.0
        %v3781 = vadd.f32 %v3773, 1.0
        %v3782 = vadd.f32 %v3774, 1.0
        %v3783 = vadd.f32 %v3775, 1.0
        %v3784 = vmul.f32 %v3584, %v3776
        %v3785 = vmul.f32 %v3585, %v3777
        %v3786 = vmul.f32 %v3586, %v3778
        %v3787 = vmul.f32 %v3587, %v3779
        %v3788 = vmul.f32 %v3588, %v3780
        %v3789 = vmul.f32 %v3589, %v3781
        %v3790 = vmul.f32 %v3590, %v3782
        %v3791 = vmul.f32 %v3591, %v3783
        %v3792 = vmul.f32 %v3466, %v3784
        %v3793 = vmul.f32 %v3469, %v3785
        %v3794 = vmul.f32 %v3474, %v3786
        %v3795 = vmul.f32 %v3477, %v3787
        %v3796 = vmul.f32 %v3482, %v3788
        %v3797 = vmul.f32 %v3485, %v3789
        %v3798 = vmul.f32 %v3490, %v3790
        %v3799 = vmul.f32 %v3493, %v3791
        %v3800 = vpack.c.bf16 %v3793, %v3792
        %v3801 = vpack.c.bf16 %v3795, %v3794
        %v3802 = vpack.c.bf16 %v3797, %v3796
        %v3803 = vpack.c.bf16 %v3799, %v3798
        %v3804 = vld [vmem:[%s55] sm:$0xf]
        %v3805 = vld [vmem:[%s55 + $0x4] sm:$0xf]
        %v3806 = vld [vmem:[%s55 + $0x8] sm:$0xf]
        %v3807 = vld [vmem:[%s55 + $0xc] sm:$0xf]
        %v3808 = vld [vmem:[%s55 + $0x10] sm:$0xf]
        %v3809 = vld [vmem:[%s55 + $0x14] sm:$0xf]
        %v3810 = vld [vmem:[%s55 + $0x18] sm:$0xf]
        %v3811 = vld [vmem:[%s55 + $0x1c] sm:$0xf]
        %v3812 = vld [vmem:[%s55 + $0x20] sm:$0xf]
        %v3813 = vld [vmem:[%s55 + $0x24] sm:$0xf]
        %v3814 = vld [vmem:[%s55 + $0x28] sm:$0xf]
        %v3815 = vld [vmem:[%s55 + $0x2c] sm:$0xf]
        %v3816 = vld [vmem:[%s55 + $0x30] sm:$0xf]
        %v3817 = vld [vmem:[%s55 + $0x34] sm:$0xf]
        %v3818 = vld [vmem:[%s55 + $0x38] sm:$0xf]
        %v3819 = vld [vmem:[%s55 + $0x3c] sm:$0xf]
        %v3820 = vld [vmem:[#allocation23] sm:$0x1]
        %v3822 = vlaneseq
        %v3823 = vshrl.u32 %v3822, 7
        %v3824 = vsub.s32 0, %v3823
        %v3825 = vrot.slane %v3820, %v3824
        %v3843 = vunpack.c.l.b16 %v3804
        %v3844 = vunpack.c.l.b16 %v3805
        %v3845 = vunpack.c.l.b16 %v3806
        %v3846 = vunpack.c.l.b16 %v3807
        %v3847 = vunpack.c.l.b16 %v3808
        %v3848 = vunpack.c.l.b16 %v3809
        %v3849 = vunpack.c.l.b16 %v3810
        %v3850 = vunpack.c.l.b16 %v3811
        %v3851 = vunpack.c.l.b16 %v3812
        %v3852 = vunpack.c.l.b16 %v3813
        %v3853 = vunpack.c.l.b16 %v3814
        %v3854 = vunpack.c.l.b16 %v3815
        %v3855 = vunpack.c.l.b16 %v3816
        %v3856 = vunpack.c.l.b16 %v3817
        %v3857 = vunpack.c.l.b16 %v3818
        %v3858 = vunpack.c.l.b16 %v3819
        %v3859 = vpack.c.b16 %v3844, %v3843
        %v3860 = vpack.c.b16 %v3846, %v3845
        %v3861 = vpack.c.b16 %v3848, %v3847
        %v3862 = vpack.c.b16 %v3850, %v3849
        %v3863 = vpack.c.b16 %v3852, %v3851
        %v3864 = vpack.c.b16 %v3854, %v3853
        %v3865 = vpack.c.b16 %v3856, %v3855
        %v3866 = vpack.c.b16 %v3858, %v3857
        %3875 = vmatprep.subr.bf16.mxu0 0
        %3876 = vmatpush1.bf16.msra.mxu0 %v3859
        %3877 = vmatprep.subr.bf16.mxu0 0
        %3878 = vmatpush1.bf16.msra.mxu0 %v3860
        %3879 = vmatprep.subr.bf16.mxu0 0
        %3880 = vmatpush1.bf16.msra.mxu0 %v3861
        %3881 = vmatprep.subr.bf16.mxu0 0
        %3882 = vmatpush1.bf16.msra.mxu0 %v3862
        %3883 = vmatprep.subr.bf16.mxu0 0
        %3884 = vmatpush1.bf16.msra.mxu0 %v3863
        %3885 = vmatprep.subr.bf16.mxu0 0
        %3886 = vmatpush1.bf16.msra.mxu0 %v3864
        %3887 = vmatprep.subr.bf16.mxu0 0
        %3888 = vmatpush1.bf16.msra.mxu0 %v3865
        %3889 = vmatprep.subr.bf16.mxu0 0
        %3890 = vmatpush1.bf16.msra.mxu0 %v3866
        %3891 = vmatprep.subr.bf16.mxu0 0
        %3892 = vmatpush1.bf16.msra.mxu0 0
        %3893 = vmatprep.subr.bf16.mxu0 0
        %3894 = vmatpush1.bf16.msra.mxu0 0
        %3895 = vmatprep.subr.bf16.mxu0 0
        %3896 = vmatpush1.bf16.msra.mxu0 0
        %3897 = vmatprep.subr.bf16.mxu0 0
        %3898 = vmatpush1.bf16.msra.mxu0 0
        %3899 = vmatprep.subr.bf16.mxu0 0
        %3900 = vmatpush1.bf16.msra.mxu0 0
        %3901 = vmatprep.subr.bf16.mxu0 0
        %3902 = vmatpush1.bf16.msra.mxu0 0
        %3903 = vmatprep.subr.bf16.mxu0 0
        %3904 = vmatpush1.bf16.msra.mxu0 0
        %3905 = vmatprep.subr.bf16.mxu0 0
        %3906 = vmatpush1.bf16.msra.mxu0 0
        %3907 = vmatprep.mubr.bf16.mxu0 0
        %3908 = vmatmul.mubr.bf16.gmra.mrb[0].mxu0 %v3800
        %v3909 = vpop.f32.mrb[0].mxu0
        %v3910 = vadd.f32 %v3825, %v3909
        %v3911 = vpop.f32.mrb[0].mxu0
        %v3912 = vpop.f32.mrb[0].mxu0
        %v3913 = vadd.f32 %v3825, %v3912
        %v3914 = vpop.f32.mrb[0].mxu0
        %3915 = vmatprep.mubr.bf16.mxu0 0
        %3916 = vmatmul.mubr.bf16.gmra.mrb[0].mxu0 %v3801
        %v3917 = vpop.f32.mrb[0].mxu0
        %v3918 = vadd.f32 %v3825, %v3917
        %v3919 = vpop.f32.mrb[0].mxu0
        %v3920 = vpop.f32.mrb[0].mxu0
        %v3921 = vadd.f32 %v3825, %v3920
        %v3922 = vpop.f32.mrb[0].mxu0
        %3923 = vmatprep.mubr.bf16.mxu0 0
        %3924 = vmatmul.mubr.bf16.gmra.mrb[0].mxu0 %v3802
        %v3925 = vpop.f32.mrb[0].mxu0
        %v3926 = vadd.f32 %v3825, %v3925
        %v3927 = vpop.f32.mrb[0].mxu0
        %v3928 = vpop.f32.mrb[0].mxu0
        %v3929 = vadd.f32 %v3825, %v3928
        %v3930 = vpop.f32.mrb[0].mxu0
        %3931 = vmatprep.mubr.bf16.mxu0 0
        %3932 = vmatmul.mubr.bf16.gmra.mrb[0].mxu0 %v3803
        %v3933 = vpop.f32.mrb[0].mxu0
        %v3934 = vadd.f32 %v3825, %v3933
        %v3935 = vpop.f32.mrb[0].mxu0
        %v3936 = vpop.f32.mrb[0].mxu0
        %v3937 = vadd.f32 %v3825, %v3936
        %v3938 = vpop.f32.mrb[0].mxu0
        %3939 = vdwg.mxu0
        %v3940 = vadd.f32 %v3910, %v3250
        %v3941 = vadd.f32 %v3913, %v3251
        %v3942 = vadd.f32 %v3918, %v3252
        %v3943 = vadd.f32 %v3921, %v3253
        %v3944 = vadd.f32 %v3926, %v3254
        %v3945 = vadd.f32 %v3929, %v3255
        %v3946 = vadd.f32 %v3934, %v3256
        %v3947 = vadd.f32 %v3937, %v3257
        %v3948 = vpack.c.bf16 %v3941, %v3940
        %v3949 = vpack.c.bf16 %v3943, %v3942
        %v3950 = vpack.c.bf16 %v3945, %v3944
        %v3951 = vpack.c.bf16 %v3947, %v3946
        %v3952 = vld [vmem:[%s59] sm:$0xf]
        %v3953 = vld [vmem:[%s59 + $0x4] sm:$0xf]
        %v3954 = vld [vmem:[%s59 + $0x8] sm:$0xf]
        %v3955 = vld [vmem:[%s59 + $0xc] sm:$0xf]
        %v3956 = vld [vmem:[%s61] sm:$0x1]
        %v3958 = vlaneseq
        %v3959 = vshrl.u32 %v3958, 7
        %v3960 = vsub.s32 0, %v3959
        %v3961 = vrot.slane %v3956, %v3960
        %v3967 = vunpack.c.l.b16 %v3952
        %v3968 = vunpack.c.l.b16 %v3953
        %v3969 = vunpack.c.l.b16 %v3954
        %v3970 = vunpack.c.l.b16 %v3955
        %v3971 = vpack.c.b16 %v3968, %v3967
        %v3972 = vpack.c.b16 %v3970, %v3969
        %v3976 = vsel %vm1175, %v3948, 0
        %v3979 = vsel %vm1175, %v3949, 0
        %v3982 = vsel %vm1175, %v3950, 0
        %v3985 = vsel %vm1175, %v3951, 0
        %3987 = vmatprep.subr.bf16.mxu0 0
        %3988 = vmatpush1.bf16.msra.mxu0 %v3971
        %3989 = vmatprep.subr.bf16.mxu0 0
        %3990 = vmatpush1.bf16.msra.mxu0 %v3972
        %3991 = vmatprep.subr.bf16.mxu0 0
        %3992 = vmatpush1.bf16.msra.mxu0 0
        %3993 = vmatprep.subr.bf16.mxu0 0
        %3994 = vmatpush1.bf16.msra.mxu0 0
        %3995 = vmatprep.subr.bf16.mxu0 0
        %3996 = vmatpush1.bf16.msra.mxu0 0
        %3997 = vmatprep.subr.bf16.mxu0 0
        %3998 = vmatpush1.bf16.msra.mxu0 0
        %3999 = vmatprep.subr.bf16.mxu0 0
        %4000 = vmatpush1.bf16.msra.mxu0 0
        %4001 = vmatprep.subr.bf16.mxu0 0
        %4002 = vmatpush1.bf16.msra.mxu0 0
        %4003 = vmatprep.subr.bf16.mxu0 0
        %4004 = vmatpush1.bf16.msra.mxu0 0
        %4005 = vmatprep.subr.bf16.mxu0 0
        %4006 = vmatpush1.bf16.msra.mxu0 0
        %4007 = vmatprep.subr.bf16.mxu0 0
        %4008 = vmatpush1.bf16.msra.mxu0 0
        %4009 = vmatprep.subr.bf16.mxu0 0
        %4010 = vmatpush1.bf16.msra.mxu0 0
        %4011 = vmatprep.subr.bf16.mxu0 0
        %4012 = vmatpush1.bf16.msra.mxu0 0
        %4013 = vmatprep.subr.bf16.mxu0 0
        %4014 = vmatpush1.bf16.msra.mxu0 0
        %4015 = vmatprep.subr.bf16.mxu0 0
        %4016 = vmatpush1.bf16.msra.mxu0 0
        %4017 = vmatprep.subr.bf16.mxu0 0
        %4018 = vmatpush1.bf16.msra.mxu0 0
        %4019 = vmatprep.mubr.bf16.mxu0 0
        %4020 = vmatmul.mubr.bf16.gmra.mrb[0].mxu0 %v3976
        %v4021 = vpop.f32.mrb[0].mxu0
        %v4022 = vadd.f32 %v3961, %v4021
        %v4023 = vpop.f32.mrb[0].mxu0
        %v4024 = vpop.f32.mrb[0].mxu0
        %v4025 = vadd.f32 %v3961, %v4024
        %v4026 = vpop.f32.mrb[0].mxu0
        %4027 = vmatprep.mubr.bf16.mxu0 0
        %4028 = vmatmul.mubr.bf16.gmra.mrb[0].mxu0 %v3979
        %v4029 = vpop.f32.mrb[0].mxu0
        %v4030 = vadd.f32 %v3961, %v4029
        %v4031 = vpop.f32.mrb[0].mxu0
        %v4032 = vpop.f32.mrb[0].mxu0
        %v4033 = vadd.f32 %v3961, %v4032
        %v4034 = vpop.f32.mrb[0].mxu0
        %4035 = vmatprep.mubr.bf16.mxu0 0
        %4036 = vmatmul.mubr.bf16.gmra.mrb[0].mxu0 %v3982
        %v4037 = vpop.f32.mrb[0].mxu0
        %v4038 = vadd.f32 %v3961, %v4037
        %v4039 = vpop.f32.mrb[0].mxu0
        %v4040 = vpop.f32.mrb[0].mxu0
        %v4041 = vadd.f32 %v3961, %v4040
        %v4042 = vpop.f32.mrb[0].mxu0
        %4043 = vmatprep.mubr.bf16.mxu0 0
        %4044 = vmatmul.mubr.bf16.gmra.mrb[0].mxu0 %v3985
        %v4045 = vpop.f32.mrb[0].mxu0
        %v4046 = vadd.f32 %v3961, %v4045
        %v4047 = vpop.f32.mrb[0].mxu0
        %v4048 = vpop.f32.mrb[0].mxu0
        %v4049 = vadd.f32 %v3961, %v4048
        %v4050 = vpop.f32.mrb[0].mxu0
        %4051 = vdwg.mxu0
        %v4052 = vadd.f32 %v4022, %v1157
        %v4053 = vadd.f32 %v4025, %v1158
        %v4054 = vadd.f32 %v4030, %v1159
        %v4055 = vadd.f32 %v4033, %v1160
        %v4056 = vadd.f32 %v4038, %v1161
        %v4057 = vadd.f32 %v4041, %v1162
        %v4058 = vadd.f32 %v4046, %v1163
        %v4059 = vadd.f32 %v4049, %v1164
        %4060 = vst.msk [vmem:[%s1155] sm:$0xff] %vm1175, %v4052
        %4061 = vst.msk [vmem:[%s1155 + $0x8] sm:$0xff] %vm1175, %v4053
        %4062 = vst.msk [vmem:[%s1155 + $0x10] sm:$0xff] %vm1175, %v4054
        %4063 = vst.msk [vmem:[%s1155 + $0x18] sm:$0xff] %vm1175, %v4055
        %4064 = vst.msk [vmem:[%s1155 + $0x20] sm:$0xff] %vm1175, %v4056
        %4065 = vst.msk [vmem:[%s1155 + $0x28] sm:$0xff] %vm1175, %v4057
        %4066 = vst.msk [vmem:[%s1155 + $0x30] sm:$0xff] %vm1175, %v4058
        %4067 = vst.msk [vmem:[%s1155 + $0x38] sm:$0xff] %vm1175, %v4059
        %s4068 = sand.u32 %s751, 1
        %s4069 = scalar_lea.sflag [#allocation4], %s4068
        %s4070 = sand.u32 %s751, 1
        %s4071 = smul.addr %s4070, 64
        %s4072 = scalar_lea.vmem [#allocation25], %s4071
        // Predicated region
        $region215: #{spatial_transformer_forward.1} parent=143 // pred_check
          %p4073 = pneg %p761
        $region216: #{spatial_transformer_forward.1} parent=143 // pred_check_branch
          %4075 = sbr.rel (%p4073) target = $region218
        $region217: #{spatial_transformer_forward.1} parent=143 // pred_region
          %s4077 = ssub.s32 1024, 1024
          %4078 = vsyncadd %s4069, %s4077
          %s4079 = smul.addr %s87, 8
          %s4080 = smul.addr %s4079, 128
          %s4081 = scalar_lea.hbm %s63, %s4080
          %s4082 = sshll.u32 %s4072, 4
          %s4083 = int_to_ptr.vmem [resolvable:$true] %s4082
          %4088 = dma.vmem_to_hbm [thread:$0]  %s4083, 1024, %s4081, %s4069, 128, 128, 8
        $region218: #{spatial_transformer_forward.1} parent=143 // pred_fallthru
          _
      $region144: #{spatial_transformer_forward.1} parent=5 // pred_fallthru
        _
      %p4089 = scmp.le.s32.totalorder 2, %s82
      // Predicated region
      $region219: #{spatial_transformer_forward.1} parent=5 // pred_check
        %p4090 = pneg %p4089
      $region220: #{spatial_transformer_forward.1} parent=5 // pred_check_branch
        %4092 = sbr.rel (%p4090) target = $region222
      $region221: #{spatial_transformer_forward.1} parent=5 // pred_region
        %s4093 = ssub.s32 %s82, 2
        // Predicated region
        $region223: #{spatial_transformer_forward.1} parent=221 // pred_check
          %p4094 = pneg %p767
        $region224: #{spatial_transformer_forward.1} parent=221 // pred_check_branch
          %4096 = sbr.rel (%p4094) target = $region226
        $region225: #{spatial_transformer_forward.1} parent=221 // pred_region
          %s4097 = sand.u32 %s752, 1
          %s4098 = scalar_lea.sflag [#allocation4], %s4097
          %s4099 = sand.u32 %s752, 1
          %s4100 = smul.addr %s4099, 64
          %s4101 = scalar_lea.vmem [#allocation25], %s4100
          %4102 = dma.done %s4098, 1024
        $region226: #{spatial_transformer_forward.1} parent=221 // pred_fallthru
          _
      $region222: #{spatial_transformer_forward.1} parent=5 // pred_fallthru
        _
    $region6: #{spatial_transformer_forward.1} parent=1 // loop_footer
      %s86 = sadd.s32 1, %s82
    $region7: #{spatial_transformer_forward.1} parent=1 // loop_footer_branch
      %81 = sbr.rel target = $region3
    $region8: #{spatial_transformer_forward.1} parent=1 // loop_exit
      _
    %4103 = vsyncpa [#allocation3], 1
    %s4104 = scalar_lea.sflag [#allocation3], 1
    %4105 = vsyncpa %s4104, 1
    %4106 = vsyncpa [#allocation6], 1
    %4107 = vsyncpa [#allocation9], 1
    %4108 = vsyncpa [#allocation12], 1
    %4109 = vsyncpa [#allocation15], 1
    %4110 = vsyncpa [#allocation18], 1
    %4111 = vsyncpa [#allocation21], 1
    %4112 = vsyncpa [#allocation24], 1
    %4113 = vsyncpa [#allocation4], 1
    %s4114 = scalar_lea.sflag [#allocation4], 1
    %4115 = vsyncpa %s4114, 1

</llo_original>
